<compile_context>
chip_gen: v7x
topology: tpu7x:2x2x1
jax: 0.10.0
libtpu: 0.0.40
codegen_flags: <defaults>
</compile_context>

<pallas_src>
import functools

import jax
import jax.numpy as jnp
import numpy as np
from jax import lax
from jax.experimental import pallas as pl
from jax.experimental.pallas import tpu as pltpu

NEG_SLOPE = 0.01          # custom LeakyReLU default in the reference module
BN_EPS = 1e-5
KSIZE, STRIDE, PAD = 4, 2, 1
KK = KSIZE * KSIZE


# ----------------------------- host-side prep ------------------------------ #

def _im2col_t(x_nhwc, k=KSIZE, s=STRIDE, p=PAD):
    """Transposed im2col for the FIRST layer only (raw 6 KB network input; tiny
    XLA prep fused into the same jit).  Returns (k*k*C_in, B*Ho*Wo) with rows
    ordered (kh, kw, c_in) and columns ordered (b, ho, wo)."""
    B, H, W, C = x_nhwc.shape
    Ho = (H + 2 * p - k) // s + 1
    Wo = (W + 2 * p - k) // s + 1
    xp = jnp.pad(x_nhwc, ((0, 0), (p, p), (p, p), (0, 0)))
    cols = []
    for kh in range(k):
        for kw in range(k):
            cols.append(xp[:, kh:kh + s * Ho:s, kw:kw + s * Wo:s, :])  # (B,Ho,Wo,C)
    patches = jnp.stack(cols, axis=0)                   # (k*k, B, Ho, Wo, C)
    patches = jnp.transpose(patches, (0, 4, 1, 2, 3))   # (k*k, C, B, Ho, Wo)
    return patches.reshape(k * k * C, B * Ho * Wo), Ho, Wo


def _scatter_stack(Hi, Wi, Ho, Wo, k=KSIZE, s=STRIDE, p=PAD):
    """PER-SAMPLE 0/1 scatter matrices S[pos] of shape (Hi*Wi, Ho*Wo) such that
    (hT @ S[pos])[c, m_out] picks the input pixel read by kernel position pos
    for output position m_out (zero for spatial padding).  Built with numpy at
    trace time -> compile-time constant."""
    S = np.zeros((k * k, Hi * Wi, Ho * Wo), np.float32)
    for kh in range(k):
        for kw in range(k):
            pos = kh * k + kw
            for io in range(Ho):
                ii = s * io + kh - p
                if not (0 <= ii < Hi):
                    continue
                for jo in range(Wo):
                    ji = s * jo + kw - p
                    if not (0 <= ji < Wi):
                        continue
                    S[pos, ii * Wi + ji, io * Wo + jo] = 1.0
    return S


def _oihw_to_mat_t(w):
    """(C_out, C_in, k, k) OIHW -> (C_out, k*k*C_in), cols ordered (kh, kw, c_in)."""
    c_out = w.shape[0]
    return jnp.transpose(w, (0, 2, 3, 1)).reshape(c_out, -1).astype(jnp.float32)


# ------------------------------ fused kernel ------------------------------- #

def _batchnorm(y):
    """BatchNorm2d training-mode forward at default init (gamma=1, beta=0),
    channels on sublanes.  Single fused reduction over [y ; y*y]; one-pass
    variance clamped at 0 to guard against cancellation."""
    c = y.shape[0]
    stacked = jnp.concatenate([y, y * y], axis=0)         # (2C, M)
    stats = jnp.mean(stacked, axis=1, keepdims=True)      # (2C, 1) -- one reduce
    mean = stats[:c, :]
    var = jnp.maximum(stats[c:, :] - mean * mean, 0.0)
    return (y - mean) * lax.rsqrt(var + BN_EPS)


def _leaky_relu(y):
    return jnp.maximum(y, NEG_SLOPE * y)


def _make_fused_kernel(later_bns, use_bn_first):
    """later_bns: tuple[bool] for conv layers 2..n (use BatchNorm or not)."""
    n_later = len(later_bns)

    def kernel(*refs):
        p1_ref, w1_ref = refs[0], refs[1]
        idx = 2
        s_refs = refs[idx:idx + n_later]; idx += n_later
        w_refs = refs[idx:idx + n_later]; idx += n_later
        lw_ref, agg_ref, o_ref = refs[idx], refs[idx + 1], refs[idx + 2]

        # -- layer 1: single im2col matmul (patches prepped host-side).
        #    Result kept transposed: (C_out, B*Ho*Wo) = (8, 128), one dense vreg.
        h = jnp.dot(w1_ref[...], p1_ref[...], preferred_element_type=jnp.float32)
        if use_bn_first:
            h = _batchnorm(h)
        h = _leaky_relu(h)

        # -- later conv layers: k*k per-position gather matmuls (K = M_in),
        #    sublane-concatenated into a (k*k*C_in, M_out) patch tile, then
        #    ONE weight matmul with contraction K = k*k*C_in (128 / 256).
        for s_ref, w_ref, use_bn in zip(s_refs, w_refs, later_bns):
            pieces = [
                jnp.dot(h, s_ref[pos], preferred_element_type=jnp.float32)
                for pos in range(KK)
            ]
            patches = jnp.concatenate(pieces, axis=0)      # (k*k*C_in, M_out)
            y = jnp.dot(w_ref[...], patches, preferred_element_type=jnp.float32)
            if use_bn:
                y = _batchnorm(y)
            h = _leaky_relu(y)

        # -- head: Linear(bias=False); NCHW flatten folded into lw (tiled over
        #    the batch lanes), per-sample aggregation as one tiny matmul.
        weighted = h * lw_ref[...]                          # (C, B*spatial)
        col = jnp.sum(weighted, axis=0, keepdims=True)      # (1, B*spatial)
        o_ref[...] = jnp.dot(col, agg_ref[...],
                             preferred_element_type=jnp.float32)  # (1, B)

    return kernel


def _vmem_spec():
    return pl.BlockSpec(memory_space=pltpu.MemorySpace.VMEM)


@functools.partial(jax.jit, static_argnums=(2,))
def discriminator_forward(x_nchw, conv_ws, use_bns, lin_w):
    """conv_ws[i]: (C_out, C_in, 4, 4) OIHW; use_bns: tuple[bool]; lin_w: (1, F)."""
    B = x_nchw.shape[0]
    x_nhwc = jnp.transpose(x_nchw, (0, 2, 3, 1)).astype(jnp.float32)

    # layer-1 operands (transposed layout)
    patches1_t, ho, wo = _im2col_t(x_nhwc)
    w1_t = _oihw_to_mat_t(conv_ws[0])
    ci = conv_ws[0].shape[0]

    # later-layer operands: per-sample scatter stacks, expanded block-diagonally
    # over the batch (BatchNorm couples the whole batch inside one kernel call).
    s_stacks, w_mats, later_bns = [], [], []
    hi, wi = ho, wo
    for w, use_bn in zip(conv_ws[1:], use_bns[1:]):
        ho2, wo2 = hi // 2, wi // 2
        s_sample = _scatter_stack(hi, wi, ho2, wo2)             # (k*k, Hi*Wi, Ho*Wo)
        s_batch = np.kron(np.eye(B, dtype=np.float32), s_sample)
        s_stacks.append(jnp.asarray(s_batch))                   # (k*k, B*Hi*Wi, B*Ho*Wo)
        w_mats.append(_oihw_to_mat_t(w))
        later_bns.append(bool(use_bn))
        hi, wi, ci = ho2, wo2, w.shape[0]

    # final Linear: fold the PyTorch (C, H, W) flatten into a lane-tiled weight
    # plus a per-sample lane-block-sum matrix.
    spatial = hi * wi
    lw_t = lin_w.astype(jnp.float32).reshape(ci, spatial)        # (C_last, spatial)
    lw_tiled = jnp.tile(lw_t, (1, B))                            # (C_last, B*spatial)
    agg = jnp.asarray(np.kron(np.eye(B, dtype=np.float32),
                              np.ones((spatial, 1), np.float32)))  # (B*spatial, B)

    kernel = _make_fused_kernel(tuple(later_bns), bool(use_bns[0]))
    inputs = [patches1_t, w1_t, *s_stacks, *w_mats, lw_tiled, agg]
    out_row = pl.pallas_call(
        kernel,
        out_shape=jax.ShapeDtypeStruct((1, B), jnp.float32),
        in_specs=[_vmem_spec() for _ in inputs],
        out_specs=_vmem_spec(),
    )(*inputs)
    return out_row.reshape(B, 1)


# --------------------------- pure-JAX reference ----------------------------- #

def reference_forward(x_nchw, conv_ws, use_bns, lin_w):
    h = x_nchw.astype(jnp.float32)
    for w, use_bn in zip(conv_ws, use_bns):
        h = lax.conv_general_dilated(
            h, w.astype(jnp.float32), window_strides=(2, 2),
            padding=((1, 1), (1, 1)),
            dimension_numbers=("NCHW", "OIHW", "NCHW"))
        if use_bn:
            mean = h.mean(axis=(0, 2, 3), keepdims=True)
            var = ((h - mean) ** 2).mean(axis=(0, 2, 3), keepdims=True)
            h = (h - mean) / jnp.sqrt(var + BN_EPS)
        h = jnp.maximum(h, h * NEG_SLOPE)
    flat = h.reshape(h.shape[0], -1)
    return flat @ lin_w.astype(jnp.float32).T


# ---------------------------------- main ------------------------------------ #

if __name__ == "__main__":
    # Small config consistent with the module: img_size=16, img_channels=3,
    # hidden_channels=[8, 16, 32] (16 % 2**3 == 0), batch_norms=[False, True, True].
    img_size, img_channels = 16, 3
    hidden_channels = [8, 16, 32]
    batch_norms = (False, True, True)
    batch = 2

    key = jax.random.PRNGKey(0)
    k_x, k_w1, k_w2, k_w3, k_lin = jax.random.split(key, 5)

    x = jax.random.normal(k_x, (batch, img_channels, img_size, img_size), jnp.float32)

    conv_ws = []
    in_c = img_channels
    for k_w, out_c in zip([k_w1, k_w2, k_w3], hidden_channels):
        conv_ws.append(0.05 * jax.random.normal(k_w, (out_c, in_c, 4, 4), jnp.float32))
        in_c = out_c

    final_spatial = img_size // 2 ** len(hidden_channels)               # 2
    in_features = hidden_channels[-1] * final_spatial * final_spatial   # 128
    lin_w = 0.05 * jax.random.normal(k_lin, (1, in_features), jnp.float32)

    out = discriminator_forward(x, conv_ws, batch_norms, lin_w)
    out = jax.block_until_ready(out)

    ref = jax.block_until_ready(reference_forward(x, conv_ws, batch_norms, lin_w))
    assert out.shape == (batch, 1), out.shape
    np.testing.assert_allclose(np.asarray(out), np.asarray(ref), rtol=1e-4, atol=1e-4)

    print("KERNEL_OK")
</pallas_src>

<mosaic_0001>
module attributes {stable_mosaic.version = 11 : i64} {
  func.func @kernel(%arg0: memref<48x128xf32, #tpu.memory_space<vmem>>, %arg1: memref<8x48xf32, #tpu.memory_space<vmem>>, %arg2: memref<16x128x32xf32, #tpu.memory_space<vmem>>, %arg3: memref<16x32x8xf32, #tpu.memory_space<vmem>>, %arg4: memref<16x128xf32, #tpu.memory_space<vmem>>, %arg5: memref<32x256xf32, #tpu.memory_space<vmem>>, %arg6: memref<32x8xf32, #tpu.memory_space<vmem>>, %arg7: memref<8x2xf32, #tpu.memory_space<vmem>>, %arg8: memref<1x2xf32, #tpu.memory_space<vmem>>) attributes {dimension_semantics = [], scalar_prefetch = 0 : i64, scratch_operands = 0 : i64, tpu.core_type = #tpu.core_type<tc>} {
    %c0 = arith.constant 0 : index
    %c0_0 = arith.constant 0 : index
    %0 = vector.load %arg1[%c0, %c0_0] : memref<8x48xf32, #tpu.memory_space<vmem>>, vector<8x48xf32>
    %c0_1 = arith.constant 0 : index
    %c0_2 = arith.constant 0 : index
    %1 = vector.load %arg0[%c0_1, %c0_2] : memref<48x128xf32, #tpu.memory_space<vmem>>, vector<48x128xf32>
    %cst = arith.constant dense<0.000000e+00> : vector<8x128xf32>
    %2 = tpu.matmul %0, %1, %cst {dimension_numbers = #tpu.dot_dimension_numbers<[1], [0], [0], [1], [0, 0, 1, 1], [], []>} : vector<8x48xf32>, vector<48x128xf32>, vector<8x128xf32> -> vector<8x128xf32>
    %cst_3 = arith.constant 0.00999999977 : f32
    %3 = vector.broadcast %cst_3 : f32 to vector<8x128xf32>
    %4 = arith.mulf %3, %2 : vector<8x128xf32>
    %5 = arith.maximumf %2, %4 : vector<8x128xf32>
    %c0_4 = arith.constant 0 : index
    %c0_5 = arith.constant 0 : index
    %c0_6 = arith.constant 0 : index
    %6 = vector.load %arg2[%c0_4, %c0_5, %c0_6] : memref<16x128x32xf32, #tpu.memory_space<vmem>>, vector<1x128x32xf32>
    %7 = vector.shape_cast %6 : vector<1x128x32xf32> to vector<128x32xf32>
    %cst_7 = arith.constant dense<0.000000e+00> : vector<8x32xf32>
    %8 = tpu.matmul %5, %7, %cst_7 {dimension_numbers = #tpu.dot_dimension_numbers<[1], [0], [0], [1], [0, 0, 1, 1], [], []>} : vector<8x128xf32>, vector<128x32xf32>, vector<8x32xf32> -> vector<8x32xf32>
    %c1 = arith.constant 1 : index
    %c0_8 = arith.constant 0 : index
    %c0_9 = arith.constant 0 : index
    %9 = vector.load %arg2[%c1, %c0_8, %c0_9] : memref<16x128x32xf32, #tpu.memory_space<vmem>>, vector<1x128x32xf32>
    %10 = vector.shape_cast %9 : vector<1x128x32xf32> to vector<128x32xf32>
    %cst_10 = arith.constant dense<0.000000e+00> : vector<8x32xf32>
    %11 = tpu.matmul %5, %10, %cst_10 {dimension_numbers = #tpu.dot_dimension_numbers<[1], [0], [0], [1], [0, 0, 1, 1], [], []>} : vector<8x128xf32>, vector<128x32xf32>, vector<8x32xf32> -> vector<8x32xf32>
    %c2 = arith.constant 2 : index
    %c0_11 = arith.constant 0 : index
    %c0_12 = arith.constant 0 : index
    %12 = vector.load %arg2[%c2, %c0_11, %c0_12] : memref<16x128x32xf32, #tpu.memory_space<vmem>>, vector<1x128x32xf32>
    %13 = vector.shape_cast %12 : vector<1x128x32xf32> to vector<128x32xf32>
    %cst_13 = arith.constant dense<0.000000e+00> : vector<8x32xf32>
    %14 = tpu.matmul %5, %13, %cst_13 {dimension_numbers = #tpu.dot_dimension_numbers<[1], [0], [0], [1], [0, 0, 1, 1], [], []>} : vector<8x128xf32>, vector<128x32xf32>, vector<8x32xf32> -> vector<8x32xf32>
    %c3 = arith.constant 3 : index
    %c0_14 = arith.constant 0 : index
    %c0_15 = arith.constant 0 : index
    %15 = vector.load %arg2[%c3, %c0_14, %c0_15] : memref<16x128x32xf32, #tpu.memory_space<vmem>>, vector<1x128x32xf32>
    %16 = vector.shape_cast %15 : vector<1x128x32xf32> to vector<128x32xf32>
    %cst_16 = arith.constant dense<0.000000e+00> : vector<8x32xf32>
    %17 = tpu.matmul %5, %16, %cst_16 {dimension_numbers = #tpu.dot_dimension_numbers<[1], [0], [0], [1], [0, 0, 1, 1], [], []>} : vector<8x128xf32>, vector<128x32xf32>, vector<8x32xf32> -> vector<8x32xf32>
    %c4 = arith.constant 4 : index
    %c0_17 = arith.constant 0 : index
    %c0_18 = arith.constant 0 : index
    %18 = vector.load %arg2[%c4, %c0_17, %c0_18] : memref<16x128x32xf32, #tpu.memory_space<vmem>>, vector<1x128x32xf32>
    %19 = vector.shape_cast %18 : vector<1x128x32xf32> to vector<128x32xf32>
    %cst_19 = arith.constant dense<0.000000e+00> : vector<8x32xf32>
    %20 = tpu.matmul %5, %19, %cst_19 {dimension_numbers = #tpu.dot_dimension_numbers<[1], [0], [0], [1], [0, 0, 1, 1], [], []>} : vector<8x128xf32>, vector<128x32xf32>, vector<8x32xf32> -> vector<8x32xf32>
    %c5 = arith.constant 5 : index
    %c0_20 = arith.constant 0 : index
    %c0_21 = arith.constant 0 : index
    %21 = vector.load %arg2[%c5, %c0_20, %c0_21] : memref<16x128x32xf32, #tpu.memory_space<vmem>>, vector<1x128x32xf32>
    %22 = vector.shape_cast %21 : vector<1x128x32xf32> to vector<128x32xf32>
    %cst_22 = arith.constant dense<0.000000e+00> : vector<8x32xf32>
    %23 = tpu.matmul %5, %22, %cst_22 {dimension_numbers = #tpu.dot_dimension_numbers<[1], [0], [0], [1], [0, 0, 1, 1], [], []>} : vector<8x128xf32>, vector<128x32xf32>, vector<8x32xf32> -> vector<8x32xf32>
    %c6 = arith.constant 6 : index
    %c0_23 = arith.constant 0 : index
    %c0_24 = arith.constant 0 : index
    %24 = vector.load %arg2[%c6, %c0_23, %c0_24] : memref<16x128x32xf32, #tpu.memory_space<vmem>>, vector<1x128x32xf32>
    %25 = vector.shape_cast %24 : vector<1x128x32xf32> to vector<128x32xf32>
    %cst_25 = arith.constant dense<0.000000e+00> : vector<8x32xf32>
    %26 = tpu.matmul %5, %25, %cst_25 {dimension_numbers = #tpu.dot_dimension_numbers<[1], [0], [0], [1], [0, 0, 1, 1], [], []>} : vector<8x128xf32>, vector<128x32xf32>, vector<8x32xf32> -> vector<8x32xf32>
    %c7 = arith.constant 7 : index
    %c0_26 = arith.constant 0 : index
    %c0_27 = arith.constant 0 : index
    %27 = vector.load %arg2[%c7, %c0_26, %c0_27] : memref<16x128x32xf32, #tpu.memory_space<vmem>>, vector<1x128x32xf32>
    %28 = vector.shape_cast %27 : vector<1x128x32xf32> to vector<128x32xf32>
    %cst_28 = arith.constant dense<0.000000e+00> : vector<8x32xf32>
    %29 = tpu.matmul %5, %28, %cst_28 {dimension_numbers = #tpu.dot_dimension_numbers<[1], [0], [0], [1], [0, 0, 1, 1], [], []>} : vector<8x128xf32>, vector<128x32xf32>, vector<8x32xf32> -> vector<8x32xf32>
    %c8 = arith.constant 8 : index
    %c0_29 = arith.constant 0 : index
    %c0_30 = arith.constant 0 : index
    %30 = vector.load %arg2[%c8, %c0_29, %c0_30] : memref<16x128x32xf32, #tpu.memory_space<vmem>>, vector<1x128x32xf32>
    %31 = vector.shape_cast %30 : vector<1x128x32xf32> to vector<128x32xf32>
    %cst_31 = arith.constant dense<0.000000e+00> : vector<8x32xf32>
    %32 = tpu.matmul %5, %31, %cst_31 {dimension_numbers = #tpu.dot_dimension_numbers<[1], [0], [0], [1], [0, 0, 1, 1], [], []>} : vector<8x128xf32>, vector<128x32xf32>, vector<8x32xf32> -> vector<8x32xf32>
    %c9 = arith.constant 9 : index
    %c0_32 = arith.constant 0 : index
    %c0_33 = arith.constant 0 : index
    %33 = vector.load %arg2[%c9, %c0_32, %c0_33] : memref<16x128x32xf32, #tpu.memory_space<vmem>>, vector<1x128x32xf32>
    %34 = vector.shape_cast %33 : vector<1x128x32xf32> to vector<128x32xf32>
    %cst_34 = arith.constant dense<0.000000e+00> : vector<8x32xf32>
    %35 = tpu.matmul %5, %34, %cst_34 {dimension_numbers = #tpu.dot_dimension_numbers<[1], [0], [0], [1], [0, 0, 1, 1], [], []>} : vector<8x128xf32>, vector<128x32xf32>, vector<8x32xf32> -> vector<8x32xf32>
    %c10 = arith.constant 10 : index
    %c0_35 = arith.constant 0 : index
    %c0_36 = arith.constant 0 : index
    %36 = vector.load %arg2[%c10, %c0_35, %c0_36] : memref<16x128x32xf32, #tpu.memory_space<vmem>>, vector<1x128x32xf32>
    %37 = vector.shape_cast %36 : vector<1x128x32xf32> to vector<128x32xf32>
    %cst_37 = arith.constant dense<0.000000e+00> : vector<8x32xf32>
    %38 = tpu.matmul %5, %37, %cst_37 {dimension_numbers = #tpu.dot_dimension_numbers<[1], [0], [0], [1], [0, 0, 1, 1], [], []>} : vector<8x128xf32>, vector<128x32xf32>, vector<8x32xf32> -> vector<8x32xf32>
    %c11 = arith.constant 11 : index
    %c0_38 = arith.constant 0 : index
    %c0_39 = arith.constant 0 : index
    %39 = vector.load %arg2[%c11, %c0_38, %c0_39] : memref<16x128x32xf32, #tpu.memory_space<vmem>>, vector<1x128x32xf32>
    %40 = vector.shape_cast %39 : vector<1x128x32xf32> to vector<128x32xf32>
    %cst_40 = arith.constant dense<0.000000e+00> : vector<8x32xf32>
    %41 = tpu.matmul %5, %40, %cst_40 {dimension_numbers = #tpu.dot_dimension_numbers<[1], [0], [0], [1], [0, 0, 1, 1], [], []>} : vector<8x128xf32>, vector<128x32xf32>, vector<8x32xf32> -> vector<8x32xf32>
    %c12 = arith.constant 12 : index
    %c0_41 = arith.constant 0 : index
    %c0_42 = arith.constant 0 : index
    %42 = vector.load %arg2[%c12, %c0_41, %c0_42] : memref<16x128x32xf32, #tpu.memory_space<vmem>>, vector<1x128x32xf32>
    %43 = vector.shape_cast %42 : vector<1x128x32xf32> to vector<128x32xf32>
    %cst_43 = arith.constant dense<0.000000e+00> : vector<8x32xf32>
    %44 = tpu.matmul %5, %43, %cst_43 {dimension_numbers = #tpu.dot_dimension_numbers<[1], [0], [0], [1], [0, 0, 1, 1], [], []>} : vector<8x128xf32>, vector<128x32xf32>, vector<8x32xf32> -> vector<8x32xf32>
    %c13 = arith.constant 13 : index
    %c0_44 = arith.constant 0 : index
    %c0_45 = arith.constant 0 : index
    %45 = vector.load %arg2[%c13, %c0_44, %c0_45] : memref<16x128x32xf32, #tpu.memory_space<vmem>>, vector<1x128x32xf32>
    %46 = vector.shape_cast %45 : vector<1x128x32xf32> to vector<128x32xf32>
    %cst_46 = arith.constant dense<0.000000e+00> : vector<8x32xf32>
    %47 = tpu.matmul %5, %46, %cst_46 {dimension_numbers = #tpu.dot_dimension_numbers<[1], [0], [0], [1], [0, 0, 1, 1], [], []>} : vector<8x128xf32>, vector<128x32xf32>, vector<8x32xf32> -> vector<8x32xf32>
    %c14 = arith.constant 14 : index
    %c0_47 = arith.constant 0 : index
    %c0_48 = arith.constant 0 : index
    %48 = vector.load %arg2[%c14, %c0_47, %c0_48] : memref<16x128x32xf32, #tpu.memory_space<vmem>>, vector<1x128x32xf32>
    %49 = vector.shape_cast %48 : vector<1x128x32xf32> to vector<128x32xf32>
    %cst_49 = arith.constant dense<0.000000e+00> : vector<8x32xf32>
    %50 = tpu.matmul %5, %49, %cst_49 {dimension_numbers = #tpu.dot_dimension_numbers<[1], [0], [0], [1], [0, 0, 1, 1], [], []>} : vector<8x128xf32>, vector<128x32xf32>, vector<8x32xf32> -> vector<8x32xf32>
    %c15 = arith.constant 15 : index
    %c0_50 = arith.constant 0 : index
    %c0_51 = arith.constant 0 : index
    %51 = vector.load %arg2[%c15, %c0_50, %c0_51] : memref<16x128x32xf32, #tpu.memory_space<vmem>>, vector<1x128x32xf32>
    %52 = vector.shape_cast %51 : vector<1x128x32xf32> to vector<128x32xf32>
    %cst_52 = arith.constant dense<0.000000e+00> : vector<8x32xf32>
    %53 = tpu.matmul %5, %52, %cst_52 {dimension_numbers = #tpu.dot_dimension_numbers<[1], [0], [0], [1], [0, 0, 1, 1], [], []>} : vector<8x128xf32>, vector<128x32xf32>, vector<8x32xf32> -> vector<8x32xf32>
    %54 = tpu.concatenate %8, %11, %14, %17, %20, %23, %26, %29, %32, %35, %38, %41, %44, %47, %50, %53 in 0 : vector<8x32xf32>, vector<8x32xf32>, vector<8x32xf32>, vector<8x32xf32>, vector<8x32xf32>, vector<8x32xf32>, vector<8x32xf32>, vector<8x32xf32>, vector<8x32xf32>, vector<8x32xf32>, vector<8x32xf32>, vector<8x32xf32>, vector<8x32xf32>, vector<8x32xf32>, vector<8x32xf32>, vector<8x32xf32> -> vector<128x32xf32>
    %c0_53 = arith.constant 0 : index
    %c0_54 = arith.constant 0 : index
    %55 = vector.load %arg4[%c0_53, %c0_54] : memref<16x128xf32, #tpu.memory_space<vmem>>, vector<16x128xf32>
    %cst_55 = arith.constant dense<0.000000e+00> : vector<16x32xf32>
    %56 = tpu.matmul %55, %54, %cst_55 {dimension_numbers = #tpu.dot_dimension_numbers<[1], [0], [0], [1], [0, 0, 1, 1], [], []>} : vector<16x128xf32>, vector<128x32xf32>, vector<16x32xf32> -> vector<16x32xf32>
    %57 = arith.mulf %56, %56 : vector<16x32xf32>
    %58 = tpu.concatenate %56, %57 in 0 : vector<16x32xf32>, vector<16x32xf32> -> vector<32x32xf32>
    %cst_56 = arith.constant dense<0.000000e+00> : vector<32xf32>
    %59 = vector.multi_reduction <add>, %58, %cst_56 [1] : vector<32x32xf32> to vector<32xf32>
    %60 = vector.shape_cast %59 : vector<32xf32> to vector<32x1xf32>
    %cst_57 = arith.constant 3.200000e+01 : f32
    %61 = vector.broadcast %cst_57 : f32 to vector<32x1xf32>
    %62 = arith.divf %60, %61 : vector<32x1xf32>
    %63 = vector.extract_strided_slice %62 {offsets = [0, 0], sizes = [16, 1], strides = [1, 1]} : vector<32x1xf32> to vector<16x1xf32>
    %64 = vector.extract_strided_slice %62 {offsets = [16, 0], sizes = [16, 1], strides = [1, 1]} : vector<32x1xf32> to vector<16x1xf32>
    %65 = arith.mulf %63, %63 : vector<16x1xf32>
    %66 = arith.subf %64, %65 : vector<16x1xf32>
    %cst_58 = arith.constant 0.000000e+00 : f32
    %67 = vector.broadcast %cst_58 : f32 to vector<16x1xf32>
    %68 = arith.maximumf %66, %67 : vector<16x1xf32>
    %69 = vector.broadcast %63 : vector<16x1xf32> to vector<16x32xf32>
    %70 = arith.subf %56, %69 : vector<16x32xf32>
    %cst_59 = arith.constant 9.99999974E-6 : f32
    %71 = vector.broadcast %cst_59 : f32 to vector<16x1xf32>
    %72 = arith.addf %68, %71 : vector<16x1xf32>
    %73 = math.rsqrt %72 : vector<16x1xf32>
    %74 = vector.broadcast %73 : vector<16x1xf32> to vector<16x32xf32>
    %75 = arith.mulf %70, %74 : vector<16x32xf32>
    %cst_60 = arith.constant 0.00999999977 : f32
    %76 = vector.broadcast %cst_60 : f32 to vector<16x32xf32>
    %77 = arith.mulf %76, %75 : vector<16x32xf32>
    %78 = arith.maximumf %75, %77 : vector<16x32xf32>
    %c0_61 = arith.constant 0 : index
    %c0_62 = arith.constant 0 : index
    %c0_63 = arith.constant 0 : index
    %79 = vector.load %arg3[%c0_61, %c0_62, %c0_63] : memref<16x32x8xf32, #tpu.memory_space<vmem>>, vector<1x32x8xf32>
    %80 = vector.shape_cast %79 : vector<1x32x8xf32> to vector<32x8xf32>
    %cst_64 = arith.constant dense<0.000000e+00> : vector<16x8xf32>
    %81 = tpu.matmul %78, %80, %cst_64 {dimension_numbers = #tpu.dot_dimension_numbers<[1], [0], [0], [1], [0, 0, 1, 1], [], []>} : vector<16x32xf32>, vector<32x8xf32>, vector<16x8xf32> -> vector<16x8xf32>
    %c1_65 = arith.constant 1 : index
    %c0_66 = arith.constant 0 : index
    %c0_67 = arith.constant 0 : index
    %82 = vector.load %arg3[%c1_65, %c0_66, %c0_67] : memref<16x32x8xf32, #tpu.memory_space<vmem>>, vector<1x32x8xf32>
    %83 = vector.shape_cast %82 : vector<1x32x8xf32> to vector<32x8xf32>
    %cst_68 = arith.constant dense<0.000000e+00> : vector<16x8xf32>
    %84 = tpu.matmul %78, %83, %cst_68 {dimension_numbers = #tpu.dot_dimension_numbers<[1], [0], [0], [1], [0, 0, 1, 1], [], []>} : vector<16x32xf32>, vector<32x8xf32>, vector<16x8xf32> -> vector<16x8xf32>
    %c2_69 = arith.constant 2 : index
    %c0_70 = arith.constant 0 : index
    %c0_71 = arith.constant 0 : index
    %85 = vector.load %arg3[%c2_69, %c0_70, %c0_71] : memref<16x32x8xf32, #tpu.memory_space<vmem>>, vector<1x32x8xf32>
    %86 = vector.shape_cast %85 : vector<1x32x8xf32> to vector<32x8xf32>
    %cst_72 = arith.constant dense<0.000000e+00> : vector<16x8xf32>
    %87 = tpu.matmul %78, %86, %cst_72 {dimension_numbers = #tpu.dot_dimension_numbers<[1], [0], [0], [1], [0, 0, 1, 1], [], []>} : vector<16x32xf32>, vector<32x8xf32>, vector<16x8xf32> -> vector<16x8xf32>
    %c3_73 = arith.constant 3 : index
    %c0_74 = arith.constant 0 : index
    %c0_75 = arith.constant 0 : index
    %88 = vector.load %arg3[%c3_73, %c0_74, %c0_75] : memref<16x32x8xf32, #tpu.memory_space<vmem>>, vector<1x32x8xf32>
    %89 = vector.shape_cast %88 : vector<1x32x8xf32> to vector<32x8xf32>
    %cst_76 = arith.constant dense<0.000000e+00> : vector<16x8xf32>
    %90 = tpu.matmul %78, %89, %cst_76 {dimension_numbers = #tpu.dot_dimension_numbers<[1], [0], [0], [1], [0, 0, 1, 1], [], []>} : vector<16x32xf32>, vector<32x8xf32>, vector<16x8xf32> -> vector<16x8xf32>
    %c4_77 = arith.constant 4 : index
    %c0_78 = arith.constant 0 : index
    %c0_79 = arith.constant 0 : index
    %91 = vector.load %arg3[%c4_77, %c0_78, %c0_79] : memref<16x32x8xf32, #tpu.memory_space<vmem>>, vector<1x32x8xf32>
    %92 = vector.shape_cast %91 : vector<1x32x8xf32> to vector<32x8xf32>
    %cst_80 = arith.constant dense<0.000000e+00> : vector<16x8xf32>
    %93 = tpu.matmul %78, %92, %cst_80 {dimension_numbers = #tpu.dot_dimension_numbers<[1], [0], [0], [1], [0, 0, 1, 1], [], []>} : vector<16x32xf32>, vector<32x8xf32>, vector<16x8xf32> -> vector<16x8xf32>
    %c5_81 = arith.constant 5 : index
    %c0_82 = arith.constant 0 : index
    %c0_83 = arith.constant 0 : index
    %94 = vector.load %arg3[%c5_81, %c0_82, %c0_83] : memref<16x32x8xf32, #tpu.memory_space<vmem>>, vector<1x32x8xf32>
    %95 = vector.shape_cast %94 : vector<1x32x8xf32> to vector<32x8xf32>
    %cst_84 = arith.constant dense<0.000000e+00> : vector<16x8xf32>
    %96 = tpu.matmul %78, %95, %cst_84 {dimension_numbers = #tpu.dot_dimension_numbers<[1], [0], [0], [1], [0, 0, 1, 1], [], []>} : vector<16x32xf32>, vector<32x8xf32>, vector<16x8xf32> -> vector<16x8xf32>
    %c6_85 = arith.constant 6 : index
    %c0_86 = arith.constant 0 : index
    %c0_87 = arith.constant 0 : index
    %97 = vector.load %arg3[%c6_85, %c0_86, %c0_87] : memref<16x32x8xf32, #tpu.memory_space<vmem>>, vector<1x32x8xf32>
    %98 = vector.shape_cast %97 : vector<1x32x8xf32> to vector<32x8xf32>
    %cst_88 = arith.constant dense<0.000000e+00> : vector<16x8xf32>
    %99 = tpu.matmul %78, %98, %cst_88 {dimension_numbers = #tpu.dot_dimension_numbers<[1], [0], [0], [1], [0, 0, 1, 1], [], []>} : vector<16x32xf32>, vector<32x8xf32>, vector<16x8xf32> -> vector<16x8xf32>
    %c7_89 = arith.constant 7 : index
    %c0_90 = arith.constant 0 : index
    %c0_91 = arith.constant 0 : index
    %100 = vector.load %arg3[%c7_89, %c0_90, %c0_91] : memref<16x32x8xf32, #tpu.memory_space<vmem>>, vector<1x32x8xf32>
    %101 = vector.shape_cast %100 : vector<1x32x8xf32> to vector<32x8xf32>
    %cst_92 = arith.constant dense<0.000000e+00> : vector<16x8xf32>
    %102 = tpu.matmul %78, %101, %cst_92 {dimension_numbers = #tpu.dot_dimension_numbers<[1], [0], [0], [1], [0, 0, 1, 1], [], []>} : vector<16x32xf32>, vector<32x8xf32>, vector<16x8xf32> -> vector<16x8xf32>
    %c8_93 = arith.constant 8 : index
    %c0_94 = arith.constant 0 : index
    %c0_95 = arith.constant 0 : index
    %103 = vector.load %arg3[%c8_93, %c0_94, %c0_95] : memref<16x32x8xf32, #tpu.memory_space<vmem>>, vector<1x32x8xf32>
    %104 = vector.shape_cast %103 : vector<1x32x8xf32> to vector<32x8xf32>
    %cst_96 = arith.constant dense<0.000000e+00> : vector<16x8xf32>
    %105 = tpu.matmul %78, %104, %cst_96 {dimension_numbers = #tpu.dot_dimension_numbers<[1], [0], [0], [1], [0, 0, 1, 1], [], []>} : vector<16x32xf32>, vector<32x8xf32>, vector<16x8xf32> -> vector<16x8xf32>
    %c9_97 = arith.constant 9 : index
    %c0_98 = arith.constant 0 : index
    %c0_99 = arith.constant 0 : index
    %106 = vector.load %arg3[%c9_97, %c0_98, %c0_99] : memref<16x32x8xf32, #tpu.memory_space<vmem>>, vector<1x32x8xf32>
    %107 = vector.shape_cast %106 : vector<1x32x8xf32> to vector<32x8xf32>
    %cst_100 = arith.constant dense<0.000000e+00> : vector<16x8xf32>
    %108 = tpu.matmul %78, %107, %cst_100 {dimension_numbers = #tpu.dot_dimension_numbers<[1], [0], [0], [1], [0, 0, 1, 1], [], []>} : vector<16x32xf32>, vector<32x8xf32>, vector<16x8xf32> -> vector<16x8xf32>
    %c10_101 = arith.constant 10 : index
    %c0_102 = arith.constant 0 : index
    %c0_103 = arith.constant 0 : index
    %109 = vector.load %arg3[%c10_101, %c0_102, %c0_103] : memref<16x32x8xf32, #tpu.memory_space<vmem>>, vector<1x32x8xf32>
    %110 = vector.shape_cast %109 : vector<1x32x8xf32> to vector<32x8xf32>
    %cst_104 = arith.constant dense<0.000000e+00> : vector<16x8xf32>
    %111 = tpu.matmul %78, %110, %cst_104 {dimension_numbers = #tpu.dot_dimension_numbers<[1], [0], [0], [1], [0, 0, 1, 1], [], []>} : vector<16x32xf32>, vector<32x8xf32>, vector<16x8xf32> -> vector<16x8xf32>
    %c11_105 = arith.constant 11 : index
    %c0_106 = arith.constant 0 : index
    %c0_107 = arith.constant 0 : index
    %112 = vector.load %arg3[%c11_105, %c0_106, %c0_107] : memref<16x32x8xf32, #tpu.memory_space<vmem>>, vector<1x32x8xf32>
    %113 = vector.shape_cast %112 : vector<1x32x8xf32> to vector<32x8xf32>
    %cst_108 = arith.constant dense<0.000000e+00> : vector<16x8xf32>
    %114 = tpu.matmul %78, %113, %cst_108 {dimension_numbers = #tpu.dot_dimension_numbers<[1], [0], [0], [1], [0, 0, 1, 1], [], []>} : vector<16x32xf32>, vector<32x8xf32>, vector<16x8xf32> -> vector<16x8xf32>
    %c12_109 = arith.constant 12 : index
    %c0_110 = arith.constant 0 : index
    %c0_111 = arith.constant 0 : index
    %115 = vector.load %arg3[%c12_109, %c0_110, %c0_111] : memref<16x32x8xf32, #tpu.memory_space<vmem>>, vector<1x32x8xf32>
    %116 = vector.shape_cast %115 : vector<1x32x8xf32> to vector<32x8xf32>
    %cst_112 = arith.constant dense<0.000000e+00> : vector<16x8xf32>
    %117 = tpu.matmul %78, %116, %cst_112 {dimension_numbers = #tpu.dot_dimension_numbers<[1], [0], [0], [1], [0, 0, 1, 1], [], []>} : vector<16x32xf32>, vector<32x8xf32>, vector<16x8xf32> -> vector<16x8xf32>
    %c13_113 = arith.constant 13 : index
    %c0_114 = arith.constant 0 : index
    %c0_115 = arith.constant 0 : index
    %118 = vector.load %arg3[%c13_113, %c0_114, %c0_115] : memref<16x32x8xf32, #tpu.memory_space<vmem>>, vector<1x32x8xf32>
    %119 = vector.shape_cast %118 : vector<1x32x8xf32> to vector<32x8xf32>
    %cst_116 = arith.constant dense<0.000000e+00> : vector<16x8xf32>
    %120 = tpu.matmul %78, %119, %cst_116 {dimension_numbers = #tpu.dot_dimension_numbers<[1], [0], [0], [1], [0, 0, 1, 1], [], []>} : vector<16x32xf32>, vector<32x8xf32>, vector<16x8xf32> -> vector<16x8xf32>
    %c14_117 = arith.constant 14 : index
    %c0_118 = arith.constant 0 : index
    %c0_119 = arith.constant 0 : index
    %121 = vector.load %arg3[%c14_117, %c0_118, %c0_119] : memref<16x32x8xf32, #tpu.memory_space<vmem>>, vector<1x32x8xf32>
    %122 = vector.shape_cast %121 : vector<1x32x8xf32> to vector<32x8xf32>
    %cst_120 = arith.constant dense<0.000000e+00> : vector<16x8xf32>
    %123 = tpu.matmul %78, %122, %cst_120 {dimension_numbers = #tpu.dot_dimension_numbers<[1], [0], [0], [1], [0, 0, 1, 1], [], []>} : vector<16x32xf32>, vector<32x8xf32>, vector<16x8xf32> -> vector<16x8xf32>
    %c15_121 = arith.constant 15 : index
    %c0_122 = arith.constant 0 : index
    %c0_123 = arith.constant 0 : index
    %124 = vector.load %arg3[%c15_121, %c0_122, %c0_123] : memref<16x32x8xf32, #tpu.memory_space<vmem>>, vector<1x32x8xf32>
    %125 = vector.shape_cast %124 : vector<1x32x8xf32> to vector<32x8xf32>
    %cst_124 = arith.constant dense<0.000000e+00> : vector<16x8xf32>
    %126 = tpu.matmul %78, %125, %cst_124 {dimension_numbers = #tpu.dot_dimension_numbers<[1], [0], [0], [1], [0, 0, 1, 1], [], []>} : vector<16x32xf32>, vector<32x8xf32>, vector<16x8xf32> -> vector<16x8xf32>
    %127 = tpu.concatenate %81, %84, %87, %90, %93, %96, %99, %102, %105, %108, %111, %114, %117, %120, %123, %126 in 0 : vector<16x8xf32>, vector<16x8xf32>, vector<16x8xf32>, vector<16x8xf32>, vector<16x8xf32>, vector<16x8xf32>, vector<16x8xf32>, vector<16x8xf32>, vector<16x8xf32>, vector<16x8xf32>, vector<16x8xf32>, vector<16x8xf32>, vector<16x8xf32>, vector<16x8xf32>, vector<16x8xf32>, vector<16x8xf32> -> vector<256x8xf32>
    %c0_125 = arith.constant 0 : index
    %c0_126 = arith.constant 0 : index
    %128 = vector.load %arg5[%c0_125, %c0_126] : memref<32x256xf32, #tpu.memory_space<vmem>>, vector<32x256xf32>
    %cst_127 = arith.constant dense<0.000000e+00> : vector<32x8xf32>
    %129 = tpu.matmul %128, %127, %cst_127 {dimension_numbers = #tpu.dot_dimension_numbers<[1], [0], [0], [1], [0, 0, 1, 1], [], []>} : vector<32x256xf32>, vector<256x8xf32>, vector<32x8xf32> -> vector<32x8xf32>
    %130 = arith.mulf %129, %129 : vector<32x8xf32>
    %131 = tpu.concatenate %129, %130 in 0 : vector<32x8xf32>, vector<32x8xf32> -> vector<64x8xf32>
    %cst_128 = arith.constant dense<0.000000e+00> : vector<64xf32>
    %132 = vector.multi_reduction <add>, %131, %cst_128 [1] : vector<64x8xf32> to vector<64xf32>
    %133 = vector.shape_cast %132 : vector<64xf32> to vector<64x1xf32>
    %cst_129 = arith.constant 8.000000e+00 : f32
    %134 = vector.broadcast %cst_129 : f32 to vector<64x1xf32>
    %135 = arith.divf %133, %134 : vector<64x1xf32>
    %136 = vector.extract_strided_slice %135 {offsets = [0, 0], sizes = [32, 1], strides = [1, 1]} : vector<64x1xf32> to vector<32x1xf32>
    %137 = vector.extract_strided_slice %135 {offsets = [32, 0], sizes = [32, 1], strides = [1, 1]} : vector<64x1xf32> to vector<32x1xf32>
    %138 = arith.mulf %136, %136 : vector<32x1xf32>
    %139 = arith.subf %137, %138 : vector<32x1xf32>
    %cst_130 = arith.constant 0.000000e+00 : f32
    %140 = vector.broadcast %cst_130 : f32 to vector<32x1xf32>
    %141 = arith.maximumf %139, %140 : vector<32x1xf32>
    %142 = vector.broadcast %136 : vector<32x1xf32> to vector<32x8xf32>
    %143 = arith.subf %129, %142 : vector<32x8xf32>
    %cst_131 = arith.constant 9.99999974E-6 : f32
    %144 = vector.broadcast %cst_131 : f32 to vector<32x1xf32>
    %145 = arith.addf %141, %144 : vector<32x1xf32>
    %146 = math.rsqrt %145 : vector<32x1xf32>
    %147 = vector.broadcast %146 : vector<32x1xf32> to vector<32x8xf32>
    %148 = arith.mulf %143, %147 : vector<32x8xf32>
    %cst_132 = arith.constant 0.00999999977 : f32
    %149 = vector.broadcast %cst_132 : f32 to vector<32x8xf32>
    %150 = arith.mulf %149, %148 : vector<32x8xf32>
    %151 = arith.maximumf %148, %150 : vector<32x8xf32>
    %c0_133 = arith.constant 0 : index
    %c0_134 = arith.constant 0 : index
    %152 = vector.load %arg6[%c0_133, %c0_134] : memref<32x8xf32, #tpu.memory_space<vmem>>, vector<32x8xf32>
    %153 = arith.mulf %151, %152 : vector<32x8xf32>
    %cst_135 = arith.constant dense<0.000000e+00> : vector<8xf32>
    %154 = vector.multi_reduction <add>, %153, %cst_135 [0] : vector<32x8xf32> to vector<8xf32>
    %155 = vector.shape_cast %154 : vector<8xf32> to vector<1x8xf32>
    %c0_136 = arith.constant 0 : index
    %c0_137 = arith.constant 0 : index
    %156 = vector.load %arg7[%c0_136, %c0_137] : memref<8x2xf32, #tpu.memory_space<vmem>>, vector<8x2xf32>
    %cst_138 = arith.constant dense<0.000000e+00> : vector<1x2xf32>
    %157 = tpu.matmul %155, %156, %cst_138 {dimension_numbers = #tpu.dot_dimension_numbers<[1], [0], [0], [1], [0, 0, 1, 1], [], []>} : vector<1x8xf32>, vector<8x2xf32>, vector<1x2xf32> -> vector<1x2xf32>
    %c0_139 = arith.constant 0 : index
    %c0_140 = arith.constant 0 : index
    %158 = vector.load %arg8[%c0_139, %c0_140] : memref<1x2xf32, #tpu.memory_space<vmem>>, vector<1x2xf32>
    tpu.vector_store %arg8[%c0_139, %c0_140], %157 {strides = array<i32>} : memref<1x2xf32, #tpu.memory_space<vmem>>, vector<1x2xf32>,
    return
  }
}

</mosaic_0001>

<llo_original>
// kernel: discriminator_forward.1
$region0: #{discriminator_forward.1}
  #allocation0 [shape = 'u32[]', space=smem, size = 0x4, offset = 0x4, fixed_abs, tag = 'smem constant byte address 0x4 - core index']
  #allocation1 [shape = 'u32[144,128]{1,0:T(1,128)}', space=vmem, size = 0x12000, scoped, tag = 'internal scratch']
  %s0 = inlined_call_operand.vmem [shape: f32[48,128], index: 0, kind: input, shape index: {}]
  %s1 = inlined_call_operand.vmem [shape: f32[8,48], index: 1, kind: input, shape index: {}]
  %s2 = inlined_call_operand.vmem [shape: f32[16,128,32], index: 2, kind: input, shape index: {}]
  %s3 = inlined_call_operand.vmem [shape: f32[16,32,8], index: 3, kind: input, shape index: {}]
  %s4 = inlined_call_operand.vmem [shape: f32[16,128], index: 4, kind: input, shape index: {}]
  %s5 = inlined_call_operand.vmem [shape: f32[32,256], index: 5, kind: input, shape index: {}]
  %s6 = inlined_call_operand.vmem [shape: f32[32,8], index: 6, kind: input, shape index: {}]
  %s7 = inlined_call_operand.vmem [shape: f32[8,2], index: 7, kind: input, shape index: {}]
  %s8 = inlined_call_operand.hbm [shape: f32[1,2], index: 8, kind: output, shape index: {}]
  %s9 = sld [smem:[#allocation0]]
  $region42: #{discriminator_forward.1} parent=0
    _
  %s11 = ssub.s32 1, %s9
  %s12 = scalar_select 0, %s11, %s9
  $region1: #{discriminator_forward.1} parent=0
    #allocation2 [shape = 'u8[512]{0}', space=vmem, size = 0x400, scoped, tag = 'output window, operand 0, single buffered']
    #allocation3 [shape = 's32[1]{0}', space=sflag, size = 0x4, scoped, tag = 'scoped memory for discriminator_forward.1']
    %13 = vsyncpa [#allocation3], 0
    // Predicated region
    $region2: #{discriminator_forward.1} parent=1 // pred_check
      _
    $region3: #{discriminator_forward.1} parent=1 // pred_check_branch
      %15 = sbr.rel (0) target = $region5
    $region4: #{discriminator_forward.1} parent=1 // pred_region
      _
    $region5: #{discriminator_forward.1} parent=1 // pred_fallthru
      _
    // Predicated region
    $region6: #{discriminator_forward.1} parent=1 // pred_check
      _
    $region7: #{discriminator_forward.1} parent=1 // pred_check_branch
      %17 = sbr.rel (0) target = $region9
    $region8: #{discriminator_forward.1} parent=1 // pred_region
      _
    $region9: #{discriminator_forward.1} parent=1 // pred_fallthru
      _
    // Predicated region
    $region10: #{discriminator_forward.1} parent=1 // pred_check
      _
    $region11: #{discriminator_forward.1} parent=1 // pred_check_branch
      %19 = sbr.rel (0) target = $region13
    $region12: #{discriminator_forward.1} parent=1 // pred_region
      _
    $region13: #{discriminator_forward.1} parent=1 // pred_fallthru
      _
    // Predicated region
    $region14: #{discriminator_forward.1} parent=1 // pred_check
      _
    $region15: #{discriminator_forward.1} parent=1 // pred_check_branch
      %21 = sbr.rel (0) target = $region17
    $region16: #{discriminator_forward.1} parent=1 // pred_region
      _
    $region17: #{discriminator_forward.1} parent=1 // pred_fallthru
      _
    // Predicated region
    $region18: #{discriminator_forward.1} parent=1 // pred_check
      _
    $region19: #{discriminator_forward.1} parent=1 // pred_check_branch
      %23 = sbr.rel (0) target = $region21
    $region20: #{discriminator_forward.1} parent=1 // pred_region
      _
    $region21: #{discriminator_forward.1} parent=1 // pred_fallthru
      _
    // Predicated region
    $region22: #{discriminator_forward.1} parent=1 // pred_check
      _
    $region23: #{discriminator_forward.1} parent=1 // pred_check_branch
      %25 = sbr.rel (0) target = $region25
    $region24: #{discriminator_forward.1} parent=1 // pred_region
      _
    $region25: #{discriminator_forward.1} parent=1 // pred_fallthru
      _
    // Predicated region
    $region26: #{discriminator_forward.1} parent=1 // pred_check
      _
    $region27: #{discriminator_forward.1} parent=1 // pred_check_branch
      %27 = sbr.rel (0) target = $region29
    $region28: #{discriminator_forward.1} parent=1 // pred_region
      _
    $region29: #{discriminator_forward.1} parent=1 // pred_fallthru
      _
    // Predicated region
    $region30: #{discriminator_forward.1} parent=1 // pred_check
      _
    $region31: #{discriminator_forward.1} parent=1 // pred_check_branch
      %29 = sbr.rel (0) target = $region33
    $region32: #{discriminator_forward.1} parent=1 // pred_region
      _
    $region33: #{discriminator_forward.1} parent=1 // pred_fallthru
      _
    %v30 = vld [vmem:[%s1] sm:$0xff]
    %v31 = vld [vmem:[%s0] sm:$0xff]
    %v32 = vld [vmem:[%s0 + $0x8] sm:$0xff]
    %v33 = vld [vmem:[%s0 + $0x10] sm:$0xff]
    %v34 = vld [vmem:[%s0 + $0x18] sm:$0xff]
    %v35 = vld [vmem:[%s0 + $0x20] sm:$0xff]
    %v36 = vld [vmem:[%s0 + $0x28] sm:$0xff]
    %vm37 = vcmask 392192
    %v39 = vsel %vm37, %v30, 0
    %41 = vmatprep.subr.mxu0 0.0
    %42 = vmatpush1.msra.mxu0 %v31
    %43 = vmatprep.subr.mxu0 0.0
    %44 = vmatpush1.msra.mxu0 %v32
    %45 = vmatprep.subr.mxu0 0.0
    %46 = vmatpush1.msra.mxu0 %v33
    %47 = vmatprep.subr.mxu0 0.0
    %48 = vmatpush1.msra.mxu0 %v34
    %49 = vmatprep.subr.mxu0 0.0
    %50 = vmatpush1.msra.mxu0 %v35
    %51 = vmatprep.subr.mxu0 0.0
    %52 = vmatpush1.msra.mxu0 %v36
    %53 = vmatprep.subr.mxu0 0.0
    %54 = vmatpush1.msra.mxu0 0.0
    %55 = vmatprep.subr.mxu0 0.0
    %56 = vmatpush1.msra.mxu0 0.0
    %57 = vmatprep.subr.mxu0 0.0
    %58 = vmatpush1.msra.mxu0 0.0
    %59 = vmatprep.subr.mxu0 0.0
    %60 = vmatpush1.msra.mxu0 0.0
    %61 = vmatprep.subr.mxu0 0.0
    %62 = vmatpush1.msra.mxu0 0.0
    %63 = vmatprep.subr.mxu0 0.0
    %64 = vmatpush1.msra.mxu0 0.0
    %65 = vmatprep.subr.mxu0 0.0
    %66 = vmatpush1.msra.mxu0 0.0
    %67 = vmatprep.subr.mxu0 0.0
    %68 = vmatpush1.msra.mxu0 0.0
    %69 = vmatprep.subr.mxu0 0.0
    %70 = vmatpush1.msra.mxu0 0.0
    %71 = vmatprep.subr.mxu0 0.0
    %72 = vmatpush1.msra.mxu0 0.0
    %73 = vmatprep.subr.mxu0 0.0
    %74 = vmatpush1.msra.mxu0 0.0
    %75 = vmatprep.subr.mxu0 0.0
    %76 = vmatpush1.msra.mxu0 0.0
    %77 = vmatprep.subr.mxu0 0.0
    %78 = vmatpush1.msra.mxu0 0.0
    %79 = vmatprep.subr.mxu0 0.0
    %80 = vmatpush1.msra.mxu0 0.0
    %81 = vmatprep.subr.mxu0 0.0
    %82 = vmatpush1.msra.mxu0 0.0
    %83 = vmatprep.subr.mxu0 0.0
    %84 = vmatpush1.msra.mxu0 0.0
    %85 = vmatprep.subr.mxu0 0.0
    %86 = vmatpush1.msra.mxu0 0.0
    %87 = vmatprep.subr.mxu0 0.0
    %88 = vmatpush1.msra.mxu0 0.0
    %89 = vmatprep.subr.mxu0 0.0
    %90 = vmatpush1.msra.mxu0 0.0
    %91 = vmatprep.subr.mxu0 0.0
    %92 = vmatpush1.msra.mxu0 0.0
    %93 = vmatprep.subr.mxu0 0.0
    %94 = vmatpush1.msra.mxu0 0.0
    %95 = vmatprep.subr.mxu0 0.0
    %96 = vmatpush1.msra.mxu0 0.0
    %97 = vmatprep.subr.mxu0 0.0
    %98 = vmatpush1.msra.mxu0 0.0
    %99 = vmatprep.subr.mxu0 0.0
    %100 = vmatpush1.msra.mxu0 0.0
    %101 = vmatprep.subr.mxu0 0.0
    %102 = vmatpush1.msra.mxu0 0.0
    %103 = vmatprep.subr.mxu0 0.0
    %104 = vmatpush1.msra.mxu0 0.0
    %105 = vmatprep.mubr.f32.mxu0 0.0
    %106 = vmatmul.mubr.f32.gmra.mrb[0].mxu0 %v39
    %v107 = vpop.f32.mrb[0].mxu0
    %v108 = vadd.f32 0.0, %v107
    %v109 = vpop.f32.mrb[0].mxu0
    %110 = vdwg.mxu0
    %v111 = vmul.f32 %v108, 0.01
    %v112 = vmax.f32 %v108, %v111
    %v113 = vld [vmem:[%s2] sm:$0xff]
    %v114 = vld [vmem:[%s2 + $0x8] sm:$0xff]
    %v115 = vld [vmem:[%s2 + $0x10] sm:$0xff]
    %v116 = vld [vmem:[%s2 + $0x18] sm:$0xff]
    %v117 = vld [vmem:[%s2 + $0x20] sm:$0xff]
    %v118 = vld [vmem:[%s2 + $0x28] sm:$0xff]
    %v119 = vld [vmem:[%s2 + $0x30] sm:$0xff]
    %v120 = vld [vmem:[%s2 + $0x38] sm:$0xff]
    %v121 = vld [vmem:[%s2 + $0x40] sm:$0xff]
    %v122 = vld [vmem:[%s2 + $0x48] sm:$0xff]
    %v123 = vld [vmem:[%s2 + $0x50] sm:$0xff]
    %v124 = vld [vmem:[%s2 + $0x58] sm:$0xff]
    %v125 = vld [vmem:[%s2 + $0x60] sm:$0xff]
    %v126 = vld [vmem:[%s2 + $0x68] sm:$0xff]
    %v127 = vld [vmem:[%s2 + $0x70] sm:$0xff]
    %v128 = vld [vmem:[%s2 + $0x78] sm:$0xff]
    %129 = vmatprep.subr.mxu0 0.0
    %130 = vmatpush1.msra.mxu0 %v113
    %131 = vmatprep.subr.mxu0 0.0
    %132 = vmatpush1.msra.mxu0 %v114
    %133 = vmatprep.subr.mxu0 0.0
    %134 = vmatpush1.msra.mxu0 %v115
    %135 = vmatprep.subr.mxu0 0.0
    %136 = vmatpush1.msra.mxu0 %v116
    %137 = vmatprep.subr.mxu0 0.0
    %138 = vmatpush1.msra.mxu0 %v117
    %139 = vmatprep.subr.mxu0 0.0
    %140 = vmatpush1.msra.mxu0 %v118
    %141 = vmatprep.subr.mxu0 0.0
    %142 = vmatpush1.msra.mxu0 %v119
    %143 = vmatprep.subr.mxu0 0.0
    %144 = vmatpush1.msra.mxu0 %v120
    %145 = vmatprep.subr.mxu0 0.0
    %146 = vmatpush1.msra.mxu0 %v121
    %147 = vmatprep.subr.mxu0 0.0
    %148 = vmatpush1.msra.mxu0 %v122
    %149 = vmatprep.subr.mxu0 0.0
    %150 = vmatpush1.msra.mxu0 %v123
    %151 = vmatprep.subr.mxu0 0.0
    %152 = vmatpush1.msra.mxu0 %v124
    %153 = vmatprep.subr.mxu0 0.0
    %154 = vmatpush1.msra.mxu0 %v125
    %155 = vmatprep.subr.mxu0 0.0
    %156 = vmatpush1.msra.mxu0 %v126
    %157 = vmatprep.subr.mxu0 0.0
    %158 = vmatpush1.msra.mxu0 %v127
    %159 = vmatprep.subr.mxu0 0.0
    %160 = vmatpush1.msra.mxu0 %v128
    %161 = vmatprep.subr.mxu0 0.0
    %162 = vmatpush1.msra.mxu0 0.0
    %163 = vmatprep.subr.mxu0 0.0
    %164 = vmatpush1.msra.mxu0 0.0
    %165 = vmatprep.subr.mxu0 0.0
    %166 = vmatpush1.msra.mxu0 0.0
    %167 = vmatprep.subr.mxu0 0.0
    %168 = vmatpush1.msra.mxu0 0.0
    %169 = vmatprep.subr.mxu0 0.0
    %170 = vmatpush1.msra.mxu0 0.0
    %171 = vmatprep.subr.mxu0 0.0
    %172 = vmatpush1.msra.mxu0 0.0
    %173 = vmatprep.subr.mxu0 0.0
    %174 = vmatpush1.msra.mxu0 0.0
    %175 = vmatprep.subr.mxu0 0.0
    %176 = vmatpush1.msra.mxu0 0.0
    %177 = vmatprep.subr.mxu0 0.0
    %178 = vmatpush1.msra.mxu0 0.0
    %179 = vmatprep.subr.mxu0 0.0
    %180 = vmatpush1.msra.mxu0 0.0
    %181 = vmatprep.subr.mxu0 0.0
    %182 = vmatpush1.msra.mxu0 0.0
    %183 = vmatprep.subr.mxu0 0.0
    %184 = vmatpush1.msra.mxu0 0.0
    %185 = vmatprep.subr.mxu0 0.0
    %186 = vmatpush1.msra.mxu0 0.0
    %187 = vmatprep.subr.mxu0 0.0
    %188 = vmatpush1.msra.mxu0 0.0
    %189 = vmatprep.subr.mxu0 0.0
    %190 = vmatpush1.msra.mxu0 0.0
    %191 = vmatprep.subr.mxu0 0.0
    %192 = vmatpush1.msra.mxu0 0.0
    %193 = vmatprep.mubr.f32.mxu0 0.0
    %194 = vmatmul.mubr.f32.gmra.mrb[0].mxu0 %v112
    %v195 = vpop.f32.mrb[0].mxu0
    %v196 = vadd.f32 0.0, %v195
    %v197 = vpop.f32.mrb[0].mxu0
    %198 = vdwg.mxu0
    %s199 = scalar_lea.vmem %s2, 128
    %v200 = vld [vmem:[%s199] sm:$0xff]
    %v201 = vld [vmem:[%s199 + $0x8] sm:$0xff]
    %v202 = vld [vmem:[%s199 + $0x10] sm:$0xff]
    %v203 = vld [vmem:[%s199 + $0x18] sm:$0xff]
    %v204 = vld [vmem:[%s199 + $0x20] sm:$0xff]
    %v205 = vld [vmem:[%s199 + $0x28] sm:$0xff]
    %v206 = vld [vmem:[%s199 + $0x30] sm:$0xff]
    %v207 = vld [vmem:[%s199 + $0x38] sm:$0xff]
    %v208 = vld [vmem:[%s199 + $0x40] sm:$0xff]
    %v209 = vld [vmem:[%s199 + $0x48] sm:$0xff]
    %v210 = vld [vmem:[%s199 + $0x50] sm:$0xff]
    %v211 = vld [vmem:[%s199 + $0x58] sm:$0xff]
    %v212 = vld [vmem:[%s199 + $0x60] sm:$0xff]
    %v213 = vld [vmem:[%s199 + $0x68] sm:$0xff]
    %v214 = vld [vmem:[%s199 + $0x70] sm:$0xff]
    %v215 = vld [vmem:[%s199 + $0x78] sm:$0xff]
    %216 = vmatprep.subr.mxu0 0.0
    %217 = vmatpush1.msra.mxu0 %v200
    %218 = vmatprep.subr.mxu0 0.0
    %219 = vmatpush1.msra.mxu0 %v201
    %220 = vmatprep.subr.mxu0 0.0
    %221 = vmatpush1.msra.mxu0 %v202
    %222 = vmatprep.subr.mxu0 0.0
    %223 = vmatpush1.msra.mxu0 %v203
    %224 = vmatprep.subr.mxu0 0.0
    %225 = vmatpush1.msra.mxu0 %v204
    %226 = vmatprep.subr.mxu0 0.0
    %227 = vmatpush1.msra.mxu0 %v205
    %228 = vmatprep.subr.mxu0 0.0
    %229 = vmatpush1.msra.mxu0 %v206
    %230 = vmatprep.subr.mxu0 0.0
    %231 = vmatpush1.msra.mxu0 %v207
    %232 = vmatprep.subr.mxu0 0.0
    %233 = vmatpush1.msra.mxu0 %v208
    %234 = vmatprep.subr.mxu0 0.0
    %235 = vmatpush1.msra.mxu0 %v209
    %236 = vmatprep.subr.mxu0 0.0
    %237 = vmatpush1.msra.mxu0 %v210
    %238 = vmatprep.subr.mxu0 0.0
    %239 = vmatpush1.msra.mxu0 %v211
    %240 = vmatprep.subr.mxu0 0.0
    %241 = vmatpush1.msra.mxu0 %v212
    %242 = vmatprep.subr.mxu0 0.0
    %243 = vmatpush1.msra.mxu0 %v213
    %244 = vmatprep.subr.mxu0 0.0
    %245 = vmatpush1.msra.mxu0 %v214
    %246 = vmatprep.subr.mxu0 0.0
    %247 = vmatpush1.msra.mxu0 %v215
    %248 = vmatprep.subr.mxu0 0.0
    %249 = vmatpush1.msra.mxu0 0.0
    %250 = vmatprep.subr.mxu0 0.0
    %251 = vmatpush1.msra.mxu0 0.0
    %252 = vmatprep.subr.mxu0 0.0
    %253 = vmatpush1.msra.mxu0 0.0
    %254 = vmatprep.subr.mxu0 0.0
    %255 = vmatpush1.msra.mxu0 0.0
    %256 = vmatprep.subr.mxu0 0.0
    %257 = vmatpush1.msra.mxu0 0.0
    %258 = vmatprep.subr.mxu0 0.0
    %259 = vmatpush1.msra.mxu0 0.0
    %260 = vmatprep.subr.mxu0 0.0
    %261 = vmatpush1.msra.mxu0 0.0
    %262 = vmatprep.subr.mxu0 0.0
    %263 = vmatpush1.msra.mxu0 0.0
    %264 = vmatprep.subr.mxu0 0.0
    %265 = vmatpush1.msra.mxu0 0.0
    %266 = vmatprep.subr.mxu0 0.0
    %267 = vmatpush1.msra.mxu0 0.0
    %268 = vmatprep.subr.mxu0 0.0
    %269 = vmatpush1.msra.mxu0 0.0
    %270 = vmatprep.subr.mxu0 0.0
    %271 = vmatpush1.msra.mxu0 0.0
    %272 = vmatprep.subr.mxu0 0.0
    %273 = vmatpush1.msra.mxu0 0.0
    %274 = vmatprep.subr.mxu0 0.0
    %275 = vmatpush1.msra.mxu0 0.0
    %276 = vmatprep.subr.mxu0 0.0
    %277 = vmatpush1.msra.mxu0 0.0
    %278 = vmatprep.subr.mxu0 0.0
    %279 = vmatpush1.msra.mxu0 0.0
    %280 = vmatprep.mubr.f32.mxu0 0.0
    %281 = vmatmul.mubr.f32.gmra.mrb[0].mxu0 %v112
    %v282 = vpop.f32.mrb[0].mxu0
    %v283 = vadd.f32 0.0, %v282
    %v284 = vpop.f32.mrb[0].mxu0
    %285 = vdwg.mxu0
    %s286 = scalar_lea.vmem %s2, 256
    %v287 = vld [vmem:[%s286] sm:$0xff]
    %v288 = vld [vmem:[%s286 + $0x8] sm:$0xff]
    %v289 = vld [vmem:[%s286 + $0x10] sm:$0xff]
    %v290 = vld [vmem:[%s286 + $0x18] sm:$0xff]
    %v291 = vld [vmem:[%s286 + $0x20] sm:$0xff]
    %v292 = vld [vmem:[%s286 + $0x28] sm:$0xff]
    %v293 = vld [vmem:[%s286 + $0x30] sm:$0xff]
    %v294 = vld [vmem:[%s286 + $0x38] sm:$0xff]
    %v295 = vld [vmem:[%s286 + $0x40] sm:$0xff]
    %v296 = vld [vmem:[%s286 + $0x48] sm:$0xff]
    %v297 = vld [vmem:[%s286 + $0x50] sm:$0xff]
    %v298 = vld [vmem:[%s286 + $0x58] sm:$0xff]
    %v299 = vld [vmem:[%s286 + $0x60] sm:$0xff]
    %v300 = vld [vmem:[%s286 + $0x68] sm:$0xff]
    %v301 = vld [vmem:[%s286 + $0x70] sm:$0xff]
    %v302 = vld [vmem:[%s286 + $0x78] sm:$0xff]
    %303 = vmatprep.subr.mxu0 0.0
    %304 = vmatpush1.msra.mxu0 %v287
    %305 = vmatprep.subr.mxu0 0.0
    %306 = vmatpush1.msra.mxu0 %v288
    %307 = vmatprep.subr.mxu0 0.0
    %308 = vmatpush1.msra.mxu0 %v289
    %309 = vmatprep.subr.mxu0 0.0
    %310 = vmatpush1.msra.mxu0 %v290
    %311 = vmatprep.subr.mxu0 0.0
    %312 = vmatpush1.msra.mxu0 %v291
    %313 = vmatprep.subr.mxu0 0.0
    %314 = vmatpush1.msra.mxu0 %v292
    %315 = vmatprep.subr.mxu0 0.0
    %316 = vmatpush1.msra.mxu0 %v293
    %317 = vmatprep.subr.mxu0 0.0
    %318 = vmatpush1.msra.mxu0 %v294
    %319 = vmatprep.subr.mxu0 0.0
    %320 = vmatpush1.msra.mxu0 %v295
    %321 = vmatprep.subr.mxu0 0.0
    %322 = vmatpush1.msra.mxu0 %v296
    %323 = vmatprep.subr.mxu0 0.0
    %324 = vmatpush1.msra.mxu0 %v297
    %325 = vmatprep.subr.mxu0 0.0
    %326 = vmatpush1.msra.mxu0 %v298
    %327 = vmatprep.subr.mxu0 0.0
    %328 = vmatpush1.msra.mxu0 %v299
    %329 = vmatprep.subr.mxu0 0.0
    %330 = vmatpush1.msra.mxu0 %v300
    %331 = vmatprep.subr.mxu0 0.0
    %332 = vmatpush1.msra.mxu0 %v301
    %333 = vmatprep.subr.mxu0 0.0
    %334 = vmatpush1.msra.mxu0 %v302
    %335 = vmatprep.subr.mxu0 0.0
    %336 = vmatpush1.msra.mxu0 0.0
    %337 = vmatprep.subr.mxu0 0.0
    %338 = vmatpush1.msra.mxu0 0.0
    %339 = vmatprep.subr.mxu0 0.0
    %340 = vmatpush1.msra.mxu0 0.0
    %341 = vmatprep.subr.mxu0 0.0
    %342 = vmatpush1.msra.mxu0 0.0
    %343 = vmatprep.subr.mxu0 0.0
    %344 = vmatpush1.msra.mxu0 0.0
    %345 = vmatprep.subr.mxu0 0.0
    %346 = vmatpush1.msra.mxu0 0.0
    %347 = vmatprep.subr.mxu0 0.0
    %348 = vmatpush1.msra.mxu0 0.0
    %349 = vmatprep.subr.mxu0 0.0
    %350 = vmatpush1.msra.mxu0 0.0
    %351 = vmatprep.subr.mxu0 0.0
    %352 = vmatpush1.msra.mxu0 0.0
    %353 = vmatprep.subr.mxu0 0.0
    %354 = vmatpush1.msra.mxu0 0.0
    %355 = vmatprep.subr.mxu0 0.0
    %356 = vmatpush1.msra.mxu0 0.0
    %357 = vmatprep.subr.mxu0 0.0
    %358 = vmatpush1.msra.mxu0 0.0
    %359 = vmatprep.subr.mxu0 0.0
    %360 = vmatpush1.msra.mxu0 0.0
    %361 = vmatprep.subr.mxu0 0.0
    %362 = vmatpush1.msra.mxu0 0.0
    %363 = vmatprep.subr.mxu0 0.0
    %364 = vmatpush1.msra.mxu0 0.0
    %365 = vmatprep.subr.mxu0 0.0
    %366 = vmatpush1.msra.mxu0 0.0
    %367 = vmatprep.mubr.f32.mxu0 0.0
    %368 = vmatmul.mubr.f32.gmra.mrb[0].mxu0 %v112
    %v369 = vpop.f32.mrb[0].mxu0
    %v370 = vadd.f32 0.0, %v369
    %v371 = vpop.f32.mrb[0].mxu0
    %372 = vdwg.mxu0
    %s373 = scalar_lea.vmem %s2, 384
    %v374 = vld [vmem:[%s373] sm:$0xff]
    %v375 = vld [vmem:[%s373 + $0x8] sm:$0xff]
    %v376 = vld [vmem:[%s373 + $0x10] sm:$0xff]
    %v377 = vld [vmem:[%s373 + $0x18] sm:$0xff]
    %v378 = vld [vmem:[%s373 + $0x20] sm:$0xff]
    %v379 = vld [vmem:[%s373 + $0x28] sm:$0xff]
    %v380 = vld [vmem:[%s373 + $0x30] sm:$0xff]
    %v381 = vld [vmem:[%s373 + $0x38] sm:$0xff]
    %v382 = vld [vmem:[%s373 + $0x40] sm:$0xff]
    %v383 = vld [vmem:[%s373 + $0x48] sm:$0xff]
    %v384 = vld [vmem:[%s373 + $0x50] sm:$0xff]
    %v385 = vld [vmem:[%s373 + $0x58] sm:$0xff]
    %v386 = vld [vmem:[%s373 + $0x60] sm:$0xff]
    %v387 = vld [vmem:[%s373 + $0x68] sm:$0xff]
    %v388 = vld [vmem:[%s373 + $0x70] sm:$0xff]
    %v389 = vld [vmem:[%s373 + $0x78] sm:$0xff]
    %390 = vmatprep.subr.mxu0 0.0
    %391 = vmatpush1.msra.mxu0 %v374
    %392 = vmatprep.subr.mxu0 0.0
    %393 = vmatpush1.msra.mxu0 %v375
    %394 = vmatprep.subr.mxu0 0.0
    %395 = vmatpush1.msra.mxu0 %v376
    %396 = vmatprep.subr.mxu0 0.0
    %397 = vmatpush1.msra.mxu0 %v377
    %398 = vmatprep.subr.mxu0 0.0
    %399 = vmatpush1.msra.mxu0 %v378
    %400 = vmatprep.subr.mxu0 0.0
    %401 = vmatpush1.msra.mxu0 %v379
    %402 = vmatprep.subr.mxu0 0.0
    %403 = vmatpush1.msra.mxu0 %v380
    %404 = vmatprep.subr.mxu0 0.0
    %405 = vmatpush1.msra.mxu0 %v381
    %406 = vmatprep.subr.mxu0 0.0
    %407 = vmatpush1.msra.mxu0 %v382
    %408 = vmatprep.subr.mxu0 0.0
    %409 = vmatpush1.msra.mxu0 %v383
    %410 = vmatprep.subr.mxu0 0.0
    %411 = vmatpush1.msra.mxu0 %v384
    %412 = vmatprep.subr.mxu0 0.0
    %413 = vmatpush1.msra.mxu0 %v385
    %414 = vmatprep.subr.mxu0 0.0
    %415 = vmatpush1.msra.mxu0 %v386
    %416 = vmatprep.subr.mxu0 0.0
    %417 = vmatpush1.msra.mxu0 %v387
    %418 = vmatprep.subr.mxu0 0.0
    %419 = vmatpush1.msra.mxu0 %v388
    %420 = vmatprep.subr.mxu0 0.0
    %421 = vmatpush1.msra.mxu0 %v389
    %422 = vmatprep.subr.mxu0 0.0
    %423 = vmatpush1.msra.mxu0 0.0
    %424 = vmatprep.subr.mxu0 0.0
    %425 = vmatpush1.msra.mxu0 0.0
    %426 = vmatprep.subr.mxu0 0.0
    %427 = vmatpush1.msra.mxu0 0.0
    %428 = vmatprep.subr.mxu0 0.0
    %429 = vmatpush1.msra.mxu0 0.0
    %430 = vmatprep.subr.mxu0 0.0
    %431 = vmatpush1.msra.mxu0 0.0
    %432 = vmatprep.subr.mxu0 0.0
    %433 = vmatpush1.msra.mxu0 0.0
    %434 = vmatprep.subr.mxu0 0.0
    %435 = vmatpush1.msra.mxu0 0.0
    %436 = vmatprep.subr.mxu0 0.0
    %437 = vmatpush1.msra.mxu0 0.0
    %438 = vmatprep.subr.mxu0 0.0
    %439 = vmatpush1.msra.mxu0 0.0
    %440 = vmatprep.subr.mxu0 0.0
    %441 = vmatpush1.msra.mxu0 0.0
    %442 = vmatprep.subr.mxu0 0.0
    %443 = vmatpush1.msra.mxu0 0.0
    %444 = vmatprep.subr.mxu0 0.0
    %445 = vmatpush1.msra.mxu0 0.0
    %446 = vmatprep.subr.mxu0 0.0
    %447 = vmatpush1.msra.mxu0 0.0
    %448 = vmatprep.subr.mxu0 0.0
    %449 = vmatpush1.msra.mxu0 0.0
    %450 = vmatprep.subr.mxu0 0.0
    %451 = vmatpush1.msra.mxu0 0.0
    %452 = vmatprep.subr.mxu0 0.0
    %453 = vmatpush1.msra.mxu0 0.0
    %454 = vmatprep.mubr.f32.mxu0 0.0
    %455 = vmatmul.mubr.f32.gmra.mrb[0].mxu0 %v112
    %v456 = vpop.f32.mrb[0].mxu0
    %v457 = vadd.f32 0.0, %v456
    %v458 = vpop.f32.mrb[0].mxu0
    %459 = vdwg.mxu0
    %s460 = scalar_lea.vmem %s2, 512
    %v461 = vld [vmem:[%s460] sm:$0xff]
    %v462 = vld [vmem:[%s460 + $0x8] sm:$0xff]
    %v463 = vld [vmem:[%s460 + $0x10] sm:$0xff]
    %v464 = vld [vmem:[%s460 + $0x18] sm:$0xff]
    %v465 = vld [vmem:[%s460 + $0x20] sm:$0xff]
    %v466 = vld [vmem:[%s460 + $0x28] sm:$0xff]
    %v467 = vld [vmem:[%s460 + $0x30] sm:$0xff]
    %v468 = vld [vmem:[%s460 + $0x38] sm:$0xff]
    %v469 = vld [vmem:[%s460 + $0x40] sm:$0xff]
    %v470 = vld [vmem:[%s460 + $0x48] sm:$0xff]
    %v471 = vld [vmem:[%s460 + $0x50] sm:$0xff]
    %v472 = vld [vmem:[%s460 + $0x58] sm:$0xff]
    %v473 = vld [vmem:[%s460 + $0x60] sm:$0xff]
    %v474 = vld [vmem:[%s460 + $0x68] sm:$0xff]
    %v475 = vld [vmem:[%s460 + $0x70] sm:$0xff]
    %v476 = vld [vmem:[%s460 + $0x78] sm:$0xff]
    %477 = vmatprep.subr.mxu0 0.0
    %478 = vmatpush1.msra.mxu0 %v461
    %479 = vmatprep.subr.mxu0 0.0
    %480 = vmatpush1.msra.mxu0 %v462
    %481 = vmatprep.subr.mxu0 0.0
    %482 = vmatpush1.msra.mxu0 %v463
    %483 = vmatprep.subr.mxu0 0.0
    %484 = vmatpush1.msra.mxu0 %v464
    %485 = vmatprep.subr.mxu0 0.0
    %486 = vmatpush1.msra.mxu0 %v465
    %487 = vmatprep.subr.mxu0 0.0
    %488 = vmatpush1.msra.mxu0 %v466
    %489 = vmatprep.subr.mxu0 0.0
    %490 = vmatpush1.msra.mxu0 %v467
    %491 = vmatprep.subr.mxu0 0.0
    %492 = vmatpush1.msra.mxu0 %v468
    %493 = vmatprep.subr.mxu0 0.0
    %494 = vmatpush1.msra.mxu0 %v469
    %495 = vmatprep.subr.mxu0 0.0
    %496 = vmatpush1.msra.mxu0 %v470
    %497 = vmatprep.subr.mxu0 0.0
    %498 = vmatpush1.msra.mxu0 %v471
    %499 = vmatprep.subr.mxu0 0.0
    %500 = vmatpush1.msra.mxu0 %v472
    %501 = vmatprep.subr.mxu0 0.0
    %502 = vmatpush1.msra.mxu0 %v473
    %503 = vmatprep.subr.mxu0 0.0
    %504 = vmatpush1.msra.mxu0 %v474
    %505 = vmatprep.subr.mxu0 0.0
    %506 = vmatpush1.msra.mxu0 %v475
    %507 = vmatprep.subr.mxu0 0.0
    %508 = vmatpush1.msra.mxu0 %v476
    %509 = vmatprep.subr.mxu0 0.0
    %510 = vmatpush1.msra.mxu0 0.0
    %511 = vmatprep.subr.mxu0 0.0
    %512 = vmatpush1.msra.mxu0 0.0
    %513 = vmatprep.subr.mxu0 0.0
    %514 = vmatpush1.msra.mxu0 0.0
    %515 = vmatprep.subr.mxu0 0.0
    %516 = vmatpush1.msra.mxu0 0.0
    %517 = vmatprep.subr.mxu0 0.0
    %518 = vmatpush1.msra.mxu0 0.0
    %519 = vmatprep.subr.mxu0 0.0
    %520 = vmatpush1.msra.mxu0 0.0
    %521 = vmatprep.subr.mxu0 0.0
    %522 = vmatpush1.msra.mxu0 0.0
    %523 = vmatprep.subr.mxu0 0.0
    %524 = vmatpush1.msra.mxu0 0.0
    %525 = vmatprep.subr.mxu0 0.0
    %526 = vmatpush1.msra.mxu0 0.0
    %527 = vmatprep.subr.mxu0 0.0
    %528 = vmatpush1.msra.mxu0 0.0
    %529 = vmatprep.subr.mxu0 0.0
    %530 = vmatpush1.msra.mxu0 0.0
    %531 = vmatprep.subr.mxu0 0.0
    %532 = vmatpush1.msra.mxu0 0.0
    %533 = vmatprep.subr.mxu0 0.0
    %534 = vmatpush1.msra.mxu0 0.0
    %535 = vmatprep.subr.mxu0 0.0
    %536 = vmatpush1.msra.mxu0 0.0
    %537 = vmatprep.subr.mxu0 0.0
    %538 = vmatpush1.msra.mxu0 0.0
    %539 = vmatprep.subr.mxu0 0.0
    %540 = vmatpush1.msra.mxu0 0.0
    %541 = vmatprep.mubr.f32.mxu0 0.0
    %542 = vmatmul.mubr.f32.gmra.mrb[0].mxu0 %v112
    %v543 = vpop.f32.mrb[0].mxu0
    %v544 = vadd.f32 0.0, %v543
    %v545 = vpop.f32.mrb[0].mxu0
    %546 = vdwg.mxu0
    %s547 = scalar_lea.vmem %s2, 640
    %v548 = vld [vmem:[%s547] sm:$0xff]
    %v549 = vld [vmem:[%s547 + $0x8] sm:$0xff]
    %v550 = vld [vmem:[%s547 + $0x10] sm:$0xff]
    %v551 = vld [vmem:[%s547 + $0x18] sm:$0xff]
    %v552 = vld [vmem:[%s547 + $0x20] sm:$0xff]
    %v553 = vld [vmem:[%s547 + $0x28] sm:$0xff]
    %v554 = vld [vmem:[%s547 + $0x30] sm:$0xff]
    %v555 = vld [vmem:[%s547 + $0x38] sm:$0xff]
    %v556 = vld [vmem:[%s547 + $0x40] sm:$0xff]
    %v557 = vld [vmem:[%s547 + $0x48] sm:$0xff]
    %v558 = vld [vmem:[%s547 + $0x50] sm:$0xff]
    %v559 = vld [vmem:[%s547 + $0x58] sm:$0xff]
    %v560 = vld [vmem:[%s547 + $0x60] sm:$0xff]
    %v561 = vld [vmem:[%s547 + $0x68] sm:$0xff]
    %v562 = vld [vmem:[%s547 + $0x70] sm:$0xff]
    %v563 = vld [vmem:[%s547 + $0x78] sm:$0xff]
    %564 = vmatprep.subr.mxu0 0.0
    %565 = vmatpush1.msra.mxu0 %v548
    %566 = vmatprep.subr.mxu0 0.0
    %567 = vmatpush1.msra.mxu0 %v549
    %568 = vmatprep.subr.mxu0 0.0
    %569 = vmatpush1.msra.mxu0 %v550
    %570 = vmatprep.subr.mxu0 0.0
    %571 = vmatpush1.msra.mxu0 %v551
    %572 = vmatprep.subr.mxu0 0.0
    %573 = vmatpush1.msra.mxu0 %v552
    %574 = vmatprep.subr.mxu0 0.0
    %575 = vmatpush1.msra.mxu0 %v553
    %576 = vmatprep.subr.mxu0 0.0
    %577 = vmatpush1.msra.mxu0 %v554
    %578 = vmatprep.subr.mxu0 0.0
    %579 = vmatpush1.msra.mxu0 %v555
    %580 = vmatprep.subr.mxu0 0.0
    %581 = vmatpush1.msra.mxu0 %v556
    %582 = vmatprep.subr.mxu0 0.0
    %583 = vmatpush1.msra.mxu0 %v557
    %584 = vmatprep.subr.mxu0 0.0
    %585 = vmatpush1.msra.mxu0 %v558
    %586 = vmatprep.subr.mxu0 0.0
    %587 = vmatpush1.msra.mxu0 %v559
    %588 = vmatprep.subr.mxu0 0.0
    %589 = vmatpush1.msra.mxu0 %v560
    %590 = vmatprep.subr.mxu0 0.0
    %591 = vmatpush1.msra.mxu0 %v561
    %592 = vmatprep.subr.mxu0 0.0
    %593 = vmatpush1.msra.mxu0 %v562
    %594 = vmatprep.subr.mxu0 0.0
    %595 = vmatpush1.msra.mxu0 %v563
    %596 = vmatprep.subr.mxu0 0.0
    %597 = vmatpush1.msra.mxu0 0.0
    %598 = vmatprep.subr.mxu0 0.0
    %599 = vmatpush1.msra.mxu0 0.0
    %600 = vmatprep.subr.mxu0 0.0
    %601 = vmatpush1.msra.mxu0 0.0
    %602 = vmatprep.subr.mxu0 0.0
    %603 = vmatpush1.msra.mxu0 0.0
    %604 = vmatprep.subr.mxu0 0.0
    %605 = vmatpush1.msra.mxu0 0.0
    %606 = vmatprep.subr.mxu0 0.0
    %607 = vmatpush1.msra.mxu0 0.0
    %608 = vmatprep.subr.mxu0 0.0
    %609 = vmatpush1.msra.mxu0 0.0
    %610 = vmatprep.subr.mxu0 0.0
    %611 = vmatpush1.msra.mxu0 0.0
    %612 = vmatprep.subr.mxu0 0.0
    %613 = vmatpush1.msra.mxu0 0.0
    %614 = vmatprep.subr.mxu0 0.0
    %615 = vmatpush1.msra.mxu0 0.0
    %616 = vmatprep.subr.mxu0 0.0
    %617 = vmatpush1.msra.mxu0 0.0
    %618 = vmatprep.subr.mxu0 0.0
    %619 = vmatpush1.msra.mxu0 0.0
    %620 = vmatprep.subr.mxu0 0.0
    %621 = vmatpush1.msra.mxu0 0.0
    %622 = vmatprep.subr.mxu0 0.0
    %623 = vmatpush1.msra.mxu0 0.0
    %624 = vmatprep.subr.mxu0 0.0
    %625 = vmatpush1.msra.mxu0 0.0
    %626 = vmatprep.subr.mxu0 0.0
    %627 = vmatpush1.msra.mxu0 0.0
    %628 = vmatprep.mubr.f32.mxu0 0.0
    %629 = vmatmul.mubr.f32.gmra.mrb[0].mxu0 %v112
    %v630 = vpop.f32.mrb[0].mxu0
    %v631 = vadd.f32 0.0, %v630
    %v632 = vpop.f32.mrb[0].mxu0
    %633 = vdwg.mxu0
    %s634 = scalar_lea.vmem %s2, 768
    %v635 = vld [vmem:[%s634] sm:$0xff]
    %v636 = vld [vmem:[%s634 + $0x8] sm:$0xff]
    %v637 = vld [vmem:[%s634 + $0x10] sm:$0xff]
    %v638 = vld [vmem:[%s634 + $0x18] sm:$0xff]
    %v639 = vld [vmem:[%s634 + $0x20] sm:$0xff]
    %v640 = vld [vmem:[%s634 + $0x28] sm:$0xff]
    %v641 = vld [vmem:[%s634 + $0x30] sm:$0xff]
    %v642 = vld [vmem:[%s634 + $0x38] sm:$0xff]
    %v643 = vld [vmem:[%s634 + $0x40] sm:$0xff]
    %v644 = vld [vmem:[%s634 + $0x48] sm:$0xff]
    %v645 = vld [vmem:[%s634 + $0x50] sm:$0xff]
    %v646 = vld [vmem:[%s634 + $0x58] sm:$0xff]
    %v647 = vld [vmem:[%s634 + $0x60] sm:$0xff]
    %v648 = vld [vmem:[%s634 + $0x68] sm:$0xff]
    %v649 = vld [vmem:[%s634 + $0x70] sm:$0xff]
    %v650 = vld [vmem:[%s634 + $0x78] sm:$0xff]
    %651 = vmatprep.subr.mxu0 0.0
    %652 = vmatpush1.msra.mxu0 %v635
    %653 = vmatprep.subr.mxu0 0.0
    %654 = vmatpush1.msra.mxu0 %v636
    %655 = vmatprep.subr.mxu0 0.0
    %656 = vmatpush1.msra.mxu0 %v637
    %657 = vmatprep.subr.mxu0 0.0
    %658 = vmatpush1.msra.mxu0 %v638
    %659 = vmatprep.subr.mxu0 0.0
    %660 = vmatpush1.msra.mxu0 %v639
    %661 = vmatprep.subr.mxu0 0.0
    %662 = vmatpush1.msra.mxu0 %v640
    %663 = vmatprep.subr.mxu0 0.0
    %664 = vmatpush1.msra.mxu0 %v641
    %665 = vmatprep.subr.mxu0 0.0
    %666 = vmatpush1.msra.mxu0 %v642
    %667 = vmatprep.subr.mxu0 0.0
    %668 = vmatpush1.msra.mxu0 %v643
    %669 = vmatprep.subr.mxu0 0.0
    %670 = vmatpush1.msra.mxu0 %v644
    %671 = vmatprep.subr.mxu0 0.0
    %672 = vmatpush1.msra.mxu0 %v645
    %673 = vmatprep.subr.mxu0 0.0
    %674 = vmatpush1.msra.mxu0 %v646
    %675 = vmatprep.subr.mxu0 0.0
    %676 = vmatpush1.msra.mxu0 %v647
    %677 = vmatprep.subr.mxu0 0.0
    %678 = vmatpush1.msra.mxu0 %v648
    %679 = vmatprep.subr.mxu0 0.0
    %680 = vmatpush1.msra.mxu0 %v649
    %681 = vmatprep.subr.mxu0 0.0
    %682 = vmatpush1.msra.mxu0 %v650
    %683 = vmatprep.subr.mxu0 0.0
    %684 = vmatpush1.msra.mxu0 0.0
    %685 = vmatprep.subr.mxu0 0.0
    %686 = vmatpush1.msra.mxu0 0.0
    %687 = vmatprep.subr.mxu0 0.0
    %688 = vmatpush1.msra.mxu0 0.0
    %689 = vmatprep.subr.mxu0 0.0
    %690 = vmatpush1.msra.mxu0 0.0
    %691 = vmatprep.subr.mxu0 0.0
    %692 = vmatpush1.msra.mxu0 0.0
    %693 = vmatprep.subr.mxu0 0.0
    %694 = vmatpush1.msra.mxu0 0.0
    %695 = vmatprep.subr.mxu0 0.0
    %696 = vmatpush1.msra.mxu0 0.0
    %697 = vmatprep.subr.mxu0 0.0
    %698 = vmatpush1.msra.mxu0 0.0
    %699 = vmatprep.subr.mxu0 0.0
    %700 = vmatpush1.msra.mxu0 0.0
    %701 = vmatprep.subr.mxu0 0.0
    %702 = vmatpush1.msra.mxu0 0.0
    %703 = vmatprep.subr.mxu0 0.0
    %704 = vmatpush1.msra.mxu0 0.0
    %705 = vmatprep.subr.mxu0 0.0
    %706 = vmatpush1.msra.mxu0 0.0
    %707 = vmatprep.subr.mxu0 0.0
    %708 = vmatpush1.msra.mxu0 0.0
    %709 = vmatprep.subr.mxu0 0.0
    %710 = vmatpush1.msra.mxu0 0.0
    %711 = vmatprep.subr.mxu0 0.0
    %712 = vmatpush1.msra.mxu0 0.0
    %713 = vmatprep.subr.mxu0 0.0
    %714 = vmatpush1.msra.mxu0 0.0
    %715 = vmatprep.mubr.f32.mxu0 0.0
    %716 = vmatmul.mubr.f32.gmra.mrb[0].mxu0 %v112
    %v717 = vpop.f32.mrb[0].mxu0
    %v718 = vadd.f32 0.0, %v717
    %v719 = vpop.f32.mrb[0].mxu0
    %720 = vdwg.mxu0
    %s721 = scalar_lea.vmem %s2, 896
    %v722 = vld [vmem:[%s721] sm:$0xff]
    %v723 = vld [vmem:[%s721 + $0x8] sm:$0xff]
    %v724 = vld [vmem:[%s721 + $0x10] sm:$0xff]
    %v725 = vld [vmem:[%s721 + $0x18] sm:$0xff]
    %v726 = vld [vmem:[%s721 + $0x20] sm:$0xff]
    %v727 = vld [vmem:[%s721 + $0x28] sm:$0xff]
    %v728 = vld [vmem:[%s721 + $0x30] sm:$0xff]
    %v729 = vld [vmem:[%s721 + $0x38] sm:$0xff]
    %v730 = vld [vmem:[%s721 + $0x40] sm:$0xff]
    %v731 = vld [vmem:[%s721 + $0x48] sm:$0xff]
    %v732 = vld [vmem:[%s721 + $0x50] sm:$0xff]
    %v733 = vld [vmem:[%s721 + $0x58] sm:$0xff]
    %v734 = vld [vmem:[%s721 + $0x60] sm:$0xff]
    %v735 = vld [vmem:[%s721 + $0x68] sm:$0xff]
    %v736 = vld [vmem:[%s721 + $0x70] sm:$0xff]
    %v737 = vld [vmem:[%s721 + $0x78] sm:$0xff]
    %738 = vmatprep.subr.mxu0 0.0
    %739 = vmatpush1.msra.mxu0 %v722
    %740 = vmatprep.subr.mxu0 0.0
    %741 = vmatpush1.msra.mxu0 %v723
    %742 = vmatprep.subr.mxu0 0.0
    %743 = vmatpush1.msra.mxu0 %v724
    %744 = vmatprep.subr.mxu0 0.0
    %745 = vmatpush1.msra.mxu0 %v725
    %746 = vmatprep.subr.mxu0 0.0
    %747 = vmatpush1.msra.mxu0 %v726
    %748 = vmatprep.subr.mxu0 0.0
    %749 = vmatpush1.msra.mxu0 %v727
    %750 = vmatprep.subr.mxu0 0.0
    %751 = vmatpush1.msra.mxu0 %v728
    %752 = vmatprep.subr.mxu0 0.0
    %753 = vmatpush1.msra.mxu0 %v729
    %754 = vmatprep.subr.mxu0 0.0
    %755 = vmatpush1.msra.mxu0 %v730
    %756 = vmatprep.subr.mxu0 0.0
    %757 = vmatpush1.msra.mxu0 %v731
    %758 = vmatprep.subr.mxu0 0.0
    %759 = vmatpush1.msra.mxu0 %v732
    %760 = vmatprep.subr.mxu0 0.0
    %761 = vmatpush1.msra.mxu0 %v733
    %762 = vmatprep.subr.mxu0 0.0
    %763 = vmatpush1.msra.mxu0 %v734
    %764 = vmatprep.subr.mxu0 0.0
    %765 = vmatpush1.msra.mxu0 %v735
    %766 = vmatprep.subr.mxu0 0.0
    %767 = vmatpush1.msra.mxu0 %v736
    %768 = vmatprep.subr.mxu0 0.0
    %769 = vmatpush1.msra.mxu0 %v737
    %770 = vmatprep.subr.mxu0 0.0
    %771 = vmatpush1.msra.mxu0 0.0
    %772 = vmatprep.subr.mxu0 0.0
    %773 = vmatpush1.msra.mxu0 0.0
    %774 = vmatprep.subr.mxu0 0.0
    %775 = vmatpush1.msra.mxu0 0.0
    %776 = vmatprep.subr.mxu0 0.0
    %777 = vmatpush1.msra.mxu0 0.0
    %778 = vmatprep.subr.mxu0 0.0
    %779 = vmatpush1.msra.mxu0 0.0
    %780 = vmatprep.subr.mxu0 0.0
    %781 = vmatpush1.msra.mxu0 0.0
    %782 = vmatprep.subr.mxu0 0.0
    %783 = vmatpush1.msra.mxu0 0.0
    %784 = vmatprep.subr.mxu0 0.0
    %785 = vmatpush1.msra.mxu0 0.0
    %786 = vmatprep.subr.mxu0 0.0
    %787 = vmatpush1.msra.mxu0 0.0
    %788 = vmatprep.subr.mxu0 0.0
    %789 = vmatpush1.msra.mxu0 0.0
    %790 = vmatprep.subr.mxu0 0.0
    %791 = vmatpush1.msra.mxu0 0.0
    %792 = vmatprep.subr.mxu0 0.0
    %793 = vmatpush1.msra.mxu0 0.0
    %794 = vmatprep.subr.mxu0 0.0
    %795 = vmatpush1.msra.mxu0 0.0
    %796 = vmatprep.subr.mxu0 0.0
    %797 = vmatpush1.msra.mxu0 0.0
    %798 = vmatprep.subr.mxu0 0.0
    %799 = vmatpush1.msra.mxu0 0.0
    %800 = vmatprep.subr.mxu0 0.0
    %801 = vmatpush1.msra.mxu0 0.0
    %802 = vmatprep.mubr.f32.mxu0 0.0
    %803 = vmatmul.mubr.f32.gmra.mrb[0].mxu0 %v112
    %v804 = vpop.f32.mrb[0].mxu0
    %v805 = vadd.f32 0.0, %v804
    %v806 = vpop.f32.mrb[0].mxu0
    %807 = vdwg.mxu0
    %s808 = scalar_lea.vmem %s2, 1024
    %v809 = vld [vmem:[%s808] sm:$0xff]
    %v810 = vld [vmem:[%s808 + $0x8] sm:$0xff]
    %v811 = vld [vmem:[%s808 + $0x10] sm:$0xff]
    %v812 = vld [vmem:[%s808 + $0x18] sm:$0xff]
    %v813 = vld [vmem:[%s808 + $0x20] sm:$0xff]
    %v814 = vld [vmem:[%s808 + $0x28] sm:$0xff]
    %v815 = vld [vmem:[%s808 + $0x30] sm:$0xff]
    %v816 = vld [vmem:[%s808 + $0x38] sm:$0xff]
    %v817 = vld [vmem:[%s808 + $0x40] sm:$0xff]
    %v818 = vld [vmem:[%s808 + $0x48] sm:$0xff]
    %v819 = vld [vmem:[%s808 + $0x50] sm:$0xff]
    %v820 = vld [vmem:[%s808 + $0x58] sm:$0xff]
    %v821 = vld [vmem:[%s808 + $0x60] sm:$0xff]
    %v822 = vld [vmem:[%s808 + $0x68] sm:$0xff]
    %v823 = vld [vmem:[%s808 + $0x70] sm:$0xff]
    %v824 = vld [vmem:[%s808 + $0x78] sm:$0xff]
    %825 = vmatprep.subr.mxu0 0.0
    %826 = vmatpush1.msra.mxu0 %v809
    %827 = vmatprep.subr.mxu0 0.0
    %828 = vmatpush1.msra.mxu0 %v810
    %829 = vmatprep.subr.mxu0 0.0
    %830 = vmatpush1.msra.mxu0 %v811
    %831 = vmatprep.subr.mxu0 0.0
    %832 = vmatpush1.msra.mxu0 %v812
    %833 = vmatprep.subr.mxu0 0.0
    %834 = vmatpush1.msra.mxu0 %v813
    %835 = vmatprep.subr.mxu0 0.0
    %836 = vmatpush1.msra.mxu0 %v814
    %837 = vmatprep.subr.mxu0 0.0
    %838 = vmatpush1.msra.mxu0 %v815
    %839 = vmatprep.subr.mxu0 0.0
    %840 = vmatpush1.msra.mxu0 %v816
    %841 = vmatprep.subr.mxu0 0.0
    %842 = vmatpush1.msra.mxu0 %v817
    %843 = vmatprep.subr.mxu0 0.0
    %844 = vmatpush1.msra.mxu0 %v818
    %845 = vmatprep.subr.mxu0 0.0
    %846 = vmatpush1.msra.mxu0 %v819
    %847 = vmatprep.subr.mxu0 0.0
    %848 = vmatpush1.msra.mxu0 %v820
    %849 = vmatprep.subr.mxu0 0.0
    %850 = vmatpush1.msra.mxu0 %v821
    %851 = vmatprep.subr.mxu0 0.0
    %852 = vmatpush1.msra.mxu0 %v822
    %853 = vmatprep.subr.mxu0 0.0
    %854 = vmatpush1.msra.mxu0 %v823
    %855 = vmatprep.subr.mxu0 0.0
    %856 = vmatpush1.msra.mxu0 %v824
    %857 = vmatprep.subr.mxu0 0.0
    %858 = vmatpush1.msra.mxu0 0.0
    %859 = vmatprep.subr.mxu0 0.0
    %860 = vmatpush1.msra.mxu0 0.0
    %861 = vmatprep.subr.mxu0 0.0
    %862 = vmatpush1.msra.mxu0 0.0
    %863 = vmatprep.subr.mxu0 0.0
    %864 = vmatpush1.msra.mxu0 0.0
    %865 = vmatprep.subr.mxu0 0.0
    %866 = vmatpush1.msra.mxu0 0.0
    %867 = vmatprep.subr.mxu0 0.0
    %868 = vmatpush1.msra.mxu0 0.0
    %869 = vmatprep.subr.mxu0 0.0
    %870 = vmatpush1.msra.mxu0 0.0
    %871 = vmatprep.subr.mxu0 0.0
    %872 = vmatpush1.msra.mxu0 0.0
    %873 = vmatprep.subr.mxu0 0.0
    %874 = vmatpush1.msra.mxu0 0.0
    %875 = vmatprep.subr.mxu0 0.0
    %876 = vmatpush1.msra.mxu0 0.0
    %877 = vmatprep.subr.mxu0 0.0
    %878 = vmatpush1.msra.mxu0 0.0
    %879 = vmatprep.subr.mxu0 0.0
    %880 = vmatpush1.msra.mxu0 0.0
    %881 = vmatprep.subr.mxu0 0.0
    %882 = vmatpush1.msra.mxu0 0.0
    %883 = vmatprep.subr.mxu0 0.0
    %884 = vmatpush1.msra.mxu0 0.0
    %885 = vmatprep.subr.mxu0 0.0
    %886 = vmatpush1.msra.mxu0 0.0
    %887 = vmatprep.subr.mxu0 0.0
    %888 = vmatpush1.msra.mxu0 0.0
    %889 = vmatprep.mubr.f32.mxu0 0.0
    %890 = vmatmul.mubr.f32.gmra.mrb[0].mxu0 %v112
    %v891 = vpop.f32.mrb[0].mxu0
    %v892 = vadd.f32 0.0, %v891
    %v893 = vpop.f32.mrb[0].mxu0
    %894 = vdwg.mxu0
    %s895 = scalar_lea.vmem %s2, 1152
    %v896 = vld [vmem:[%s895] sm:$0xff]
    %v897 = vld [vmem:[%s895 + $0x8] sm:$0xff]
    %v898 = vld [vmem:[%s895 + $0x10] sm:$0xff]
    %v899 = vld [vmem:[%s895 + $0x18] sm:$0xff]
    %v900 = vld [vmem:[%s895 + $0x20] sm:$0xff]
    %v901 = vld [vmem:[%s895 + $0x28] sm:$0xff]
    %v902 = vld [vmem:[%s895 + $0x30] sm:$0xff]
    %v903 = vld [vmem:[%s895 + $0x38] sm:$0xff]
    %v904 = vld [vmem:[%s895 + $0x40] sm:$0xff]
    %v905 = vld [vmem:[%s895 + $0x48] sm:$0xff]
    %v906 = vld [vmem:[%s895 + $0x50] sm:$0xff]
    %v907 = vld [vmem:[%s895 + $0x58] sm:$0xff]
    %v908 = vld [vmem:[%s895 + $0x60] sm:$0xff]
    %v909 = vld [vmem:[%s895 + $0x68] sm:$0xff]
    %v910 = vld [vmem:[%s895 + $0x70] sm:$0xff]
    %v911 = vld [vmem:[%s895 + $0x78] sm:$0xff]
    %912 = vmatprep.subr.mxu0 0.0
    %913 = vmatpush1.msra.mxu0 %v896
    %914 = vmatprep.subr.mxu0 0.0
    %915 = vmatpush1.msra.mxu0 %v897
    %916 = vmatprep.subr.mxu0 0.0
    %917 = vmatpush1.msra.mxu0 %v898
    %918 = vmatprep.subr.mxu0 0.0
    %919 = vmatpush1.msra.mxu0 %v899
    %920 = vmatprep.subr.mxu0 0.0
    %921 = vmatpush1.msra.mxu0 %v900
    %922 = vmatprep.subr.mxu0 0.0
    %923 = vmatpush1.msra.mxu0 %v901
    %924 = vmatprep.subr.mxu0 0.0
    %925 = vmatpush1.msra.mxu0 %v902
    %926 = vmatprep.subr.mxu0 0.0
    %927 = vmatpush1.msra.mxu0 %v903
    %928 = vmatprep.subr.mxu0 0.0
    %929 = vmatpush1.msra.mxu0 %v904
    %930 = vmatprep.subr.mxu0 0.0
    %931 = vmatpush1.msra.mxu0 %v905
    %932 = vmatprep.subr.mxu0 0.0
    %933 = vmatpush1.msra.mxu0 %v906
    %934 = vmatprep.subr.mxu0 0.0
    %935 = vmatpush1.msra.mxu0 %v907
    %936 = vmatprep.subr.mxu0 0.0
    %937 = vmatpush1.msra.mxu0 %v908
    %938 = vmatprep.subr.mxu0 0.0
    %939 = vmatpush1.msra.mxu0 %v909
    %940 = vmatprep.subr.mxu0 0.0
    %941 = vmatpush1.msra.mxu0 %v910
    %942 = vmatprep.subr.mxu0 0.0
    %943 = vmatpush1.msra.mxu0 %v911
    %944 = vmatprep.subr.mxu0 0.0
    %945 = vmatpush1.msra.mxu0 0.0
    %946 = vmatprep.subr.mxu0 0.0
    %947 = vmatpush1.msra.mxu0 0.0
    %948 = vmatprep.subr.mxu0 0.0
    %949 = vmatpush1.msra.mxu0 0.0
    %950 = vmatprep.subr.mxu0 0.0
    %951 = vmatpush1.msra.mxu0 0.0
    %952 = vmatprep.subr.mxu0 0.0
    %953 = vmatpush1.msra.mxu0 0.0
    %954 = vmatprep.subr.mxu0 0.0
    %955 = vmatpush1.msra.mxu0 0.0
    %956 = vmatprep.subr.mxu0 0.0
    %957 = vmatpush1.msra.mxu0 0.0
    %958 = vmatprep.subr.mxu0 0.0
    %959 = vmatpush1.msra.mxu0 0.0
    %960 = vmatprep.subr.mxu0 0.0
    %961 = vmatpush1.msra.mxu0 0.0
    %962 = vmatprep.subr.mxu0 0.0
    %963 = vmatpush1.msra.mxu0 0.0
    %964 = vmatprep.subr.mxu0 0.0
    %965 = vmatpush1.msra.mxu0 0.0
    %966 = vmatprep.subr.mxu0 0.0
    %967 = vmatpush1.msra.mxu0 0.0
    %968 = vmatprep.subr.mxu0 0.0
    %969 = vmatpush1.msra.mxu0 0.0
    %970 = vmatprep.subr.mxu0 0.0
    %971 = vmatpush1.msra.mxu0 0.0
    %972 = vmatprep.subr.mxu0 0.0
    %973 = vmatpush1.msra.mxu0 0.0
    %974 = vmatprep.subr.mxu0 0.0
    %975 = vmatpush1.msra.mxu0 0.0
    %976 = vmatprep.mubr.f32.mxu0 0.0
    %977 = vmatmul.mubr.f32.gmra.mrb[0].mxu0 %v112
    %v978 = vpop.f32.mrb[0].mxu0
    %v979 = vadd.f32 0.0, %v978
    %v980 = vpop.f32.mrb[0].mxu0
    %981 = vdwg.mxu0
    %s982 = scalar_lea.vmem %s2, 1280
    %v983 = vld [vmem:[%s982] sm:$0xff]
    %v984 = vld [vmem:[%s982 + $0x8] sm:$0xff]
    %v985 = vld [vmem:[%s982 + $0x10] sm:$0xff]
    %v986 = vld [vmem:[%s982 + $0x18] sm:$0xff]
    %v987 = vld [vmem:[%s982 + $0x20] sm:$0xff]
    %v988 = vld [vmem:[%s982 + $0x28] sm:$0xff]
    %v989 = vld [vmem:[%s982 + $0x30] sm:$0xff]
    %v990 = vld [vmem:[%s982 + $0x38] sm:$0xff]
    %v991 = vld [vmem:[%s982 + $0x40] sm:$0xff]
    %v992 = vld [vmem:[%s982 + $0x48] sm:$0xff]
    %v993 = vld [vmem:[%s982 + $0x50] sm:$0xff]
    %v994 = vld [vmem:[%s982 + $0x58] sm:$0xff]
    %v995 = vld [vmem:[%s982 + $0x60] sm:$0xff]
    %v996 = vld [vmem:[%s982 + $0x68] sm:$0xff]
    %v997 = vld [vmem:[%s982 + $0x70] sm:$0xff]
    %v998 = vld [vmem:[%s982 + $0x78] sm:$0xff]
    %999 = vmatprep.subr.mxu0 0.0
    %1000 = vmatpush1.msra.mxu0 %v983
    %1001 = vmatprep.subr.mxu0 0.0
    %1002 = vmatpush1.msra.mxu0 %v984
    %1003 = vmatprep.subr.mxu0 0.0
    %1004 = vmatpush1.msra.mxu0 %v985
    %1005 = vmatprep.subr.mxu0 0.0
    %1006 = vmatpush1.msra.mxu0 %v986
    %1007 = vmatprep.subr.mxu0 0.0
    %1008 = vmatpush1.msra.mxu0 %v987
    %1009 = vmatprep.subr.mxu0 0.0
    %1010 = vmatpush1.msra.mxu0 %v988
    %1011 = vmatprep.subr.mxu0 0.0
    %1012 = vmatpush1.msra.mxu0 %v989
    %1013 = vmatprep.subr.mxu0 0.0
    %1014 = vmatpush1.msra.mxu0 %v990
    %1015 = vmatprep.subr.mxu0 0.0
    %1016 = vmatpush1.msra.mxu0 %v991
    %1017 = vmatprep.subr.mxu0 0.0
    %1018 = vmatpush1.msra.mxu0 %v992
    %1019 = vmatprep.subr.mxu0 0.0
    %1020 = vmatpush1.msra.mxu0 %v993
    %1021 = vmatprep.subr.mxu0 0.0
    %1022 = vmatpush1.msra.mxu0 %v994
    %1023 = vmatprep.subr.mxu0 0.0
    %1024 = vmatpush1.msra.mxu0 %v995
    %1025 = vmatprep.subr.mxu0 0.0
    %1026 = vmatpush1.msra.mxu0 %v996
    %1027 = vmatprep.subr.mxu0 0.0
    %1028 = vmatpush1.msra.mxu0 %v997
    %1029 = vmatprep.subr.mxu0 0.0
    %1030 = vmatpush1.msra.mxu0 %v998
    %1031 = vmatprep.subr.mxu0 0.0
    %1032 = vmatpush1.msra.mxu0 0.0
    %1033 = vmatprep.subr.mxu0 0.0
    %1034 = vmatpush1.msra.mxu0 0.0
    %1035 = vmatprep.subr.mxu0 0.0
    %1036 = vmatpush1.msra.mxu0 0.0
    %1037 = vmatprep.subr.mxu0 0.0
    %1038 = vmatpush1.msra.mxu0 0.0
    %1039 = vmatprep.subr.mxu0 0.0
    %1040 = vmatpush1.msra.mxu0 0.0
    %1041 = vmatprep.subr.mxu0 0.0
    %1042 = vmatpush1.msra.mxu0 0.0
    %1043 = vmatprep.subr.mxu0 0.0
    %1044 = vmatpush1.msra.mxu0 0.0
    %1045 = vmatprep.subr.mxu0 0.0
    %1046 = vmatpush1.msra.mxu0 0.0
    %1047 = vmatprep.subr.mxu0 0.0
    %1048 = vmatpush1.msra.mxu0 0.0
    %1049 = vmatprep.subr.mxu0 0.0
    %1050 = vmatpush1.msra.mxu0 0.0
    %1051 = vmatprep.subr.mxu0 0.0
    %1052 = vmatpush1.msra.mxu0 0.0
    %1053 = vmatprep.subr.mxu0 0.0
    %1054 = vmatpush1.msra.mxu0 0.0
    %1055 = vmatprep.subr.mxu0 0.0
    %1056 = vmatpush1.msra.mxu0 0.0
    %1057 = vmatprep.subr.mxu0 0.0
    %1058 = vmatpush1.msra.mxu0 0.0
    %1059 = vmatprep.subr.mxu0 0.0
    %1060 = vmatpush1.msra.mxu0 0.0
    %1061 = vmatprep.subr.mxu0 0.0
    %1062 = vmatpush1.msra.mxu0 0.0
    %1063 = vmatprep.mubr.f32.mxu0 0.0
    %1064 = vmatmul.mubr.f32.gmra.mrb[0].mxu0 %v112
    %v1065 = vpop.f32.mrb[0].mxu0
    %v1066 = vadd.f32 0.0, %v1065
    %v1067 = vpop.f32.mrb[0].mxu0
    %1068 = vdwg.mxu0
    %s1069 = scalar_lea.vmem %s2, 1408
    %v1070 = vld [vmem:[%s1069] sm:$0xff]
    %v1071 = vld [vmem:[%s1069 + $0x8] sm:$0xff]
    %v1072 = vld [vmem:[%s1069 + $0x10] sm:$0xff]
    %v1073 = vld [vmem:[%s1069 + $0x18] sm:$0xff]
    %v1074 = vld [vmem:[%s1069 + $0x20] sm:$0xff]
    %v1075 = vld [vmem:[%s1069 + $0x28] sm:$0xff]
    %v1076 = vld [vmem:[%s1069 + $0x30] sm:$0xff]
    %v1077 = vld [vmem:[%s1069 + $0x38] sm:$0xff]
    %v1078 = vld [vmem:[%s1069 + $0x40] sm:$0xff]
    %v1079 = vld [vmem:[%s1069 + $0x48] sm:$0xff]
    %v1080 = vld [vmem:[%s1069 + $0x50] sm:$0xff]
    %v1081 = vld [vmem:[%s1069 + $0x58] sm:$0xff]
    %v1082 = vld [vmem:[%s1069 + $0x60] sm:$0xff]
    %v1083 = vld [vmem:[%s1069 + $0x68] sm:$0xff]
    %v1084 = vld [vmem:[%s1069 + $0x70] sm:$0xff]
    %v1085 = vld [vmem:[%s1069 + $0x78] sm:$0xff]
    %1086 = vmatprep.subr.mxu0 0.0
    %1087 = vmatpush1.msra.mxu0 %v1070
    %1088 = vmatprep.subr.mxu0 0.0
    %1089 = vmatpush1.msra.mxu0 %v1071
    %1090 = vmatprep.subr.mxu0 0.0
    %1091 = vmatpush1.msra.mxu0 %v1072
    %1092 = vmatprep.subr.mxu0 0.0
    %1093 = vmatpush1.msra.mxu0 %v1073
    %1094 = vmatprep.subr.mxu0 0.0
    %1095 = vmatpush1.msra.mxu0 %v1074
    %1096 = vmatprep.subr.mxu0 0.0
    %1097 = vmatpush1.msra.mxu0 %v1075
    %1098 = vmatprep.subr.mxu0 0.0
    %1099 = vmatpush1.msra.mxu0 %v1076
    %1100 = vmatprep.subr.mxu0 0.0
    %1101 = vmatpush1.msra.mxu0 %v1077
    %1102 = vmatprep.subr.mxu0 0.0
    %1103 = vmatpush1.msra.mxu0 %v1078
    %1104 = vmatprep.subr.mxu0 0.0
    %1105 = vmatpush1.msra.mxu0 %v1079
    %1106 = vmatprep.subr.mxu0 0.0
    %1107 = vmatpush1.msra.mxu0 %v1080
    %1108 = vmatprep.subr.mxu0 0.0
    %1109 = vmatpush1.msra.mxu0 %v1081
    %1110 = vmatprep.subr.mxu0 0.0
    %1111 = vmatpush1.msra.mxu0 %v1082
    %1112 = vmatprep.subr.mxu0 0.0
    %1113 = vmatpush1.msra.mxu0 %v1083
    %1114 = vmatprep.subr.mxu0 0.0
    %1115 = vmatpush1.msra.mxu0 %v1084
    %1116 = vmatprep.subr.mxu0 0.0
    %1117 = vmatpush1.msra.mxu0 %v1085
    %1118 = vmatprep.subr.mxu0 0.0
    %1119 = vmatpush1.msra.mxu0 0.0
    %1120 = vmatprep.subr.mxu0 0.0
    %1121 = vmatpush1.msra.mxu0 0.0
    %1122 = vmatprep.subr.mxu0 0.0
    %1123 = vmatpush1.msra.mxu0 0.0
    %1124 = vmatprep.subr.mxu0 0.0
    %1125 = vmatpush1.msra.mxu0 0.0
    %1126 = vmatprep.subr.mxu0 0.0
    %1127 = vmatpush1.msra.mxu0 0.0
    %1128 = vmatprep.subr.mxu0 0.0
    %1129 = vmatpush1.msra.mxu0 0.0
    %1130 = vmatprep.subr.mxu0 0.0
    %1131 = vmatpush1.msra.mxu0 0.0
    %1132 = vmatprep.subr.mxu0 0.0
    %1133 = vmatpush1.msra.mxu0 0.0
    %1134 = vmatprep.subr.mxu0 0.0
    %1135 = vmatpush1.msra.mxu0 0.0
    %1136 = vmatprep.subr.mxu0 0.0
    %1137 = vmatpush1.msra.mxu0 0.0
    %1138 = vmatprep.subr.mxu0 0.0
    %1139 = vmatpush1.msra.mxu0 0.0
    %1140 = vmatprep.subr.mxu0 0.0
    %1141 = vmatpush1.msra.mxu0 0.0
    %1142 = vmatprep.subr.mxu0 0.0
    %1143 = vmatpush1.msra.mxu0 0.0
    %1144 = vmatprep.subr.mxu0 0.0
    %1145 = vmatpush1.msra.mxu0 0.0
    %1146 = vmatprep.subr.mxu0 0.0
    %1147 = vmatpush1.msra.mxu0 0.0
    %1148 = vmatprep.subr.mxu0 0.0
    %1149 = vmatpush1.msra.mxu0 0.0
    %1150 = vmatprep.mubr.f32.mxu0 0.0
    %1151 = vmatmul.mubr.f32.gmra.mrb[0].mxu0 %v112
    %v1152 = vpop.f32.mrb[0].mxu0
    %v1153 = vadd.f32 0.0, %v1152
    %v1154 = vpop.f32.mrb[0].mxu0
    %1155 = vdwg.mxu0
    %s1156 = scalar_lea.vmem %s2, 1536
    %v1157 = vld [vmem:[%s1156] sm:$0xff]
    %v1158 = vld [vmem:[%s1156 + $0x8] sm:$0xff]
    %v1159 = vld [vmem:[%s1156 + $0x10] sm:$0xff]
    %v1160 = vld [vmem:[%s1156 + $0x18] sm:$0xff]
    %v1161 = vld [vmem:[%s1156 + $0x20] sm:$0xff]
    %v1162 = vld [vmem:[%s1156 + $0x28] sm:$0xff]
    %v1163 = vld [vmem:[%s1156 + $0x30] sm:$0xff]
    %v1164 = vld [vmem:[%s1156 + $0x38] sm:$0xff]
    %v1165 = vld [vmem:[%s1156 + $0x40] sm:$0xff]
    %v1166 = vld [vmem:[%s1156 + $0x48] sm:$0xff]
    %v1167 = vld [vmem:[%s1156 + $0x50] sm:$0xff]
    %v1168 = vld [vmem:[%s1156 + $0x58] sm:$0xff]
    %v1169 = vld [vmem:[%s1156 + $0x60] sm:$0xff]
    %v1170 = vld [vmem:[%s1156 + $0x68] sm:$0xff]
    %v1171 = vld [vmem:[%s1156 + $0x70] sm:$0xff]
    %v1172 = vld [vmem:[%s1156 + $0x78] sm:$0xff]
    %1173 = vmatprep.subr.mxu0 0.0
    %1174 = vmatpush1.msra.mxu0 %v1157
    %1175 = vmatprep.subr.mxu0 0.0
    %1176 = vmatpush1.msra.mxu0 %v1158
    %1177 = vmatprep.subr.mxu0 0.0
    %1178 = vmatpush1.msra.mxu0 %v1159
    %1179 = vmatprep.subr.mxu0 0.0
    %1180 = vmatpush1.msra.mxu0 %v1160
    %1181 = vmatprep.subr.mxu0 0.0
    %1182 = vmatpush1.msra.mxu0 %v1161
    %1183 = vmatprep.subr.mxu0 0.0
    %1184 = vmatpush1.msra.mxu0 %v1162
    %1185 = vmatprep.subr.mxu0 0.0
    %1186 = vmatpush1.msra.mxu0 %v1163
    %1187 = vmatprep.subr.mxu0 0.0
    %1188 = vmatpush1.msra.mxu0 %v1164
    %1189 = vmatprep.subr.mxu0 0.0
    %1190 = vmatpush1.msra.mxu0 %v1165
    %1191 = vmatprep.subr.mxu0 0.0
    %1192 = vmatpush1.msra.mxu0 %v1166
    %1193 = vmatprep.subr.mxu0 0.0
    %1194 = vmatpush1.msra.mxu0 %v1167
    %1195 = vmatprep.subr.mxu0 0.0
    %1196 = vmatpush1.msra.mxu0 %v1168
    %1197 = vmatprep.subr.mxu0 0.0
    %1198 = vmatpush1.msra.mxu0 %v1169
    %1199 = vmatprep.subr.mxu0 0.0
    %1200 = vmatpush1.msra.mxu0 %v1170
    %1201 = vmatprep.subr.mxu0 0.0
    %1202 = vmatpush1.msra.mxu0 %v1171
    %1203 = vmatprep.subr.mxu0 0.0
    %1204 = vmatpush1.msra.mxu0 %v1172
    %1205 = vmatprep.subr.mxu0 0.0
    %1206 = vmatpush1.msra.mxu0 0.0
    %1207 = vmatprep.subr.mxu0 0.0
    %1208 = vmatpush1.msra.mxu0 0.0
    %1209 = vmatprep.subr.mxu0 0.0
    %1210 = vmatpush1.msra.mxu0 0.0
    %1211 = vmatprep.subr.mxu0 0.0
    %1212 = vmatpush1.msra.mxu0 0.0
    %1213 = vmatprep.subr.mxu0 0.0
    %1214 = vmatpush1.msra.mxu0 0.0
    %1215 = vmatprep.subr.mxu0 0.0
    %1216 = vmatpush1.msra.mxu0 0.0
    %1217 = vmatprep.subr.mxu0 0.0
    %1218 = vmatpush1.msra.mxu0 0.0
    %1219 = vmatprep.subr.mxu0 0.0
    %1220 = vmatpush1.msra.mxu0 0.0
    %1221 = vmatprep.subr.mxu0 0.0
    %1222 = vmatpush1.msra.mxu0 0.0
    %1223 = vmatprep.subr.mxu0 0.0
    %1224 = vmatpush1.msra.mxu0 0.0
    %1225 = vmatprep.subr.mxu0 0.0
    %1226 = vmatpush1.msra.mxu0 0.0
    %1227 = vmatprep.subr.mxu0 0.0
    %1228 = vmatpush1.msra.mxu0 0.0
    %1229 = vmatprep.subr.mxu0 0.0
    %1230 = vmatpush1.msra.mxu0 0.0
    %1231 = vmatprep.subr.mxu0 0.0
    %1232 = vmatpush1.msra.mxu0 0.0
    %1233 = vmatprep.subr.mxu0 0.0
    %1234 = vmatpush1.msra.mxu0 0.0
    %1235 = vmatprep.subr.mxu0 0.0
    %1236 = vmatpush1.msra.mxu0 0.0
    %1237 = vmatprep.mubr.f32.mxu0 0.0
    %1238 = vmatmul.mubr.f32.gmra.mrb[0].mxu0 %v112
    %v1239 = vpop.f32.mrb[0].mxu0
    %v1240 = vadd.f32 0.0, %v1239
    %v1241 = vpop.f32.mrb[0].mxu0
    %1242 = vdwg.mxu0
    %s1243 = scalar_lea.vmem %s2, 1664
    %v1244 = vld [vmem:[%s1243] sm:$0xff]
    %v1245 = vld [vmem:[%s1243 + $0x8] sm:$0xff]
    %v1246 = vld [vmem:[%s1243 + $0x10] sm:$0xff]
    %v1247 = vld [vmem:[%s1243 + $0x18] sm:$0xff]
    %v1248 = vld [vmem:[%s1243 + $0x20] sm:$0xff]
    %v1249 = vld [vmem:[%s1243 + $0x28] sm:$0xff]
    %v1250 = vld [vmem:[%s1243 + $0x30] sm:$0xff]
    %v1251 = vld [vmem:[%s1243 + $0x38] sm:$0xff]
    %v1252 = vld [vmem:[%s1243 + $0x40] sm:$0xff]
    %v1253 = vld [vmem:[%s1243 + $0x48] sm:$0xff]
    %v1254 = vld [vmem:[%s1243 + $0x50] sm:$0xff]
    %v1255 = vld [vmem:[%s1243 + $0x58] sm:$0xff]
    %v1256 = vld [vmem:[%s1243 + $0x60] sm:$0xff]
    %v1257 = vld [vmem:[%s1243 + $0x68] sm:$0xff]
    %v1258 = vld [vmem:[%s1243 + $0x70] sm:$0xff]
    %v1259 = vld [vmem:[%s1243 + $0x78] sm:$0xff]
    %1260 = vmatprep.subr.mxu0 0.0
    %1261 = vmatpush1.msra.mxu0 %v1244
    %1262 = vmatprep.subr.mxu0 0.0
    %1263 = vmatpush1.msra.mxu0 %v1245
    %1264 = vmatprep.subr.mxu0 0.0
    %1265 = vmatpush1.msra.mxu0 %v1246
    %1266 = vmatprep.subr.mxu0 0.0
    %1267 = vmatpush1.msra.mxu0 %v1247
    %1268 = vmatprep.subr.mxu0 0.0
    %1269 = vmatpush1.msra.mxu0 %v1248
    %1270 = vmatprep.subr.mxu0 0.0
    %1271 = vmatpush1.msra.mxu0 %v1249
    %1272 = vmatprep.subr.mxu0 0.0
    %1273 = vmatpush1.msra.mxu0 %v1250
    %1274 = vmatprep.subr.mxu0 0.0
    %1275 = vmatpush1.msra.mxu0 %v1251
    %1276 = vmatprep.subr.mxu0 0.0
    %1277 = vmatpush1.msra.mxu0 %v1252
    %1278 = vmatprep.subr.mxu0 0.0
    %1279 = vmatpush1.msra.mxu0 %v1253
    %1280 = vmatprep.subr.mxu0 0.0
    %1281 = vmatpush1.msra.mxu0 %v1254
    %1282 = vmatprep.subr.mxu0 0.0
    %1283 = vmatpush1.msra.mxu0 %v1255
    %1284 = vmatprep.subr.mxu0 0.0
    %1285 = vmatpush1.msra.mxu0 %v1256
    %1286 = vmatprep.subr.mxu0 0.0
    %1287 = vmatpush1.msra.mxu0 %v1257
    %1288 = vmatprep.subr.mxu0 0.0
    %1289 = vmatpush1.msra.mxu0 %v1258
    %1290 = vmatprep.subr.mxu0 0.0
    %1291 = vmatpush1.msra.mxu0 %v1259
    %1292 = vmatprep.subr.mxu0 0.0
    %1293 = vmatpush1.msra.mxu0 0.0
    %1294 = vmatprep.subr.mxu0 0.0
    %1295 = vmatpush1.msra.mxu0 0.0
    %1296 = vmatprep.subr.mxu0 0.0
    %1297 = vmatpush1.msra.mxu0 0.0
    %1298 = vmatprep.subr.mxu0 0.0
    %1299 = vmatpush1.msra.mxu0 0.0
    %1300 = vmatprep.subr.mxu0 0.0
    %1301 = vmatpush1.msra.mxu0 0.0
    %1302 = vmatprep.subr.mxu0 0.0
    %1303 = vmatpush1.msra.mxu0 0.0
    %1304 = vmatprep.subr.mxu0 0.0
    %1305 = vmatpush1.msra.mxu0 0.0
    %1306 = vmatprep.subr.mxu0 0.0
    %1307 = vmatpush1.msra.mxu0 0.0
    %1308 = vmatprep.subr.mxu0 0.0
    %1309 = vmatpush1.msra.mxu0 0.0
    %1310 = vmatprep.subr.mxu0 0.0
    %1311 = vmatpush1.msra.mxu0 0.0
    %1312 = vmatprep.subr.mxu0 0.0
    %1313 = vmatpush1.msra.mxu0 0.0
    %1314 = vmatprep.subr.mxu0 0.0
    %1315 = vmatpush1.msra.mxu0 0.0
    %1316 = vmatprep.subr.mxu0 0.0
    %1317 = vmatpush1.msra.mxu0 0.0
    %1318 = vmatprep.subr.mxu0 0.0
    %1319 = vmatpush1.msra.mxu0 0.0
    %1320 = vmatprep.subr.mxu0 0.0
    %1321 = vmatpush1.msra.mxu0 0.0
    %1322 = vmatprep.subr.mxu0 0.0
    %1323 = vmatpush1.msra.mxu0 0.0
    %1324 = vmatprep.mubr.f32.mxu0 0.0
    %1325 = vmatmul.mubr.f32.gmra.mrb[0].mxu0 %v112
    %v1326 = vpop.f32.mrb[0].mxu0
    %v1327 = vadd.f32 0.0, %v1326
    %v1328 = vpop.f32.mrb[0].mxu0
    %1329 = vdwg.mxu0
    %s1330 = scalar_lea.vmem %s2, 1792
    %v1331 = vld [vmem:[%s1330] sm:$0xff]
    %v1332 = vld [vmem:[%s1330 + $0x8] sm:$0xff]
    %v1333 = vld [vmem:[%s1330 + $0x10] sm:$0xff]
    %v1334 = vld [vmem:[%s1330 + $0x18] sm:$0xff]
    %v1335 = vld [vmem:[%s1330 + $0x20] sm:$0xff]
    %v1336 = vld [vmem:[%s1330 + $0x28] sm:$0xff]
    %v1337 = vld [vmem:[%s1330 + $0x30] sm:$0xff]
    %v1338 = vld [vmem:[%s1330 + $0x38] sm:$0xff]
    %v1339 = vld [vmem:[%s1330 + $0x40] sm:$0xff]
    %v1340 = vld [vmem:[%s1330 + $0x48] sm:$0xff]
    %v1341 = vld [vmem:[%s1330 + $0x50] sm:$0xff]
    %v1342 = vld [vmem:[%s1330 + $0x58] sm:$0xff]
    %v1343 = vld [vmem:[%s1330 + $0x60] sm:$0xff]
    %v1344 = vld [vmem:[%s1330 + $0x68] sm:$0xff]
    %v1345 = vld [vmem:[%s1330 + $0x70] sm:$0xff]
    %v1346 = vld [vmem:[%s1330 + $0x78] sm:$0xff]
    %1347 = vmatprep.subr.mxu0 0.0
    %1348 = vmatpush1.msra.mxu0 %v1331
    %1349 = vmatprep.subr.mxu0 0.0
    %1350 = vmatpush1.msra.mxu0 %v1332
    %1351 = vmatprep.subr.mxu0 0.0
    %1352 = vmatpush1.msra.mxu0 %v1333
    %1353 = vmatprep.subr.mxu0 0.0
    %1354 = vmatpush1.msra.mxu0 %v1334
    %1355 = vmatprep.subr.mxu0 0.0
    %1356 = vmatpush1.msra.mxu0 %v1335
    %1357 = vmatprep.subr.mxu0 0.0
    %1358 = vmatpush1.msra.mxu0 %v1336
    %1359 = vmatprep.subr.mxu0 0.0
    %1360 = vmatpush1.msra.mxu0 %v1337
    %1361 = vmatprep.subr.mxu0 0.0
    %1362 = vmatpush1.msra.mxu0 %v1338
    %1363 = vmatprep.subr.mxu0 0.0
    %1364 = vmatpush1.msra.mxu0 %v1339
    %1365 = vmatprep.subr.mxu0 0.0
    %1366 = vmatpush1.msra.mxu0 %v1340
    %1367 = vmatprep.subr.mxu0 0.0
    %1368 = vmatpush1.msra.mxu0 %v1341
    %1369 = vmatprep.subr.mxu0 0.0
    %1370 = vmatpush1.msra.mxu0 %v1342
    %1371 = vmatprep.subr.mxu0 0.0
    %1372 = vmatpush1.msra.mxu0 %v1343
    %1373 = vmatprep.subr.mxu0 0.0
    %1374 = vmatpush1.msra.mxu0 %v1344
    %1375 = vmatprep.subr.mxu0 0.0
    %1376 = vmatpush1.msra.mxu0 %v1345
    %1377 = vmatprep.subr.mxu0 0.0
    %1378 = vmatpush1.msra.mxu0 %v1346
    %1379 = vmatprep.subr.mxu0 0.0
    %1380 = vmatpush1.msra.mxu0 0.0
    %1381 = vmatprep.subr.mxu0 0.0
    %1382 = vmatpush1.msra.mxu0 0.0
    %1383 = vmatprep.subr.mxu0 0.0
    %1384 = vmatpush1.msra.mxu0 0.0
    %1385 = vmatprep.subr.mxu0 0.0
    %1386 = vmatpush1.msra.mxu0 0.0
    %1387 = vmatprep.subr.mxu0 0.0
    %1388 = vmatpush1.msra.mxu0 0.0
    %1389 = vmatprep.subr.mxu0 0.0
    %1390 = vmatpush1.msra.mxu0 0.0
    %1391 = vmatprep.subr.mxu0 0.0
    %1392 = vmatpush1.msra.mxu0 0.0
    %1393 = vmatprep.subr.mxu0 0.0
    %1394 = vmatpush1.msra.mxu0 0.0
    %1395 = vmatprep.subr.mxu0 0.0
    %1396 = vmatpush1.msra.mxu0 0.0
    %1397 = vmatprep.subr.mxu0 0.0
    %1398 = vmatpush1.msra.mxu0 0.0
    %1399 = vmatprep.subr.mxu0 0.0
    %1400 = vmatpush1.msra.mxu0 0.0
    %1401 = vmatprep.subr.mxu0 0.0
    %1402 = vmatpush1.msra.mxu0 0.0
    %1403 = vmatprep.subr.mxu0 0.0
    %1404 = vmatpush1.msra.mxu0 0.0
    %1405 = vmatprep.subr.mxu0 0.0
    %1406 = vmatpush1.msra.mxu0 0.0
    %1407 = vmatprep.subr.mxu0 0.0
    %1408 = vmatpush1.msra.mxu0 0.0
    %1409 = vmatprep.subr.mxu0 0.0
    %1410 = vmatpush1.msra.mxu0 0.0
    %1411 = vmatprep.mubr.f32.mxu0 0.0
    %1412 = vmatmul.mubr.f32.gmra.mrb[0].mxu0 %v112
    %v1413 = vpop.f32.mrb[0].mxu0
    %v1414 = vadd.f32 0.0, %v1413
    %v1415 = vpop.f32.mrb[0].mxu0
    %1416 = vdwg.mxu0
    %s1417 = scalar_lea.vmem %s2, 1920
    %v1418 = vld [vmem:[%s1417] sm:$0xff]
    %v1419 = vld [vmem:[%s1417 + $0x8] sm:$0xff]
    %v1420 = vld [vmem:[%s1417 + $0x10] sm:$0xff]
    %v1421 = vld [vmem:[%s1417 + $0x18] sm:$0xff]
    %v1422 = vld [vmem:[%s1417 + $0x20] sm:$0xff]
    %v1423 = vld [vmem:[%s1417 + $0x28] sm:$0xff]
    %v1424 = vld [vmem:[%s1417 + $0x30] sm:$0xff]
    %v1425 = vld [vmem:[%s1417 + $0x38] sm:$0xff]
    %v1426 = vld [vmem:[%s1417 + $0x40] sm:$0xff]
    %v1427 = vld [vmem:[%s1417 + $0x48] sm:$0xff]
    %v1428 = vld [vmem:[%s1417 + $0x50] sm:$0xff]
    %v1429 = vld [vmem:[%s1417 + $0x58] sm:$0xff]
    %v1430 = vld [vmem:[%s1417 + $0x60] sm:$0xff]
    %v1431 = vld [vmem:[%s1417 + $0x68] sm:$0xff]
    %v1432 = vld [vmem:[%s1417 + $0x70] sm:$0xff]
    %v1433 = vld [vmem:[%s1417 + $0x78] sm:$0xff]
    %1434 = vmatprep.subr.mxu0 0.0
    %1435 = vmatpush1.msra.mxu0 %v1418
    %1436 = vmatprep.subr.mxu0 0.0
    %1437 = vmatpush1.msra.mxu0 %v1419
    %1438 = vmatprep.subr.mxu0 0.0
    %1439 = vmatpush1.msra.mxu0 %v1420
    %1440 = vmatprep.subr.mxu0 0.0
    %1441 = vmatpush1.msra.mxu0 %v1421
    %1442 = vmatprep.subr.mxu0 0.0
    %1443 = vmatpush1.msra.mxu0 %v1422
    %1444 = vmatprep.subr.mxu0 0.0
    %1445 = vmatpush1.msra.mxu0 %v1423
    %1446 = vmatprep.subr.mxu0 0.0
    %1447 = vmatpush1.msra.mxu0 %v1424
    %1448 = vmatprep.subr.mxu0 0.0
    %1449 = vmatpush1.msra.mxu0 %v1425
    %1450 = vmatprep.subr.mxu0 0.0
    %1451 = vmatpush1.msra.mxu0 %v1426
    %1452 = vmatprep.subr.mxu0 0.0
    %1453 = vmatpush1.msra.mxu0 %v1427
    %1454 = vmatprep.subr.mxu0 0.0
    %1455 = vmatpush1.msra.mxu0 %v1428
    %1456 = vmatprep.subr.mxu0 0.0
    %1457 = vmatpush1.msra.mxu0 %v1429
    %1458 = vmatprep.subr.mxu0 0.0
    %1459 = vmatpush1.msra.mxu0 %v1430
    %1460 = vmatprep.subr.mxu0 0.0
    %1461 = vmatpush1.msra.mxu0 %v1431
    %1462 = vmatprep.subr.mxu0 0.0
    %1463 = vmatpush1.msra.mxu0 %v1432
    %1464 = vmatprep.subr.mxu0 0.0
    %1465 = vmatpush1.msra.mxu0 %v1433
    %1466 = vmatprep.subr.mxu0 0.0
    %1467 = vmatpush1.msra.mxu0 0.0
    %1468 = vmatprep.subr.mxu0 0.0
    %1469 = vmatpush1.msra.mxu0 0.0
    %1470 = vmatprep.subr.mxu0 0.0
    %1471 = vmatpush1.msra.mxu0 0.0
    %1472 = vmatprep.subr.mxu0 0.0
    %1473 = vmatpush1.msra.mxu0 0.0
    %1474 = vmatprep.subr.mxu0 0.0
    %1475 = vmatpush1.msra.mxu0 0.0
    %1476 = vmatprep.subr.mxu0 0.0
    %1477 = vmatpush1.msra.mxu0 0.0
    %1478 = vmatprep.subr.mxu0 0.0
    %1479 = vmatpush1.msra.mxu0 0.0
    %1480 = vmatprep.subr.mxu0 0.0
    %1481 = vmatpush1.msra.mxu0 0.0
    %1482 = vmatprep.subr.mxu0 0.0
    %1483 = vmatpush1.msra.mxu0 0.0
    %1484 = vmatprep.subr.mxu0 0.0
    %1485 = vmatpush1.msra.mxu0 0.0
    %1486 = vmatprep.subr.mxu0 0.0
    %1487 = vmatpush1.msra.mxu0 0.0
    %1488 = vmatprep.subr.mxu0 0.0
    %1489 = vmatpush1.msra.mxu0 0.0
    %1490 = vmatprep.subr.mxu0 0.0
    %1491 = vmatpush1.msra.mxu0 0.0
    %1492 = vmatprep.subr.mxu0 0.0
    %1493 = vmatpush1.msra.mxu0 0.0
    %1494 = vmatprep.subr.mxu0 0.0
    %1495 = vmatpush1.msra.mxu0 0.0
    %1496 = vmatprep.subr.mxu0 0.0
    %1497 = vmatpush1.msra.mxu0 0.0
    %1498 = vmatprep.mubr.f32.mxu0 0.0
    %1499 = vmatmul.mubr.f32.gmra.mrb[0].mxu0 %v112
    %v1500 = vpop.f32.mrb[0].mxu0
    %v1501 = vadd.f32 0.0, %v1500
    %v1502 = vpop.f32.mrb[0].mxu0
    %1503 = vdwg.mxu0
    %v1504 = vld [vmem:[%s4] sm:$0xff]
    %v1505 = vld [vmem:[%s4 + $0x8] sm:$0xff]
    %1506 = vmatprep.subr.mxu0 0.0
    %1507 = vmatpush1.msra.mxu0 %v196
    %1508 = vmatprep.subr.mxu0 0.0
    %1509 = vmatpush1.msra.mxu0 %v283
    %1510 = vmatprep.subr.mxu0 0.0
    %1511 = vmatpush1.msra.mxu0 %v370
    %1512 = vmatprep.subr.mxu0 0.0
    %1513 = vmatpush1.msra.mxu0 %v457
    %1514 = vmatprep.subr.mxu0 0.0
    %1515 = vmatpush1.msra.mxu0 %v544
    %1516 = vmatprep.subr.mxu0 0.0
    %1517 = vmatpush1.msra.mxu0 %v631
    %1518 = vmatprep.subr.mxu0 0.0
    %1519 = vmatpush1.msra.mxu0 %v718
    %1520 = vmatprep.subr.mxu0 0.0
    %1521 = vmatpush1.msra.mxu0 %v805
    %1522 = vmatprep.subr.mxu0 0.0
    %1523 = vmatpush1.msra.mxu0 %v892
    %1524 = vmatprep.subr.mxu0 0.0
    %1525 = vmatpush1.msra.mxu0 %v979
    %1526 = vmatprep.subr.mxu0 0.0
    %1527 = vmatpush1.msra.mxu0 %v1066
    %1528 = vmatprep.subr.mxu0 0.0
    %1529 = vmatpush1.msra.mxu0 %v1153
    %1530 = vmatprep.subr.mxu0 0.0
    %1531 = vmatpush1.msra.mxu0 %v1240
    %1532 = vmatprep.subr.mxu0 0.0
    %1533 = vmatpush1.msra.mxu0 %v1327
    %1534 = vmatprep.subr.mxu0 0.0
    %1535 = vmatpush1.msra.mxu0 %v1414
    %1536 = vmatprep.subr.mxu0 0.0
    %1537 = vmatpush1.msra.mxu0 %v1501
    %1538 = vmatprep.subr.mxu0 0.0
    %1539 = vmatpush1.msra.mxu0 0.0
    %1540 = vmatprep.subr.mxu0 0.0
    %1541 = vmatpush1.msra.mxu0 0.0
    %1542 = vmatprep.subr.mxu0 0.0
    %1543 = vmatpush1.msra.mxu0 0.0
    %1544 = vmatprep.subr.mxu0 0.0
    %1545 = vmatpush1.msra.mxu0 0.0
    %1546 = vmatprep.subr.mxu0 0.0
    %1547 = vmatpush1.msra.mxu0 0.0
    %1548 = vmatprep.subr.mxu0 0.0
    %1549 = vmatpush1.msra.mxu0 0.0
    %1550 = vmatprep.subr.mxu0 0.0
    %1551 = vmatpush1.msra.mxu0 0.0
    %1552 = vmatprep.subr.mxu0 0.0
    %1553 = vmatpush1.msra.mxu0 0.0
    %1554 = vmatprep.subr.mxu0 0.0
    %1555 = vmatpush1.msra.mxu0 0.0
    %1556 = vmatprep.subr.mxu0 0.0
    %1557 = vmatpush1.msra.mxu0 0.0
    %1558 = vmatprep.subr.mxu0 0.0
    %1559 = vmatpush1.msra.mxu0 0.0
    %1560 = vmatprep.subr.mxu0 0.0
    %1561 = vmatpush1.msra.mxu0 0.0
    %1562 = vmatprep.subr.mxu0 0.0
    %1563 = vmatpush1.msra.mxu0 0.0
    %1564 = vmatprep.subr.mxu0 0.0
    %1565 = vmatpush1.msra.mxu0 0.0
    %1566 = vmatprep.subr.mxu0 0.0
    %1567 = vmatpush1.msra.mxu0 0.0
    %1568 = vmatprep.subr.mxu0 0.0
    %1569 = vmatpush1.msra.mxu0 0.0
    %1570 = vmatprep.mubr.f32.mxu0 0.0
    %1571 = vmatmul.mubr.f32.gmra.mrb[0].mxu0 %v1504
    %v1572 = vpop.f32.mrb[0].mxu0
    %v1573 = vadd.f32 0.0, %v1572
    %v1574 = vpop.f32.mrb[0].mxu0
    %1575 = vmatprep.mubr.f32.mxu0 0.0
    %1576 = vmatmul.mubr.f32.gmra.mrb[0].mxu0 %v1505
    %v1577 = vpop.f32.mrb[0].mxu0
    %v1578 = vadd.f32 0.0, %v1577
    %v1579 = vpop.f32.mrb[0].mxu0
    %1580 = vdwg.mxu0
    %v1581 = vmul.f32 %v1573, %v1573
    %v1582 = vmul.f32 %v1578, %v1578
    %vm1583 = vcmask 261120
    %v1584 = vsel %vm1583, %v1573, 0.0
    %1585 = vadd.xlane.f32.xlu0 %v1584
    %v1586 = vpop.xlane.xlu0 %1585
    %v1587 = vsel %vm1583, %v1578, 0.0
    %1588 = vadd.xlane.f32.xlu0 %v1587
    %v1589 = vpop.xlane.xlu0 %1588
    %v1590 = vsel %vm1583, %v1581, 0.0
    %1591 = vadd.xlane.f32.xlu0 %v1590
    %v1592 = vpop.xlane.xlu0 %1591
    %v1593 = vsel %vm1583, %v1582, 0.0
    %1594 = vadd.xlane.f32.xlu0 %v1593
    %v1595 = vpop.xlane.xlu0 %1594
    %v1596 = vrcp.pop 32.0
    %v1597 = vmul.f32 %v1586, %v1596
    %v1598 = vmul.f32 %v1589, %v1596
    %v1599 = vmul.f32 %v1592, %v1596
    %v1600 = vmul.f32 %v1595, %v1596
    %v1601 = vmul.f32 %v1597, %v1597
    %v1602 = vmul.f32 %v1598, %v1598
    %v1603 = vsub.f32 %v1599, %v1601
    %v1604 = vsub.f32 %v1600, %v1602
    %v1605 = vmax.f32 %v1603, 0.0
    %v1606 = vmax.f32 %v1604, 0.0
    %v1607 = vsub.f32 %v1573, %v1597
    %v1608 = vsub.f32 %v1578, %v1598
    %v1609 = vadd.f32 %v1605, 1e-05
    %v1610 = vadd.f32 %v1606, 1e-05
    %v1611 = vrsqrt.pop %v1609
    %v1612 = vrsqrt.pop %v1610
    %v1613 = vmul.f32 %v1607, %v1611
    %v1614 = vmul.f32 %v1608, %v1612
    %v1615 = vmul.f32 %v1613, 0.01
    %v1616 = vmul.f32 %v1614, 0.01
    %v1617 = vmax.f32 %v1613, %v1615
    %v1618 = vmax.f32 %v1614, %v1616
    %v1619 = vld [vmem:[%s3] sm:$0xff]
    %v1620 = vld [vmem:[%s3 + $0x8] sm:$0xff]
    %v1621 = vld [vmem:[%s3 + $0x10] sm:$0xff]
    %v1622 = vld [vmem:[%s3 + $0x18] sm:$0xff]
    %v1624 = vsel %vm1583, %v1617, 0
    %v1627 = vsel %vm1583, %v1618, 0
    %1629 = vmatprep.subr.mxu0 0.0
    %1630 = vmatpush1.msra.mxu0 %v1619
    %1631 = vmatprep.subr.mxu0 0.0
    %1632 = vmatpush1.msra.mxu0 %v1620
    %1633 = vmatprep.subr.mxu0 0.0
    %1634 = vmatpush1.msra.mxu0 %v1621
    %1635 = vmatprep.subr.mxu0 0.0
    %1636 = vmatpush1.msra.mxu0 %v1622
    %1637 = vmatprep.subr.mxu0 0.0
    %1638 = vmatpush1.msra.mxu0 0.0
    %1639 = vmatprep.subr.mxu0 0.0
    %1640 = vmatpush1.msra.mxu0 0.0
    %1641 = vmatprep.subr.mxu0 0.0
    %1642 = vmatpush1.msra.mxu0 0.0
    %1643 = vmatprep.subr.mxu0 0.0
    %1644 = vmatpush1.msra.mxu0 0.0
    %1645 = vmatprep.subr.mxu0 0.0
    %1646 = vmatpush1.msra.mxu0 0.0
    %1647 = vmatprep.subr.mxu0 0.0
    %1648 = vmatpush1.msra.mxu0 0.0
    %1649 = vmatprep.subr.mxu0 0.0
    %1650 = vmatpush1.msra.mxu0 0.0
    %1651 = vmatprep.subr.mxu0 0.0
    %1652 = vmatpush1.msra.mxu0 0.0
    %1653 = vmatprep.subr.mxu0 0.0
    %1654 = vmatpush1.msra.mxu0 0.0
    %1655 = vmatprep.subr.mxu0 0.0
    %1656 = vmatpush1.msra.mxu0 0.0
    %1657 = vmatprep.subr.mxu0 0.0
    %1658 = vmatpush1.msra.mxu0 0.0
    %1659 = vmatprep.subr.mxu0 0.0
    %1660 = vmatpush1.msra.mxu0 0.0
    %1661 = vmatprep.subr.mxu0 0.0
    %1662 = vmatpush1.msra.mxu0 0.0
    %1663 = vmatprep.subr.mxu0 0.0
    %1664 = vmatpush1.msra.mxu0 0.0
    %1665 = vmatprep.subr.mxu0 0.0
    %1666 = vmatpush1.msra.mxu0 0.0
    %1667 = vmatprep.subr.mxu0 0.0
    %1668 = vmatpush1.msra.mxu0 0.0
    %1669 = vmatprep.subr.mxu0 0.0
    %1670 = vmatpush1.msra.mxu0 0.0
    %1671 = vmatprep.subr.mxu0 0.0
    %1672 = vmatpush1.msra.mxu0 0.0
    %1673 = vmatprep.subr.mxu0 0.0
    %1674 = vmatpush1.msra.mxu0 0.0
    %1675 = vmatprep.subr.mxu0 0.0
    %1676 = vmatpush1.msra.mxu0 0.0
    %1677 = vmatprep.subr.mxu0 0.0
    %1678 = vmatpush1.msra.mxu0 0.0
    %1679 = vmatprep.subr.mxu0 0.0
    %1680 = vmatpush1.msra.mxu0 0.0
    %1681 = vmatprep.subr.mxu0 0.0
    %1682 = vmatpush1.msra.mxu0 0.0
    %1683 = vmatprep.subr.mxu0 0.0
    %1684 = vmatpush1.msra.mxu0 0.0
    %1685 = vmatprep.subr.mxu0 0.0
    %1686 = vmatpush1.msra.mxu0 0.0
    %1687 = vmatprep.subr.mxu0 0.0
    %1688 = vmatpush1.msra.mxu0 0.0
    %1689 = vmatprep.subr.mxu0 0.0
    %1690 = vmatpush1.msra.mxu0 0.0
    %1691 = vmatprep.subr.mxu0 0.0
    %1692 = vmatpush1.msra.mxu0 0.0
    %1693 = vmatprep.mubr.f32.mxu0 0.0
    %1694 = vmatmul.mubr.f32.gmra.mrb[0].mxu0 %v1624
    %v1695 = vpop.f32.mrb[0].mxu0
    %v1696 = vadd.f32 0.0, %v1695
    %v1697 = vpop.f32.mrb[0].mxu0
    %1698 = vmatprep.mubr.f32.mxu0 0.0
    %1699 = vmatmul.mubr.f32.gmra.mrb[0].mxu0 %v1627
    %v1700 = vpop.f32.mrb[0].mxu0
    %v1701 = vadd.f32 0.0, %v1700
    %v1702 = vpop.f32.mrb[0].mxu0
    %1703 = vdwg.mxu0
    %s1704 = scalar_lea.vmem %s3, 32
    %v1705 = vld [vmem:[%s1704] sm:$0xff]
    %v1706 = vld [vmem:[%s1704 + $0x8] sm:$0xff]
    %v1707 = vld [vmem:[%s1704 + $0x10] sm:$0xff]
    %v1708 = vld [vmem:[%s1704 + $0x18] sm:$0xff]
    %1709 = vmatprep.subr.mxu0 0.0
    %1710 = vmatpush1.msra.mxu0 %v1705
    %1711 = vmatprep.subr.mxu0 0.0
    %1712 = vmatpush1.msra.mxu0 %v1706
    %1713 = vmatprep.subr.mxu0 0.0
    %1714 = vmatpush1.msra.mxu0 %v1707
    %1715 = vmatprep.subr.mxu0 0.0
    %1716 = vmatpush1.msra.mxu0 %v1708
    %1717 = vmatprep.subr.mxu0 0.0
    %1718 = vmatpush1.msra.mxu0 0.0
    %1719 = vmatprep.subr.mxu0 0.0
    %1720 = vmatpush1.msra.mxu0 0.0
    %1721 = vmatprep.subr.mxu0 0.0
    %1722 = vmatpush1.msra.mxu0 0.0
    %1723 = vmatprep.subr.mxu0 0.0
    %1724 = vmatpush1.msra.mxu0 0.0
    %1725 = vmatprep.subr.mxu0 0.0
    %1726 = vmatpush1.msra.mxu0 0.0
    %1727 = vmatprep.subr.mxu0 0.0
    %1728 = vmatpush1.msra.mxu0 0.0
    %1729 = vmatprep.subr.mxu0 0.0
    %1730 = vmatpush1.msra.mxu0 0.0
    %1731 = vmatprep.subr.mxu0 0.0
    %1732 = vmatpush1.msra.mxu0 0.0
    %1733 = vmatprep.subr.mxu0 0.0
    %1734 = vmatpush1.msra.mxu0 0.0
    %1735 = vmatprep.subr.mxu0 0.0
    %1736 = vmatpush1.msra.mxu0 0.0
    %1737 = vmatprep.subr.mxu0 0.0
    %1738 = vmatpush1.msra.mxu0 0.0
    %1739 = vmatprep.subr.mxu0 0.0
    %1740 = vmatpush1.msra.mxu0 0.0
    %1741 = vmatprep.subr.mxu0 0.0
    %1742 = vmatpush1.msra.mxu0 0.0
    %1743 = vmatprep.subr.mxu0 0.0
    %1744 = vmatpush1.msra.mxu0 0.0
    %1745 = vmatprep.subr.mxu0 0.0
    %1746 = vmatpush1.msra.mxu0 0.0
    %1747 = vmatprep.subr.mxu0 0.0
    %1748 = vmatpush1.msra.mxu0 0.0
    %1749 = vmatprep.subr.mxu0 0.0
    %1750 = vmatpush1.msra.mxu0 0.0
    %1751 = vmatprep.subr.mxu0 0.0
    %1752 = vmatpush1.msra.mxu0 0.0
    %1753 = vmatprep.subr.mxu0 0.0
    %1754 = vmatpush1.msra.mxu0 0.0
    %1755 = vmatprep.subr.mxu0 0.0
    %1756 = vmatpush1.msra.mxu0 0.0
    %1757 = vmatprep.subr.mxu0 0.0
    %1758 = vmatpush1.msra.mxu0 0.0
    %1759 = vmatprep.subr.mxu0 0.0
    %1760 = vmatpush1.msra.mxu0 0.0
    %1761 = vmatprep.subr.mxu0 0.0
    %1762 = vmatpush1.msra.mxu0 0.0
    %1763 = vmatprep.subr.mxu0 0.0
    %1764 = vmatpush1.msra.mxu0 0.0
    %1765 = vmatprep.subr.mxu0 0.0
    %1766 = vmatpush1.msra.mxu0 0.0
    %1767 = vmatprep.subr.mxu0 0.0
    %1768 = vmatpush1.msra.mxu0 0.0
    %1769 = vmatprep.subr.mxu0 0.0
    %1770 = vmatpush1.msra.mxu0 0.0
    %1771 = vmatprep.subr.mxu0 0.0
    %1772 = vmatpush1.msra.mxu0 0.0
    %1773 = vmatprep.mubr.f32.mxu0 0.0
    %1774 = vmatmul.mubr.f32.gmra.mrb[0].mxu0 %v1624
    %v1775 = vpop.f32.mrb[0].mxu0
    %v1776 = vadd.f32 0.0, %v1775
    %v1777 = vpop.f32.mrb[0].mxu0
    %1778 = vmatprep.mubr.f32.mxu0 0.0
    %1779 = vmatmul.mubr.f32.gmra.mrb[0].mxu0 %v1627
    %v1780 = vpop.f32.mrb[0].mxu0
    %v1781 = vadd.f32 0.0, %v1780
    %v1782 = vpop.f32.mrb[0].mxu0
    %1783 = vdwg.mxu0
    %s1784 = scalar_lea.vmem %s3, 64
    %v1785 = vld [vmem:[%s1784] sm:$0xff]
    %v1786 = vld [vmem:[%s1784 + $0x8] sm:$0xff]
    %v1787 = vld [vmem:[%s1784 + $0x10] sm:$0xff]
    %v1788 = vld [vmem:[%s1784 + $0x18] sm:$0xff]
    %1789 = vmatprep.subr.mxu0 0.0
    %1790 = vmatpush1.msra.mxu0 %v1785
    %1791 = vmatprep.subr.mxu0 0.0
    %1792 = vmatpush1.msra.mxu0 %v1786
    %1793 = vmatprep.subr.mxu0 0.0
    %1794 = vmatpush1.msra.mxu0 %v1787
    %1795 = vmatprep.subr.mxu0 0.0
    %1796 = vmatpush1.msra.mxu0 %v1788
    %1797 = vmatprep.subr.mxu0 0.0
    %1798 = vmatpush1.msra.mxu0 0.0
    %1799 = vmatprep.subr.mxu0 0.0
    %1800 = vmatpush1.msra.mxu0 0.0
    %1801 = vmatprep.subr.mxu0 0.0
    %1802 = vmatpush1.msra.mxu0 0.0
    %1803 = vmatprep.subr.mxu0 0.0
    %1804 = vmatpush1.msra.mxu0 0.0
    %1805 = vmatprep.subr.mxu0 0.0
    %1806 = vmatpush1.msra.mxu0 0.0
    %1807 = vmatprep.subr.mxu0 0.0
    %1808 = vmatpush1.msra.mxu0 0.0
    %1809 = vmatprep.subr.mxu0 0.0
    %1810 = vmatpush1.msra.mxu0 0.0
    %1811 = vmatprep.subr.mxu0 0.0
    %1812 = vmatpush1.msra.mxu0 0.0
    %1813 = vmatprep.subr.mxu0 0.0
    %1814 = vmatpush1.msra.mxu0 0.0
    %1815 = vmatprep.subr.mxu0 0.0
    %1816 = vmatpush1.msra.mxu0 0.0
    %1817 = vmatprep.subr.mxu0 0.0
    %1818 = vmatpush1.msra.mxu0 0.0
    %1819 = vmatprep.subr.mxu0 0.0
    %1820 = vmatpush1.msra.mxu0 0.0
    %1821 = vmatprep.subr.mxu0 0.0
    %1822 = vmatpush1.msra.mxu0 0.0
    %1823 = vmatprep.subr.mxu0 0.0
    %1824 = vmatpush1.msra.mxu0 0.0
    %1825 = vmatprep.subr.mxu0 0.0
    %1826 = vmatpush1.msra.mxu0 0.0
    %1827 = vmatprep.subr.mxu0 0.0
    %1828 = vmatpush1.msra.mxu0 0.0
    %1829 = vmatprep.subr.mxu0 0.0
    %1830 = vmatpush1.msra.mxu0 0.0
    %1831 = vmatprep.subr.mxu0 0.0
    %1832 = vmatpush1.msra.mxu0 0.0
    %1833 = vmatprep.subr.mxu0 0.0
    %1834 = vmatpush1.msra.mxu0 0.0
    %1835 = vmatprep.subr.mxu0 0.0
    %1836 = vmatpush1.msra.mxu0 0.0
    %1837 = vmatprep.subr.mxu0 0.0
    %1838 = vmatpush1.msra.mxu0 0.0
    %1839 = vmatprep.subr.mxu0 0.0
    %1840 = vmatpush1.msra.mxu0 0.0
    %1841 = vmatprep.subr.mxu0 0.0
    %1842 = vmatpush1.msra.mxu0 0.0
    %1843 = vmatprep.subr.mxu0 0.0
    %1844 = vmatpush1.msra.mxu0 0.0
    %1845 = vmatprep.subr.mxu0 0.0
    %1846 = vmatpush1.msra.mxu0 0.0
    %1847 = vmatprep.subr.mxu0 0.0
    %1848 = vmatpush1.msra.mxu0 0.0
    %1849 = vmatprep.subr.mxu0 0.0
    %1850 = vmatpush1.msra.mxu0 0.0
    %1851 = vmatprep.subr.mxu0 0.0
    %1852 = vmatpush1.msra.mxu0 0.0
    %1853 = vmatprep.mubr.f32.mxu0 0.0
    %1854 = vmatmul.mubr.f32.gmra.mrb[0].mxu0 %v1624
    %v1855 = vpop.f32.mrb[0].mxu0
    %v1856 = vadd.f32 0.0, %v1855
    %v1857 = vpop.f32.mrb[0].mxu0
    %1858 = vmatprep.mubr.f32.mxu0 0.0
    %1859 = vmatmul.mubr.f32.gmra.mrb[0].mxu0 %v1627
    %v1860 = vpop.f32.mrb[0].mxu0
    %v1861 = vadd.f32 0.0, %v1860
    %v1862 = vpop.f32.mrb[0].mxu0
    %1863 = vdwg.mxu0
    %s1864 = scalar_lea.vmem %s3, 96
    %v1865 = vld [vmem:[%s1864] sm:$0xff]
    %v1866 = vld [vmem:[%s1864 + $0x8] sm:$0xff]
    %v1867 = vld [vmem:[%s1864 + $0x10] sm:$0xff]
    %v1868 = vld [vmem:[%s1864 + $0x18] sm:$0xff]
    %1869 = vmatprep.subr.mxu0 0.0
    %1870 = vmatpush1.msra.mxu0 %v1865
    %1871 = vmatprep.subr.mxu0 0.0
    %1872 = vmatpush1.msra.mxu0 %v1866
    %1873 = vmatprep.subr.mxu0 0.0
    %1874 = vmatpush1.msra.mxu0 %v1867
    %1875 = vmatprep.subr.mxu0 0.0
    %1876 = vmatpush1.msra.mxu0 %v1868
    %1877 = vmatprep.subr.mxu0 0.0
    %1878 = vmatpush1.msra.mxu0 0.0
    %1879 = vmatprep.subr.mxu0 0.0
    %1880 = vmatpush1.msra.mxu0 0.0
    %1881 = vmatprep.subr.mxu0 0.0
    %1882 = vmatpush1.msra.mxu0 0.0
    %1883 = vmatprep.subr.mxu0 0.0
    %1884 = vmatpush1.msra.mxu0 0.0
    %1885 = vmatprep.subr.mxu0 0.0
    %1886 = vmatpush1.msra.mxu0 0.0
    %1887 = vmatprep.subr.mxu0 0.0
    %1888 = vmatpush1.msra.mxu0 0.0
    %1889 = vmatprep.subr.mxu0 0.0
    %1890 = vmatpush1.msra.mxu0 0.0
    %1891 = vmatprep.subr.mxu0 0.0
    %1892 = vmatpush1.msra.mxu0 0.0
    %1893 = vmatprep.subr.mxu0 0.0
    %1894 = vmatpush1.msra.mxu0 0.0
    %1895 = vmatprep.subr.mxu0 0.0
    %1896 = vmatpush1.msra.mxu0 0.0
    %1897 = vmatprep.subr.mxu0 0.0
    %1898 = vmatpush1.msra.mxu0 0.0
    %1899 = vmatprep.subr.mxu0 0.0
    %1900 = vmatpush1.msra.mxu0 0.0
    %1901 = vmatprep.subr.mxu0 0.0
    %1902 = vmatpush1.msra.mxu0 0.0
    %1903 = vmatprep.subr.mxu0 0.0
    %1904 = vmatpush1.msra.mxu0 0.0
    %1905 = vmatprep.subr.mxu0 0.0
    %1906 = vmatpush1.msra.mxu0 0.0
    %1907 = vmatprep.subr.mxu0 0.0
    %1908 = vmatpush1.msra.mxu0 0.0
    %1909 = vmatprep.subr.mxu0 0.0
    %1910 = vmatpush1.msra.mxu0 0.0
    %1911 = vmatprep.subr.mxu0 0.0
    %1912 = vmatpush1.msra.mxu0 0.0
    %1913 = vmatprep.subr.mxu0 0.0
    %1914 = vmatpush1.msra.mxu0 0.0
    %1915 = vmatprep.subr.mxu0 0.0
    %1916 = vmatpush1.msra.mxu0 0.0
    %1917 = vmatprep.subr.mxu0 0.0
    %1918 = vmatpush1.msra.mxu0 0.0
    %1919 = vmatprep.subr.mxu0 0.0
    %1920 = vmatpush1.msra.mxu0 0.0
    %1921 = vmatprep.subr.mxu0 0.0
    %1922 = vmatpush1.msra.mxu0 0.0
    %1923 = vmatprep.subr.mxu0 0.0
    %1924 = vmatpush1.msra.mxu0 0.0
    %1925 = vmatprep.subr.mxu0 0.0
    %1926 = vmatpush1.msra.mxu0 0.0
    %1927 = vmatprep.subr.mxu0 0.0
    %1928 = vmatpush1.msra.mxu0 0.0
    %1929 = vmatprep.subr.mxu0 0.0
    %1930 = vmatpush1.msra.mxu0 0.0
    %1931 = vmatprep.subr.mxu0 0.0
    %1932 = vmatpush1.msra.mxu0 0.0
    %1933 = vmatprep.mubr.f32.mxu0 0.0
    %1934 = vmatmul.mubr.f32.gmra.mrb[0].mxu0 %v1624
    %v1935 = vpop.f32.mrb[0].mxu0
    %v1936 = vadd.f32 0.0, %v1935
    %v1937 = vpop.f32.mrb[0].mxu0
    %1938 = vmatprep.mubr.f32.mxu0 0.0
    %1939 = vmatmul.mubr.f32.gmra.mrb[0].mxu0 %v1627
    %v1940 = vpop.f32.mrb[0].mxu0
    %v1941 = vadd.f32 0.0, %v1940
    %v1942 = vpop.f32.mrb[0].mxu0
    %1943 = vdwg.mxu0
    %s1944 = scalar_lea.vmem %s3, 128
    %v1945 = vld [vmem:[%s1944] sm:$0xff]
    %v1946 = vld [vmem:[%s1944 + $0x8] sm:$0xff]
    %v1947 = vld [vmem:[%s1944 + $0x10] sm:$0xff]
    %v1948 = vld [vmem:[%s1944 + $0x18] sm:$0xff]
    %1949 = vmatprep.subr.mxu0 0.0
    %1950 = vmatpush1.msra.mxu0 %v1945
    %1951 = vmatprep.subr.mxu0 0.0
    %1952 = vmatpush1.msra.mxu0 %v1946
    %1953 = vmatprep.subr.mxu0 0.0
    %1954 = vmatpush1.msra.mxu0 %v1947
    %1955 = vmatprep.subr.mxu0 0.0
    %1956 = vmatpush1.msra.mxu0 %v1948
    %1957 = vmatprep.subr.mxu0 0.0
    %1958 = vmatpush1.msra.mxu0 0.0
    %1959 = vmatprep.subr.mxu0 0.0
    %1960 = vmatpush1.msra.mxu0 0.0
    %1961 = vmatprep.subr.mxu0 0.0
    %1962 = vmatpush1.msra.mxu0 0.0
    %1963 = vmatprep.subr.mxu0 0.0
    %1964 = vmatpush1.msra.mxu0 0.0
    %1965 = vmatprep.subr.mxu0 0.0
    %1966 = vmatpush1.msra.mxu0 0.0
    %1967 = vmatprep.subr.mxu0 0.0
    %1968 = vmatpush1.msra.mxu0 0.0
    %1969 = vmatprep.subr.mxu0 0.0
    %1970 = vmatpush1.msra.mxu0 0.0
    %1971 = vmatprep.subr.mxu0 0.0
    %1972 = vmatpush1.msra.mxu0 0.0
    %1973 = vmatprep.subr.mxu0 0.0
    %1974 = vmatpush1.msra.mxu0 0.0
    %1975 = vmatprep.subr.mxu0 0.0
    %1976 = vmatpush1.msra.mxu0 0.0
    %1977 = vmatprep.subr.mxu0 0.0
    %1978 = vmatpush1.msra.mxu0 0.0
    %1979 = vmatprep.subr.mxu0 0.0
    %1980 = vmatpush1.msra.mxu0 0.0
    %1981 = vmatprep.subr.mxu0 0.0
    %1982 = vmatpush1.msra.mxu0 0.0
    %1983 = vmatprep.subr.mxu0 0.0
    %1984 = vmatpush1.msra.mxu0 0.0
    %1985 = vmatprep.subr.mxu0 0.0
    %1986 = vmatpush1.msra.mxu0 0.0
    %1987 = vmatprep.subr.mxu0 0.0
    %1988 = vmatpush1.msra.mxu0 0.0
    %1989 = vmatprep.subr.mxu0 0.0
    %1990 = vmatpush1.msra.mxu0 0.0
    %1991 = vmatprep.subr.mxu0 0.0
    %1992 = vmatpush1.msra.mxu0 0.0
    %1993 = vmatprep.subr.mxu0 0.0
    %1994 = vmatpush1.msra.mxu0 0.0
    %1995 = vmatprep.subr.mxu0 0.0
    %1996 = vmatpush1.msra.mxu0 0.0
    %1997 = vmatprep.subr.mxu0 0.0
    %1998 = vmatpush1.msra.mxu0 0.0
    %1999 = vmatprep.subr.mxu0 0.0
    %2000 = vmatpush1.msra.mxu0 0.0
    %2001 = vmatprep.subr.mxu0 0.0
    %2002 = vmatpush1.msra.mxu0 0.0
    %2003 = vmatprep.subr.mxu0 0.0
    %2004 = vmatpush1.msra.mxu0 0.0
    %2005 = vmatprep.subr.mxu0 0.0
    %2006 = vmatpush1.msra.mxu0 0.0
    %2007 = vmatprep.subr.mxu0 0.0
    %2008 = vmatpush1.msra.mxu0 0.0
    %2009 = vmatprep.subr.mxu0 0.0
    %2010 = vmatpush1.msra.mxu0 0.0
    %2011 = vmatprep.subr.mxu0 0.0
    %2012 = vmatpush1.msra.mxu0 0.0
    %2013 = vmatprep.mubr.f32.mxu0 0.0
    %2014 = vmatmul.mubr.f32.gmra.mrb[0].mxu0 %v1624
    %v2015 = vpop.f32.mrb[0].mxu0
    %v2016 = vadd.f32 0.0, %v2015
    %v2017 = vpop.f32.mrb[0].mxu0
    %2018 = vmatprep.mubr.f32.mxu0 0.0
    %2019 = vmatmul.mubr.f32.gmra.mrb[0].mxu0 %v1627
    %v2020 = vpop.f32.mrb[0].mxu0
    %v2021 = vadd.f32 0.0, %v2020
    %v2022 = vpop.f32.mrb[0].mxu0
    %2023 = vdwg.mxu0
    %s2024 = scalar_lea.vmem %s3, 160
    %v2025 = vld [vmem:[%s2024] sm:$0xff]
    %v2026 = vld [vmem:[%s2024 + $0x8] sm:$0xff]
    %v2027 = vld [vmem:[%s2024 + $0x10] sm:$0xff]
    %v2028 = vld [vmem:[%s2024 + $0x18] sm:$0xff]
    %2029 = vmatprep.subr.mxu0 0.0
    %2030 = vmatpush1.msra.mxu0 %v2025
    %2031 = vmatprep.subr.mxu0 0.0
    %2032 = vmatpush1.msra.mxu0 %v2026
    %2033 = vmatprep.subr.mxu0 0.0
    %2034 = vmatpush1.msra.mxu0 %v2027
    %2035 = vmatprep.subr.mxu0 0.0
    %2036 = vmatpush1.msra.mxu0 %v2028
    %2037 = vmatprep.subr.mxu0 0.0
    %2038 = vmatpush1.msra.mxu0 0.0
    %2039 = vmatprep.subr.mxu0 0.0
    %2040 = vmatpush1.msra.mxu0 0.0
    %2041 = vmatprep.subr.mxu0 0.0
    %2042 = vmatpush1.msra.mxu0 0.0
    %2043 = vmatprep.subr.mxu0 0.0
    %2044 = vmatpush1.msra.mxu0 0.0
    %2045 = vmatprep.subr.mxu0 0.0
    %2046 = vmatpush1.msra.mxu0 0.0
    %2047 = vmatprep.subr.mxu0 0.0
    %2048 = vmatpush1.msra.mxu0 0.0
    %2049 = vmatprep.subr.mxu0 0.0
    %2050 = vmatpush1.msra.mxu0 0.0
    %2051 = vmatprep.subr.mxu0 0.0
    %2052 = vmatpush1.msra.mxu0 0.0
    %2053 = vmatprep.subr.mxu0 0.0
    %2054 = vmatpush1.msra.mxu0 0.0
    %2055 = vmatprep.subr.mxu0 0.0
    %2056 = vmatpush1.msra.mxu0 0.0
    %2057 = vmatprep.subr.mxu0 0.0
    %2058 = vmatpush1.msra.mxu0 0.0
    %2059 = vmatprep.subr.mxu0 0.0
    %2060 = vmatpush1.msra.mxu0 0.0
    %2061 = vmatprep.subr.mxu0 0.0
    %2062 = vmatpush1.msra.mxu0 0.0
    %2063 = vmatprep.subr.mxu0 0.0
    %2064 = vmatpush1.msra.mxu0 0.0
    %2065 = vmatprep.subr.mxu0 0.0
    %2066 = vmatpush1.msra.mxu0 0.0
    %2067 = vmatprep.subr.mxu0 0.0
    %2068 = vmatpush1.msra.mxu0 0.0
    %2069 = vmatprep.subr.mxu0 0.0
    %2070 = vmatpush1.msra.mxu0 0.0
    %2071 = vmatprep.subr.mxu0 0.0
    %2072 = vmatpush1.msra.mxu0 0.0
    %2073 = vmatprep.subr.mxu0 0.0
    %2074 = vmatpush1.msra.mxu0 0.0
    %2075 = vmatprep.subr.mxu0 0.0
    %2076 = vmatpush1.msra.mxu0 0.0
    %2077 = vmatprep.subr.mxu0 0.0
    %2078 = vmatpush1.msra.mxu0 0.0
    %2079 = vmatprep.subr.mxu0 0.0
    %2080 = vmatpush1.msra.mxu0 0.0
    %2081 = vmatprep.subr.mxu0 0.0
    %2082 = vmatpush1.msra.mxu0 0.0
    %2083 = vmatprep.subr.mxu0 0.0
    %2084 = vmatpush1.msra.mxu0 0.0
    %2085 = vmatprep.subr.mxu0 0.0
    %2086 = vmatpush1.msra.mxu0 0.0
    %2087 = vmatprep.subr.mxu0 0.0
    %2088 = vmatpush1.msra.mxu0 0.0
    %2089 = vmatprep.subr.mxu0 0.0
    %2090 = vmatpush1.msra.mxu0 0.0
    %2091 = vmatprep.subr.mxu0 0.0
    %2092 = vmatpush1.msra.mxu0 0.0
    %2093 = vmatprep.mubr.f32.mxu0 0.0
    %2094 = vmatmul.mubr.f32.gmra.mrb[0].mxu0 %v1624
    %v2095 = vpop.f32.mrb[0].mxu0
    %v2096 = vadd.f32 0.0, %v2095
    %v2097 = vpop.f32.mrb[0].mxu0
    %2098 = vmatprep.mubr.f32.mxu0 0.0
    %2099 = vmatmul.mubr.f32.gmra.mrb[0].mxu0 %v1627
    %v2100 = vpop.f32.mrb[0].mxu0
    %v2101 = vadd.f32 0.0, %v2100
    %v2102 = vpop.f32.mrb[0].mxu0
    %2103 = vdwg.mxu0
    %s2104 = scalar_lea.vmem %s3, 192
    %v2105 = vld [vmem:[%s2104] sm:$0xff]
    %v2106 = vld [vmem:[%s2104 + $0x8] sm:$0xff]
    %v2107 = vld [vmem:[%s2104 + $0x10] sm:$0xff]
    %v2108 = vld [vmem:[%s2104 + $0x18] sm:$0xff]
    %2109 = vmatprep.subr.mxu0 0.0
    %2110 = vmatpush1.msra.mxu0 %v2105
    %2111 = vmatprep.subr.mxu0 0.0
    %2112 = vmatpush1.msra.mxu0 %v2106
    %2113 = vmatprep.subr.mxu0 0.0
    %2114 = vmatpush1.msra.mxu0 %v2107
    %2115 = vmatprep.subr.mxu0 0.0
    %2116 = vmatpush1.msra.mxu0 %v2108
    %2117 = vmatprep.subr.mxu0 0.0
    %2118 = vmatpush1.msra.mxu0 0.0
    %2119 = vmatprep.subr.mxu0 0.0
    %2120 = vmatpush1.msra.mxu0 0.0
    %2121 = vmatprep.subr.mxu0 0.0
    %2122 = vmatpush1.msra.mxu0 0.0
    %2123 = vmatprep.subr.mxu0 0.0
    %2124 = vmatpush1.msra.mxu0 0.0
    %2125 = vmatprep.subr.mxu0 0.0
    %2126 = vmatpush1.msra.mxu0 0.0
    %2127 = vmatprep.subr.mxu0 0.0
    %2128 = vmatpush1.msra.mxu0 0.0
    %2129 = vmatprep.subr.mxu0 0.0
    %2130 = vmatpush1.msra.mxu0 0.0
    %2131 = vmatprep.subr.mxu0 0.0
    %2132 = vmatpush1.msra.mxu0 0.0
    %2133 = vmatprep.subr.mxu0 0.0
    %2134 = vmatpush1.msra.mxu0 0.0
    %2135 = vmatprep.subr.mxu0 0.0
    %2136 = vmatpush1.msra.mxu0 0.0
    %2137 = vmatprep.subr.mxu0 0.0
    %2138 = vmatpush1.msra.mxu0 0.0
    %2139 = vmatprep.subr.mxu0 0.0
    %2140 = vmatpush1.msra.mxu0 0.0
    %2141 = vmatprep.subr.mxu0 0.0
    %2142 = vmatpush1.msra.mxu0 0.0
    %2143 = vmatprep.subr.mxu0 0.0
    %2144 = vmatpush1.msra.mxu0 0.0
    %2145 = vmatprep.subr.mxu0 0.0
    %2146 = vmatpush1.msra.mxu0 0.0
    %2147 = vmatprep.subr.mxu0 0.0
    %2148 = vmatpush1.msra.mxu0 0.0
    %2149 = vmatprep.subr.mxu0 0.0
    %2150 = vmatpush1.msra.mxu0 0.0
    %2151 = vmatprep.subr.mxu0 0.0
    %2152 = vmatpush1.msra.mxu0 0.0
    %2153 = vmatprep.subr.mxu0 0.0
    %2154 = vmatpush1.msra.mxu0 0.0
    %2155 = vmatprep.subr.mxu0 0.0
    %2156 = vmatpush1.msra.mxu0 0.0
    %2157 = vmatprep.subr.mxu0 0.0
    %2158 = vmatpush1.msra.mxu0 0.0
    %2159 = vmatprep.subr.mxu0 0.0
    %2160 = vmatpush1.msra.mxu0 0.0
    %2161 = vmatprep.subr.mxu0 0.0
    %2162 = vmatpush1.msra.mxu0 0.0
    %2163 = vmatprep.subr.mxu0 0.0
    %2164 = vmatpush1.msra.mxu0 0.0
    %2165 = vmatprep.subr.mxu0 0.0
    %2166 = vmatpush1.msra.mxu0 0.0
    %2167 = vmatprep.subr.mxu0 0.0
    %2168 = vmatpush1.msra.mxu0 0.0
    %2169 = vmatprep.subr.mxu0 0.0
    %2170 = vmatpush1.msra.mxu0 0.0
    %2171 = vmatprep.subr.mxu0 0.0
    %2172 = vmatpush1.msra.mxu0 0.0
    %2173 = vmatprep.mubr.f32.mxu0 0.0
    %2174 = vmatmul.mubr.f32.gmra.mrb[0].mxu0 %v1624
    %v2175 = vpop.f32.mrb[0].mxu0
    %v2176 = vadd.f32 0.0, %v2175
    %v2177 = vpop.f32.mrb[0].mxu0
    %2178 = vmatprep.mubr.f32.mxu0 0.0
    %2179 = vmatmul.mubr.f32.gmra.mrb[0].mxu0 %v1627
    %v2180 = vpop.f32.mrb[0].mxu0
    %v2181 = vadd.f32 0.0, %v2180
    %v2182 = vpop.f32.mrb[0].mxu0
    %2183 = vdwg.mxu0
    %s2184 = scalar_lea.vmem %s3, 224
    %v2185 = vld [vmem:[%s2184] sm:$0xff]
    %v2186 = vld [vmem:[%s2184 + $0x8] sm:$0xff]
    %v2187 = vld [vmem:[%s2184 + $0x10] sm:$0xff]
    %v2188 = vld [vmem:[%s2184 + $0x18] sm:$0xff]
    %2189 = vmatprep.subr.mxu0 0.0
    %2190 = vmatpush1.msra.mxu0 %v2185
    %2191 = vmatprep.subr.mxu0 0.0
    %2192 = vmatpush1.msra.mxu0 %v2186
    %2193 = vmatprep.subr.mxu0 0.0
    %2194 = vmatpush1.msra.mxu0 %v2187
    %2195 = vmatprep.subr.mxu0 0.0
    %2196 = vmatpush1.msra.mxu0 %v2188
    %2197 = vmatprep.subr.mxu0 0.0
    %2198 = vmatpush1.msra.mxu0 0.0
    %2199 = vmatprep.subr.mxu0 0.0
    %2200 = vmatpush1.msra.mxu0 0.0
    %2201 = vmatprep.subr.mxu0 0.0
    %2202 = vmatpush1.msra.mxu0 0.0
    %2203 = vmatprep.subr.mxu0 0.0
    %2204 = vmatpush1.msra.mxu0 0.0
    %2205 = vmatprep.subr.mxu0 0.0
    %2206 = vmatpush1.msra.mxu0 0.0
    %2207 = vmatprep.subr.mxu0 0.0
    %2208 = vmatpush1.msra.mxu0 0.0
    %2209 = vmatprep.subr.mxu0 0.0
    %2210 = vmatpush1.msra.mxu0 0.0
    %2211 = vmatprep.subr.mxu0 0.0
    %2212 = vmatpush1.msra.mxu0 0.0
    %2213 = vmatprep.subr.mxu0 0.0
    %2214 = vmatpush1.msra.mxu0 0.0
    %2215 = vmatprep.subr.mxu0 0.0
    %2216 = vmatpush1.msra.mxu0 0.0
    %2217 = vmatprep.subr.mxu0 0.0
    %2218 = vmatpush1.msra.mxu0 0.0
    %2219 = vmatprep.subr.mxu0 0.0
    %2220 = vmatpush1.msra.mxu0 0.0
    %2221 = vmatprep.subr.mxu0 0.0
    %2222 = vmatpush1.msra.mxu0 0.0
    %2223 = vmatprep.subr.mxu0 0.0
    %2224 = vmatpush1.msra.mxu0 0.0
    %2225 = vmatprep.subr.mxu0 0.0
    %2226 = vmatpush1.msra.mxu0 0.0
    %2227 = vmatprep.subr.mxu0 0.0
    %2228 = vmatpush1.msra.mxu0 0.0
    %2229 = vmatprep.subr.mxu0 0.0
    %2230 = vmatpush1.msra.mxu0 0.0
    %2231 = vmatprep.subr.mxu0 0.0
    %2232 = vmatpush1.msra.mxu0 0.0
    %2233 = vmatprep.subr.mxu0 0.0
    %2234 = vmatpush1.msra.mxu0 0.0
    %2235 = vmatprep.subr.mxu0 0.0
    %2236 = vmatpush1.msra.mxu0 0.0
    %2237 = vmatprep.subr.mxu0 0.0
    %2238 = vmatpush1.msra.mxu0 0.0
    %2239 = vmatprep.subr.mxu0 0.0
    %2240 = vmatpush1.msra.mxu0 0.0
    %2241 = vmatprep.subr.mxu0 0.0
    %2242 = vmatpush1.msra.mxu0 0.0
    %2243 = vmatprep.subr.mxu0 0.0
    %2244 = vmatpush1.msra.mxu0 0.0
    %2245 = vmatprep.subr.mxu0 0.0
    %2246 = vmatpush1.msra.mxu0 0.0
    %2247 = vmatprep.subr.mxu0 0.0
    %2248 = vmatpush1.msra.mxu0 0.0
    %2249 = vmatprep.subr.mxu0 0.0
    %2250 = vmatpush1.msra.mxu0 0.0
    %2251 = vmatprep.subr.mxu0 0.0
    %2252 = vmatpush1.msra.mxu0 0.0
    %2253 = vmatprep.mubr.f32.mxu0 0.0
    %2254 = vmatmul.mubr.f32.gmra.mrb[0].mxu0 %v1624
    %v2255 = vpop.f32.mrb[0].mxu0
    %v2256 = vadd.f32 0.0, %v2255
    %v2257 = vpop.f32.mrb[0].mxu0
    %2258 = vmatprep.mubr.f32.mxu0 0.0
    %2259 = vmatmul.mubr.f32.gmra.mrb[0].mxu0 %v1627
    %v2260 = vpop.f32.mrb[0].mxu0
    %v2261 = vadd.f32 0.0, %v2260
    %v2262 = vpop.f32.mrb[0].mxu0
    %2263 = vdwg.mxu0
    %s2264 = scalar_lea.vmem %s3, 256
    %v2265 = vld [vmem:[%s2264] sm:$0xff]
    %v2266 = vld [vmem:[%s2264 + $0x8] sm:$0xff]
    %v2267 = vld [vmem:[%s2264 + $0x10] sm:$0xff]
    %v2268 = vld [vmem:[%s2264 + $0x18] sm:$0xff]
    %2269 = vmatprep.subr.mxu0 0.0
    %2270 = vmatpush1.msra.mxu0 %v2265
    %2271 = vmatprep.subr.mxu0 0.0
    %2272 = vmatpush1.msra.mxu0 %v2266
    %2273 = vmatprep.subr.mxu0 0.0
    %2274 = vmatpush1.msra.mxu0 %v2267
    %2275 = vmatprep.subr.mxu0 0.0
    %2276 = vmatpush1.msra.mxu0 %v2268
    %2277 = vmatprep.subr.mxu0 0.0
    %2278 = vmatpush1.msra.mxu0 0.0
    %2279 = vmatprep.subr.mxu0 0.0
    %2280 = vmatpush1.msra.mxu0 0.0
    %2281 = vmatprep.subr.mxu0 0.0
    %2282 = vmatpush1.msra.mxu0 0.0
    %2283 = vmatprep.subr.mxu0 0.0
    %2284 = vmatpush1.msra.mxu0 0.0
    %2285 = vmatprep.subr.mxu0 0.0
    %2286 = vmatpush1.msra.mxu0 0.0
    %2287 = vmatprep.subr.mxu0 0.0
    %2288 = vmatpush1.msra.mxu0 0.0
    %2289 = vmatprep.subr.mxu0 0.0
    %2290 = vmatpush1.msra.mxu0 0.0
    %2291 = vmatprep.subr.mxu0 0.0
    %2292 = vmatpush1.msra.mxu0 0.0
    %2293 = vmatprep.subr.mxu0 0.0
    %2294 = vmatpush1.msra.mxu0 0.0
    %2295 = vmatprep.subr.mxu0 0.0
    %2296 = vmatpush1.msra.mxu0 0.0
    %2297 = vmatprep.subr.mxu0 0.0
    %2298 = vmatpush1.msra.mxu0 0.0
    %2299 = vmatprep.subr.mxu0 0.0
    %2300 = vmatpush1.msra.mxu0 0.0
    %2301 = vmatprep.subr.mxu0 0.0
    %2302 = vmatpush1.msra.mxu0 0.0
    %2303 = vmatprep.subr.mxu0 0.0
    %2304 = vmatpush1.msra.mxu0 0.0
    %2305 = vmatprep.subr.mxu0 0.0
    %2306 = vmatpush1.msra.mxu0 0.0
    %2307 = vmatprep.subr.mxu0 0.0
    %2308 = vmatpush1.msra.mxu0 0.0
    %2309 = vmatprep.subr.mxu0 0.0
    %2310 = vmatpush1.msra.mxu0 0.0
    %2311 = vmatprep.subr.mxu0 0.0
    %2312 = vmatpush1.msra.mxu0 0.0
    %2313 = vmatprep.subr.mxu0 0.0
    %2314 = vmatpush1.msra.mxu0 0.0
    %2315 = vmatprep.subr.mxu0 0.0
    %2316 = vmatpush1.msra.mxu0 0.0
    %2317 = vmatprep.subr.mxu0 0.0
    %2318 = vmatpush1.msra.mxu0 0.0
    %2319 = vmatprep.subr.mxu0 0.0
    %2320 = vmatpush1.msra.mxu0 0.0
    %2321 = vmatprep.subr.mxu0 0.0
    %2322 = vmatpush1.msra.mxu0 0.0
    %2323 = vmatprep.subr.mxu0 0.0
    %2324 = vmatpush1.msra.mxu0 0.0
    %2325 = vmatprep.subr.mxu0 0.0
    %2326 = vmatpush1.msra.mxu0 0.0
    %2327 = vmatprep.subr.mxu0 0.0
    %2328 = vmatpush1.msra.mxu0 0.0
    %2329 = vmatprep.subr.mxu0 0.0
    %2330 = vmatpush1.msra.mxu0 0.0
    %2331 = vmatprep.subr.mxu0 0.0
    %2332 = vmatpush1.msra.mxu0 0.0
    %2333 = vmatprep.mubr.f32.mxu0 0.0
    %2334 = vmatmul.mubr.f32.gmra.mrb[0].mxu0 %v1624
    %v2335 = vpop.f32.mrb[0].mxu0
    %v2336 = vadd.f32 0.0, %v2335
    %v2337 = vpop.f32.mrb[0].mxu0
    %2338 = vmatprep.mubr.f32.mxu0 0.0
    %2339 = vmatmul.mubr.f32.gmra.mrb[0].mxu0 %v1627
    %v2340 = vpop.f32.mrb[0].mxu0
    %v2341 = vadd.f32 0.0, %v2340
    %v2342 = vpop.f32.mrb[0].mxu0
    %2343 = vdwg.mxu0
    %s2344 = scalar_lea.vmem %s3, 288
    %v2345 = vld [vmem:[%s2344] sm:$0xff]
    %v2346 = vld [vmem:[%s2344 + $0x8] sm:$0xff]
    %v2347 = vld [vmem:[%s2344 + $0x10] sm:$0xff]
    %v2348 = vld [vmem:[%s2344 + $0x18] sm:$0xff]
    %2349 = vmatprep.subr.mxu0 0.0
    %2350 = vmatpush1.msra.mxu0 %v2345
    %2351 = vmatprep.subr.mxu0 0.0
    %2352 = vmatpush1.msra.mxu0 %v2346
    %2353 = vmatprep.subr.mxu0 0.0
    %2354 = vmatpush1.msra.mxu0 %v2347
    %2355 = vmatprep.subr.mxu0 0.0
    %2356 = vmatpush1.msra.mxu0 %v2348
    %2357 = vmatprep.subr.mxu0 0.0
    %2358 = vmatpush1.msra.mxu0 0.0
    %2359 = vmatprep.subr.mxu0 0.0
    %2360 = vmatpush1.msra.mxu0 0.0
    %2361 = vmatprep.subr.mxu0 0.0
    %2362 = vmatpush1.msra.mxu0 0.0
    %2363 = vmatprep.subr.mxu0 0.0
    %2364 = vmatpush1.msra.mxu0 0.0
    %2365 = vmatprep.subr.mxu0 0.0
    %2366 = vmatpush1.msra.mxu0 0.0
    %2367 = vmatprep.subr.mxu0 0.0
    %2368 = vmatpush1.msra.mxu0 0.0
    %2369 = vmatprep.subr.mxu0 0.0
    %2370 = vmatpush1.msra.mxu0 0.0
    %2371 = vmatprep.subr.mxu0 0.0
    %2372 = vmatpush1.msra.mxu0 0.0
    %2373 = vmatprep.subr.mxu0 0.0
    %2374 = vmatpush1.msra.mxu0 0.0
    %2375 = vmatprep.subr.mxu0 0.0
    %2376 = vmatpush1.msra.mxu0 0.0
    %2377 = vmatprep.subr.mxu0 0.0
    %2378 = vmatpush1.msra.mxu0 0.0
    %2379 = vmatprep.subr.mxu0 0.0
    %2380 = vmatpush1.msra.mxu0 0.0
    %2381 = vmatprep.subr.mxu0 0.0
    %2382 = vmatpush1.msra.mxu0 0.0
    %2383 = vmatprep.subr.mxu0 0.0
    %2384 = vmatpush1.msra.mxu0 0.0
    %2385 = vmatprep.subr.mxu0 0.0
    %2386 = vmatpush1.msra.mxu0 0.0
    %2387 = vmatprep.subr.mxu0 0.0
    %2388 = vmatpush1.msra.mxu0 0.0
    %2389 = vmatprep.subr.mxu0 0.0
    %2390 = vmatpush1.msra.mxu0 0.0
    %2391 = vmatprep.subr.mxu0 0.0
    %2392 = vmatpush1.msra.mxu0 0.0
    %2393 = vmatprep.subr.mxu0 0.0
    %2394 = vmatpush1.msra.mxu0 0.0
    %2395 = vmatprep.subr.mxu0 0.0
    %2396 = vmatpush1.msra.mxu0 0.0
    %2397 = vmatprep.subr.mxu0 0.0
    %2398 = vmatpush1.msra.mxu0 0.0
    %2399 = vmatprep.subr.mxu0 0.0
    %2400 = vmatpush1.msra.mxu0 0.0
    %2401 = vmatprep.subr.mxu0 0.0
    %2402 = vmatpush1.msra.mxu0 0.0
    %2403 = vmatprep.subr.mxu0 0.0
    %2404 = vmatpush1.msra.mxu0 0.0
    %2405 = vmatprep.subr.mxu0 0.0
    %2406 = vmatpush1.msra.mxu0 0.0
    %2407 = vmatprep.subr.mxu0 0.0
    %2408 = vmatpush1.msra.mxu0 0.0
    %2409 = vmatprep.subr.mxu0 0.0
    %2410 = vmatpush1.msra.mxu0 0.0
    %2411 = vmatprep.subr.mxu0 0.0
    %2412 = vmatpush1.msra.mxu0 0.0
    %2413 = vmatprep.mubr.f32.mxu0 0.0
    %2414 = vmatmul.mubr.f32.gmra.mrb[0].mxu0 %v1624
    %v2415 = vpop.f32.mrb[0].mxu0
    %v2416 = vadd.f32 0.0, %v2415
    %v2417 = vpop.f32.mrb[0].mxu0
    %2418 = vmatprep.mubr.f32.mxu0 0.0
    %2419 = vmatmul.mubr.f32.gmra.mrb[0].mxu0 %v1627
    %v2420 = vpop.f32.mrb[0].mxu0
    %v2421 = vadd.f32 0.0, %v2420
    %v2422 = vpop.f32.mrb[0].mxu0
    %2423 = vdwg.mxu0
    %s2424 = scalar_lea.vmem %s3, 320
    %v2425 = vld [vmem:[%s2424] sm:$0xff]
    %v2426 = vld [vmem:[%s2424 + $0x8] sm:$0xff]
    %v2427 = vld [vmem:[%s2424 + $0x10] sm:$0xff]
    %v2428 = vld [vmem:[%s2424 + $0x18] sm:$0xff]
    %2429 = vmatprep.subr.mxu0 0.0
    %2430 = vmatpush1.msra.mxu0 %v2425
    %2431 = vmatprep.subr.mxu0 0.0
    %2432 = vmatpush1.msra.mxu0 %v2426
    %2433 = vmatprep.subr.mxu0 0.0
    %2434 = vmatpush1.msra.mxu0 %v2427
    %2435 = vmatprep.subr.mxu0 0.0
    %2436 = vmatpush1.msra.mxu0 %v2428
    %2437 = vmatprep.subr.mxu0 0.0
    %2438 = vmatpush1.msra.mxu0 0.0
    %2439 = vmatprep.subr.mxu0 0.0
    %2440 = vmatpush1.msra.mxu0 0.0
    %2441 = vmatprep.subr.mxu0 0.0
    %2442 = vmatpush1.msra.mxu0 0.0
    %2443 = vmatprep.subr.mxu0 0.0
    %2444 = vmatpush1.msra.mxu0 0.0
    %2445 = vmatprep.subr.mxu0 0.0
    %2446 = vmatpush1.msra.mxu0 0.0
    %2447 = vmatprep.subr.mxu0 0.0
    %2448 = vmatpush1.msra.mxu0 0.0
    %2449 = vmatprep.subr.mxu0 0.0
    %2450 = vmatpush1.msra.mxu0 0.0
    %2451 = vmatprep.subr.mxu0 0.0
    %2452 = vmatpush1.msra.mxu0 0.0
    %2453 = vmatprep.subr.mxu0 0.0
    %2454 = vmatpush1.msra.mxu0 0.0
    %2455 = vmatprep.subr.mxu0 0.0
    %2456 = vmatpush1.msra.mxu0 0.0
    %2457 = vmatprep.subr.mxu0 0.0
    %2458 = vmatpush1.msra.mxu0 0.0
    %2459 = vmatprep.subr.mxu0 0.0
    %2460 = vmatpush1.msra.mxu0 0.0
    %2461 = vmatprep.subr.mxu0 0.0
    %2462 = vmatpush1.msra.mxu0 0.0
    %2463 = vmatprep.subr.mxu0 0.0
    %2464 = vmatpush1.msra.mxu0 0.0
    %2465 = vmatprep.subr.mxu0 0.0
    %2466 = vmatpush1.msra.mxu0 0.0
    %2467 = vmatprep.subr.mxu0 0.0
    %2468 = vmatpush1.msra.mxu0 0.0
    %2469 = vmatprep.subr.mxu0 0.0
    %2470 = vmatpush1.msra.mxu0 0.0
    %2471 = vmatprep.subr.mxu0 0.0
    %2472 = vmatpush1.msra.mxu0 0.0
    %2473 = vmatprep.subr.mxu0 0.0
    %2474 = vmatpush1.msra.mxu0 0.0
    %2475 = vmatprep.subr.mxu0 0.0
    %2476 = vmatpush1.msra.mxu0 0.0
    %2477 = vmatprep.subr.mxu0 0.0
    %2478 = vmatpush1.msra.mxu0 0.0
    %2479 = vmatprep.subr.mxu0 0.0
    %2480 = vmatpush1.msra.mxu0 0.0
    %2481 = vmatprep.subr.mxu0 0.0
    %2482 = vmatpush1.msra.mxu0 0.0
    %2483 = vmatprep.subr.mxu0 0.0
    %2484 = vmatpush1.msra.mxu0 0.0
    %2485 = vmatprep.subr.mxu0 0.0
    %2486 = vmatpush1.msra.mxu0 0.0
    %2487 = vmatprep.subr.mxu0 0.0
    %2488 = vmatpush1.msra.mxu0 0.0
    %2489 = vmatprep.subr.mxu0 0.0
    %2490 = vmatpush1.msra.mxu0 0.0
    %2491 = vmatprep.subr.mxu0 0.0
    %2492 = vmatpush1.msra.mxu0 0.0
    %2493 = vmatprep.mubr.f32.mxu0 0.0
    %2494 = vmatmul.mubr.f32.gmra.mrb[0].mxu0 %v1624
    %v2495 = vpop.f32.mrb[0].mxu0
    %v2496 = vadd.f32 0.0, %v2495
    %v2497 = vpop.f32.mrb[0].mxu0
    %2498 = vmatprep.mubr.f32.mxu0 0.0
    %2499 = vmatmul.mubr.f32.gmra.mrb[0].mxu0 %v1627
    %v2500 = vpop.f32.mrb[0].mxu0
    %v2501 = vadd.f32 0.0, %v2500
    %v2502 = vpop.f32.mrb[0].mxu0
    %2503 = vdwg.mxu0
    %s2504 = scalar_lea.vmem %s3, 352
    %v2505 = vld [vmem:[%s2504] sm:$0xff]
    %v2506 = vld [vmem:[%s2504 + $0x8] sm:$0xff]
    %v2507 = vld [vmem:[%s2504 + $0x10] sm:$0xff]
    %v2508 = vld [vmem:[%s2504 + $0x18] sm:$0xff]
    %2509 = vmatprep.subr.mxu0 0.0
    %2510 = vmatpush1.msra.mxu0 %v2505
    %2511 = vmatprep.subr.mxu0 0.0
    %2512 = vmatpush1.msra.mxu0 %v2506
    %2513 = vmatprep.subr.mxu0 0.0
    %2514 = vmatpush1.msra.mxu0 %v2507
    %2515 = vmatprep.subr.mxu0 0.0
    %2516 = vmatpush1.msra.mxu0 %v2508
    %2517 = vmatprep.subr.mxu0 0.0
    %2518 = vmatpush1.msra.mxu0 0.0
    %2519 = vmatprep.subr.mxu0 0.0
    %2520 = vmatpush1.msra.mxu0 0.0
    %2521 = vmatprep.subr.mxu0 0.0
    %2522 = vmatpush1.msra.mxu0 0.0
    %2523 = vmatprep.subr.mxu0 0.0
    %2524 = vmatpush1.msra.mxu0 0.0
    %2525 = vmatprep.subr.mxu0 0.0
    %2526 = vmatpush1.msra.mxu0 0.0
    %2527 = vmatprep.subr.mxu0 0.0
    %2528 = vmatpush1.msra.mxu0 0.0
    %2529 = vmatprep.subr.mxu0 0.0
    %2530 = vmatpush1.msra.mxu0 0.0
    %2531 = vmatprep.subr.mxu0 0.0
    %2532 = vmatpush1.msra.mxu0 0.0
    %2533 = vmatprep.subr.mxu0 0.0
    %2534 = vmatpush1.msra.mxu0 0.0
    %2535 = vmatprep.subr.mxu0 0.0
    %2536 = vmatpush1.msra.mxu0 0.0
    %2537 = vmatprep.subr.mxu0 0.0
    %2538 = vmatpush1.msra.mxu0 0.0
    %2539 = vmatprep.subr.mxu0 0.0
    %2540 = vmatpush1.msra.mxu0 0.0
    %2541 = vmatprep.subr.mxu0 0.0
    %2542 = vmatpush1.msra.mxu0 0.0
    %2543 = vmatprep.subr.mxu0 0.0
    %2544 = vmatpush1.msra.mxu0 0.0
    %2545 = vmatprep.subr.mxu0 0.0
    %2546 = vmatpush1.msra.mxu0 0.0
    %2547 = vmatprep.subr.mxu0 0.0
    %2548 = vmatpush1.msra.mxu0 0.0
    %2549 = vmatprep.subr.mxu0 0.0
    %2550 = vmatpush1.msra.mxu0 0.0
    %2551 = vmatprep.subr.mxu0 0.0
    %2552 = vmatpush1.msra.mxu0 0.0
    %2553 = vmatprep.subr.mxu0 0.0
    %2554 = vmatpush1.msra.mxu0 0.0
    %2555 = vmatprep.subr.mxu0 0.0
    %2556 = vmatpush1.msra.mxu0 0.0
    %2557 = vmatprep.subr.mxu0 0.0
    %2558 = vmatpush1.msra.mxu0 0.0
    %2559 = vmatprep.subr.mxu0 0.0
    %2560 = vmatpush1.msra.mxu0 0.0
    %2561 = vmatprep.subr.mxu0 0.0
    %2562 = vmatpush1.msra.mxu0 0.0
    %2563 = vmatprep.subr.mxu0 0.0
    %2564 = vmatpush1.msra.mxu0 0.0
    %2565 = vmatprep.subr.mxu0 0.0
    %2566 = vmatpush1.msra.mxu0 0.0
    %2567 = vmatprep.subr.mxu0 0.0
    %2568 = vmatpush1.msra.mxu0 0.0
    %2569 = vmatprep.subr.mxu0 0.0
    %2570 = vmatpush1.msra.mxu0 0.0
    %2571 = vmatprep.subr.mxu0 0.0
    %2572 = vmatpush1.msra.mxu0 0.0
    %2573 = vmatprep.mubr.f32.mxu0 0.0
    %2574 = vmatmul.mubr.f32.gmra.mrb[0].mxu0 %v1624
    %v2575 = vpop.f32.mrb[0].mxu0
    %v2576 = vadd.f32 0.0, %v2575
    %v2577 = vpop.f32.mrb[0].mxu0
    %2578 = vmatprep.mubr.f32.mxu0 0.0
    %2579 = vmatmul.mubr.f32.gmra.mrb[0].mxu0 %v1627
    %v2580 = vpop.f32.mrb[0].mxu0
    %v2581 = vadd.f32 0.0, %v2580
    %v2582 = vpop.f32.mrb[0].mxu0
    %2583 = vdwg.mxu0
    %s2584 = scalar_lea.vmem %s3, 384
    %v2585 = vld [vmem:[%s2584] sm:$0xff]
    %v2586 = vld [vmem:[%s2584 + $0x8] sm:$0xff]
    %v2587 = vld [vmem:[%s2584 + $0x10] sm:$0xff]
    %v2588 = vld [vmem:[%s2584 + $0x18] sm:$0xff]
    %2589 = vmatprep.subr.mxu0 0.0
    %2590 = vmatpush1.msra.mxu0 %v2585
    %2591 = vmatprep.subr.mxu0 0.0
    %2592 = vmatpush1.msra.mxu0 %v2586
    %2593 = vmatprep.subr.mxu0 0.0
    %2594 = vmatpush1.msra.mxu0 %v2587
    %2595 = vmatprep.subr.mxu0 0.0
    %2596 = vmatpush1.msra.mxu0 %v2588
    %2597 = vmatprep.subr.mxu0 0.0
    %2598 = vmatpush1.msra.mxu0 0.0
    %2599 = vmatprep.subr.mxu0 0.0
    %2600 = vmatpush1.msra.mxu0 0.0
    %2601 = vmatprep.subr.mxu0 0.0
    %2602 = vmatpush1.msra.mxu0 0.0
    %2603 = vmatprep.subr.mxu0 0.0
    %2604 = vmatpush1.msra.mxu0 0.0
    %2605 = vmatprep.subr.mxu0 0.0
    %2606 = vmatpush1.msra.mxu0 0.0
    %2607 = vmatprep.subr.mxu0 0.0
    %2608 = vmatpush1.msra.mxu0 0.0
    %2609 = vmatprep.subr.mxu0 0.0
    %2610 = vmatpush1.msra.mxu0 0.0
    %2611 = vmatprep.subr.mxu0 0.0
    %2612 = vmatpush1.msra.mxu0 0.0
    %2613 = vmatprep.subr.mxu0 0.0
    %2614 = vmatpush1.msra.mxu0 0.0
    %2615 = vmatprep.subr.mxu0 0.0
    %2616 = vmatpush1.msra.mxu0 0.0
    %2617 = vmatprep.subr.mxu0 0.0
    %2618 = vmatpush1.msra.mxu0 0.0
    %2619 = vmatprep.subr.mxu0 0.0
    %2620 = vmatpush1.msra.mxu0 0.0
    %2621 = vmatprep.subr.mxu0 0.0
    %2622 = vmatpush1.msra.mxu0 0.0
    %2623 = vmatprep.subr.mxu0 0.0
    %2624 = vmatpush1.msra.mxu0 0.0
    %2625 = vmatprep.subr.mxu0 0.0
    %2626 = vmatpush1.msra.mxu0 0.0
    %2627 = vmatprep.subr.mxu0 0.0
    %2628 = vmatpush1.msra.mxu0 0.0
    %2629 = vmatprep.subr.mxu0 0.0
    %2630 = vmatpush1.msra.mxu0 0.0
    %2631 = vmatprep.subr.mxu0 0.0
    %2632 = vmatpush1.msra.mxu0 0.0
    %2633 = vmatprep.subr.mxu0 0.0
    %2634 = vmatpush1.msra.mxu0 0.0
    %2635 = vmatprep.subr.mxu0 0.0
    %2636 = vmatpush1.msra.mxu0 0.0
    %2637 = vmatprep.subr.mxu0 0.0
    %2638 = vmatpush1.msra.mxu0 0.0
    %2639 = vmatprep.subr.mxu0 0.0
    %2640 = vmatpush1.msra.mxu0 0.0
    %2641 = vmatprep.subr.mxu0 0.0
    %2642 = vmatpush1.msra.mxu0 0.0
    %2643 = vmatprep.subr.mxu0 0.0
    %2644 = vmatpush1.msra.mxu0 0.0
    %2645 = vmatprep.subr.mxu0 0.0
    %2646 = vmatpush1.msra.mxu0 0.0
    %2647 = vmatprep.subr.mxu0 0.0
    %2648 = vmatpush1.msra.mxu0 0.0
    %2649 = vmatprep.subr.mxu0 0.0
    %2650 = vmatpush1.msra.mxu0 0.0
    %2651 = vmatprep.subr.mxu0 0.0
    %2652 = vmatpush1.msra.mxu0 0.0
    %2653 = vmatprep.mubr.f32.mxu0 0.0
    %2654 = vmatmul.mubr.f32.gmra.mrb[0].mxu0 %v1624
    %v2655 = vpop.f32.mrb[0].mxu0
    %v2656 = vadd.f32 0.0, %v2655
    %v2657 = vpop.f32.mrb[0].mxu0
    %2658 = vmatprep.mubr.f32.mxu0 0.0
    %2659 = vmatmul.mubr.f32.gmra.mrb[0].mxu0 %v1627
    %v2660 = vpop.f32.mrb[0].mxu0
    %v2661 = vadd.f32 0.0, %v2660
    %v2662 = vpop.f32.mrb[0].mxu0
    %2663 = vdwg.mxu0
    %s2664 = scalar_lea.vmem %s3, 416
    %v2665 = vld [vmem:[%s2664] sm:$0xff]
    %v2666 = vld [vmem:[%s2664 + $0x8] sm:$0xff]
    %v2667 = vld [vmem:[%s2664 + $0x10] sm:$0xff]
    %v2668 = vld [vmem:[%s2664 + $0x18] sm:$0xff]
    %2669 = vmatprep.subr.mxu0 0.0
    %2670 = vmatpush1.msra.mxu0 %v2665
    %2671 = vmatprep.subr.mxu0 0.0
    %2672 = vmatpush1.msra.mxu0 %v2666
    %2673 = vmatprep.subr.mxu0 0.0
    %2674 = vmatpush1.msra.mxu0 %v2667
    %2675 = vmatprep.subr.mxu0 0.0
    %2676 = vmatpush1.msra.mxu0 %v2668
    %2677 = vmatprep.subr.mxu0 0.0
    %2678 = vmatpush1.msra.mxu0 0.0
    %2679 = vmatprep.subr.mxu0 0.0
    %2680 = vmatpush1.msra.mxu0 0.0
    %2681 = vmatprep.subr.mxu0 0.0
    %2682 = vmatpush1.msra.mxu0 0.0
    %2683 = vmatprep.subr.mxu0 0.0
    %2684 = vmatpush1.msra.mxu0 0.0
    %2685 = vmatprep.subr.mxu0 0.0
    %2686 = vmatpush1.msra.mxu0 0.0
    %2687 = vmatprep.subr.mxu0 0.0
    %2688 = vmatpush1.msra.mxu0 0.0
    %2689 = vmatprep.subr.mxu0 0.0
    %2690 = vmatpush1.msra.mxu0 0.0
    %2691 = vmatprep.subr.mxu0 0.0
    %2692 = vmatpush1.msra.mxu0 0.0
    %2693 = vmatprep.subr.mxu0 0.0
    %2694 = vmatpush1.msra.mxu0 0.0
    %2695 = vmatprep.subr.mxu0 0.0
    %2696 = vmatpush1.msra.mxu0 0.0
    %2697 = vmatprep.subr.mxu0 0.0
    %2698 = vmatpush1.msra.mxu0 0.0
    %2699 = vmatprep.subr.mxu0 0.0
    %2700 = vmatpush1.msra.mxu0 0.0
    %2701 = vmatprep.subr.mxu0 0.0
    %2702 = vmatpush1.msra.mxu0 0.0
    %2703 = vmatprep.subr.mxu0 0.0
    %2704 = vmatpush1.msra.mxu0 0.0
    %2705 = vmatprep.subr.mxu0 0.0
    %2706 = vmatpush1.msra.mxu0 0.0
    %2707 = vmatprep.subr.mxu0 0.0
    %2708 = vmatpush1.msra.mxu0 0.0
    %2709 = vmatprep.subr.mxu0 0.0
    %2710 = vmatpush1.msra.mxu0 0.0
    %2711 = vmatprep.subr.mxu0 0.0
    %2712 = vmatpush1.msra.mxu0 0.0
    %2713 = vmatprep.subr.mxu0 0.0
    %2714 = vmatpush1.msra.mxu0 0.0
    %2715 = vmatprep.subr.mxu0 0.0
    %2716 = vmatpush1.msra.mxu0 0.0
    %2717 = vmatprep.subr.mxu0 0.0
    %2718 = vmatpush1.msra.mxu0 0.0
    %2719 = vmatprep.subr.mxu0 0.0
    %2720 = vmatpush1.msra.mxu0 0.0
    %2721 = vmatprep.subr.mxu0 0.0
    %2722 = vmatpush1.msra.mxu0 0.0
    %2723 = vmatprep.subr.mxu0 0.0
    %2724 = vmatpush1.msra.mxu0 0.0
    %2725 = vmatprep.subr.mxu0 0.0
    %2726 = vmatpush1.msra.mxu0 0.0
    %2727 = vmatprep.subr.mxu0 0.0
    %2728 = vmatpush1.msra.mxu0 0.0
    %2729 = vmatprep.subr.mxu0 0.0
    %2730 = vmatpush1.msra.mxu0 0.0
    %2731 = vmatprep.subr.mxu0 0.0
    %2732 = vmatpush1.msra.mxu0 0.0
    %2733 = vmatprep.mubr.f32.mxu0 0.0
    %2734 = vmatmul.mubr.f32.gmra.mrb[0].mxu0 %v1624
    %v2735 = vpop.f32.mrb[0].mxu0
    %v2736 = vadd.f32 0.0, %v2735
    %v2737 = vpop.f32.mrb[0].mxu0
    %2738 = vmatprep.mubr.f32.mxu0 0.0
    %2739 = vmatmul.mubr.f32.gmra.mrb[0].mxu0 %v1627
    %v2740 = vpop.f32.mrb[0].mxu0
    %v2741 = vadd.f32 0.0, %v2740
    %v2742 = vpop.f32.mrb[0].mxu0
    %2743 = vdwg.mxu0
    %s2744 = scalar_lea.vmem %s3, 448
    %v2745 = vld [vmem:[%s2744] sm:$0xff]
    %v2746 = vld [vmem:[%s2744 + $0x8] sm:$0xff]
    %v2747 = vld [vmem:[%s2744 + $0x10] sm:$0xff]
    %v2748 = vld [vmem:[%s2744 + $0x18] sm:$0xff]
    %2749 = vmatprep.subr.mxu0 0.0
    %2750 = vmatpush1.msra.mxu0 %v2745
    %2751 = vmatprep.subr.mxu0 0.0
    %2752 = vmatpush1.msra.mxu0 %v2746
    %2753 = vmatprep.subr.mxu0 0.0
    %2754 = vmatpush1.msra.mxu0 %v2747
    %2755 = vmatprep.subr.mxu0 0.0
    %2756 = vmatpush1.msra.mxu0 %v2748
    %2757 = vmatprep.subr.mxu0 0.0
    %2758 = vmatpush1.msra.mxu0 0.0
    %2759 = vmatprep.subr.mxu0 0.0
    %2760 = vmatpush1.msra.mxu0 0.0
    %2761 = vmatprep.subr.mxu0 0.0
    %2762 = vmatpush1.msra.mxu0 0.0
    %2763 = vmatprep.subr.mxu0 0.0
    %2764 = vmatpush1.msra.mxu0 0.0
    %2765 = vmatprep.subr.mxu0 0.0
    %2766 = vmatpush1.msra.mxu0 0.0
    %2767 = vmatprep.subr.mxu0 0.0
    %2768 = vmatpush1.msra.mxu0 0.0
    %2769 = vmatprep.subr.mxu0 0.0
    %2770 = vmatpush1.msra.mxu0 0.0
    %2771 = vmatprep.subr.mxu0 0.0
    %2772 = vmatpush1.msra.mxu0 0.0
    %2773 = vmatprep.subr.mxu0 0.0
    %2774 = vmatpush1.msra.mxu0 0.0
    %2775 = vmatprep.subr.mxu0 0.0
    %2776 = vmatpush1.msra.mxu0 0.0
    %2777 = vmatprep.subr.mxu0 0.0
    %2778 = vmatpush1.msra.mxu0 0.0
    %2779 = vmatprep.subr.mxu0 0.0
    %2780 = vmatpush1.msra.mxu0 0.0
    %2781 = vmatprep.subr.mxu0 0.0
    %2782 = vmatpush1.msra.mxu0 0.0
    %2783 = vmatprep.subr.mxu0 0.0
    %2784 = vmatpush1.msra.mxu0 0.0
    %2785 = vmatprep.subr.mxu0 0.0
    %2786 = vmatpush1.msra.mxu0 0.0
    %2787 = vmatprep.subr.mxu0 0.0
    %2788 = vmatpush1.msra.mxu0 0.0
    %2789 = vmatprep.subr.mxu0 0.0
    %2790 = vmatpush1.msra.mxu0 0.0
    %2791 = vmatprep.subr.mxu0 0.0
    %2792 = vmatpush1.msra.mxu0 0.0
    %2793 = vmatprep.subr.mxu0 0.0
    %2794 = vmatpush1.msra.mxu0 0.0
    %2795 = vmatprep.subr.mxu0 0.0
    %2796 = vmatpush1.msra.mxu0 0.0
    %2797 = vmatprep.subr.mxu0 0.0
    %2798 = vmatpush1.msra.mxu0 0.0
    %2799 = vmatprep.subr.mxu0 0.0
    %2800 = vmatpush1.msra.mxu0 0.0
    %2801 = vmatprep.subr.mxu0 0.0
    %2802 = vmatpush1.msra.mxu0 0.0
    %2803 = vmatprep.subr.mxu0 0.0
    %2804 = vmatpush1.msra.mxu0 0.0
    %2805 = vmatprep.subr.mxu0 0.0
    %2806 = vmatpush1.msra.mxu0 0.0
    %2807 = vmatprep.subr.mxu0 0.0
    %2808 = vmatpush1.msra.mxu0 0.0
    %2809 = vmatprep.subr.mxu0 0.0
    %2810 = vmatpush1.msra.mxu0 0.0
    %2811 = vmatprep.subr.mxu0 0.0
    %2812 = vmatpush1.msra.mxu0 0.0
    %2813 = vmatprep.mubr.f32.mxu0 0.0
    %2814 = vmatmul.mubr.f32.gmra.mrb[0].mxu0 %v1624
    %v2815 = vpop.f32.mrb[0].mxu0
    %v2816 = vadd.f32 0.0, %v2815
    %v2817 = vpop.f32.mrb[0].mxu0
    %2818 = vmatprep.mubr.f32.mxu0 0.0
    %2819 = vmatmul.mubr.f32.gmra.mrb[0].mxu0 %v1627
    %v2820 = vpop.f32.mrb[0].mxu0
    %v2821 = vadd.f32 0.0, %v2820
    %v2822 = vpop.f32.mrb[0].mxu0
    %2823 = vdwg.mxu0
    %s2824 = scalar_lea.vmem %s3, 480
    %v2825 = vld [vmem:[%s2824] sm:$0xff]
    %v2826 = vld [vmem:[%s2824 + $0x8] sm:$0xff]
    %v2827 = vld [vmem:[%s2824 + $0x10] sm:$0xff]
    %v2828 = vld [vmem:[%s2824 + $0x18] sm:$0xff]
    %2829 = vmatprep.subr.mxu0 0.0
    %2830 = vmatpush1.msra.mxu0 %v2825
    %2831 = vmatprep.subr.mxu0 0.0
    %2832 = vmatpush1.msra.mxu0 %v2826
    %2833 = vmatprep.subr.mxu0 0.0
    %2834 = vmatpush1.msra.mxu0 %v2827
    %2835 = vmatprep.subr.mxu0 0.0
    %2836 = vmatpush1.msra.mxu0 %v2828
    %2837 = vmatprep.subr.mxu0 0.0
    %2838 = vmatpush1.msra.mxu0 0.0
    %2839 = vmatprep.subr.mxu0 0.0
    %2840 = vmatpush1.msra.mxu0 0.0
    %2841 = vmatprep.subr.mxu0 0.0
    %2842 = vmatpush1.msra.mxu0 0.0
    %2843 = vmatprep.subr.mxu0 0.0
    %2844 = vmatpush1.msra.mxu0 0.0
    %2845 = vmatprep.subr.mxu0 0.0
    %2846 = vmatpush1.msra.mxu0 0.0
    %2847 = vmatprep.subr.mxu0 0.0
    %2848 = vmatpush1.msra.mxu0 0.0
    %2849 = vmatprep.subr.mxu0 0.0
    %2850 = vmatpush1.msra.mxu0 0.0
    %2851 = vmatprep.subr.mxu0 0.0
    %2852 = vmatpush1.msra.mxu0 0.0
    %2853 = vmatprep.subr.mxu0 0.0
    %2854 = vmatpush1.msra.mxu0 0.0
    %2855 = vmatprep.subr.mxu0 0.0
    %2856 = vmatpush1.msra.mxu0 0.0
    %2857 = vmatprep.subr.mxu0 0.0
    %2858 = vmatpush1.msra.mxu0 0.0
    %2859 = vmatprep.subr.mxu0 0.0
    %2860 = vmatpush1.msra.mxu0 0.0
    %2861 = vmatprep.subr.mxu0 0.0
    %2862 = vmatpush1.msra.mxu0 0.0
    %2863 = vmatprep.subr.mxu0 0.0
    %2864 = vmatpush1.msra.mxu0 0.0
    %2865 = vmatprep.subr.mxu0 0.0
    %2866 = vmatpush1.msra.mxu0 0.0
    %2867 = vmatprep.subr.mxu0 0.0
    %2868 = vmatpush1.msra.mxu0 0.0
    %2869 = vmatprep.subr.mxu0 0.0
    %2870 = vmatpush1.msra.mxu0 0.0
    %2871 = vmatprep.subr.mxu0 0.0
    %2872 = vmatpush1.msra.mxu0 0.0
    %2873 = vmatprep.subr.mxu0 0.0
    %2874 = vmatpush1.msra.mxu0 0.0
    %2875 = vmatprep.subr.mxu0 0.0
    %2876 = vmatpush1.msra.mxu0 0.0
    %2877 = vmatprep.subr.mxu0 0.0
    %2878 = vmatpush1.msra.mxu0 0.0
    %2879 = vmatprep.subr.mxu0 0.0
    %2880 = vmatpush1.msra.mxu0 0.0
    %2881 = vmatprep.subr.mxu0 0.0
    %2882 = vmatpush1.msra.mxu0 0.0
    %2883 = vmatprep.subr.mxu0 0.0
    %2884 = vmatpush1.msra.mxu0 0.0
    %2885 = vmatprep.subr.mxu0 0.0
    %2886 = vmatpush1.msra.mxu0 0.0
    %2887 = vmatprep.subr.mxu0 0.0
    %2888 = vmatpush1.msra.mxu0 0.0
    %2889 = vmatprep.subr.mxu0 0.0
    %2890 = vmatpush1.msra.mxu0 0.0
    %2891 = vmatprep.subr.mxu0 0.0
    %2892 = vmatpush1.msra.mxu0 0.0
    %2893 = vmatprep.mubr.f32.mxu0 0.0
    %2894 = vmatmul.mubr.f32.gmra.mrb[0].mxu0 %v1624
    %v2895 = vpop.f32.mrb[0].mxu0
    %v2896 = vadd.f32 0.0, %v2895
    %v2897 = vpop.f32.mrb[0].mxu0
    %2898 = vmatprep.mubr.f32.mxu0 0.0
    %2899 = vmatmul.mubr.f32.gmra.mrb[0].mxu0 %v1627
    %v2900 = vpop.f32.mrb[0].mxu0
    %v2901 = vadd.f32 0.0, %v2900
    %v2902 = vpop.f32.mrb[0].mxu0
    %2903 = vdwg.mxu0
    %v2904 = vld [vmem:[%s5] sm:$0xff]
    %v2905 = vld [vmem:[%s5 + $0x8] sm:$0xff]
    %v2906 = vld [vmem:[%s5 + $0x10] sm:$0xff]
    %v2907 = vld [vmem:[%s5 + $0x18] sm:$0xff]
    %v2908 = vld [vmem:[%s5 + $0x20] sm:$0xff]
    %v2909 = vld [vmem:[%s5 + $0x28] sm:$0xff]
    %v2910 = vld [vmem:[%s5 + $0x30] sm:$0xff]
    %v2911 = vld [vmem:[%s5 + $0x38] sm:$0xff]
    %2912 = vmatprep.subr.mxu0 0.0
    %2913 = vmatpush1.msra.mxu0 %v1696
    %2914 = vmatprep.subr.mxu0 0.0
    %2915 = vmatpush1.msra.mxu0 %v1701
    %2916 = vmatprep.subr.mxu0 0.0
    %2917 = vmatpush1.msra.mxu0 %v1776
    %2918 = vmatprep.subr.mxu0 0.0
    %2919 = vmatpush1.msra.mxu0 %v1781
    %2920 = vmatprep.subr.mxu0 0.0
    %2921 = vmatpush1.msra.mxu0 %v1856
    %2922 = vmatprep.subr.mxu0 0.0
    %2923 = vmatpush1.msra.mxu0 %v1861
    %2924 = vmatprep.subr.mxu0 0.0
    %2925 = vmatpush1.msra.mxu0 %v1936
    %2926 = vmatprep.subr.mxu0 0.0
    %2927 = vmatpush1.msra.mxu0 %v1941
    %2928 = vmatprep.subr.mxu0 0.0
    %2929 = vmatpush1.msra.mxu0 %v2016
    %2930 = vmatprep.subr.mxu0 0.0
    %2931 = vmatpush1.msra.mxu0 %v2021
    %2932 = vmatprep.subr.mxu0 0.0
    %2933 = vmatpush1.msra.mxu0 %v2096
    %2934 = vmatprep.subr.mxu0 0.0
    %2935 = vmatpush1.msra.mxu0 %v2101
    %2936 = vmatprep.subr.mxu0 0.0
    %2937 = vmatpush1.msra.mxu0 %v2176
    %2938 = vmatprep.subr.mxu0 0.0
    %2939 = vmatpush1.msra.mxu0 %v2181
    %2940 = vmatprep.subr.mxu0 0.0
    %2941 = vmatpush1.msra.mxu0 %v2256
    %2942 = vmatprep.subr.mxu0 0.0
    %2943 = vmatpush1.msra.mxu0 %v2261
    %2944 = vmatprep.subr.mxu0 0.0
    %2945 = vmatpush1.msra.mxu0 %v2336
    %2946 = vmatprep.subr.mxu0 0.0
    %2947 = vmatpush1.msra.mxu0 %v2341
    %2948 = vmatprep.subr.mxu0 0.0
    %2949 = vmatpush1.msra.mxu0 %v2416
    %2950 = vmatprep.subr.mxu0 0.0
    %2951 = vmatpush1.msra.mxu0 %v2421
    %2952 = vmatprep.subr.mxu0 0.0
    %2953 = vmatpush1.msra.mxu0 %v2496
    %2954 = vmatprep.subr.mxu0 0.0
    %2955 = vmatpush1.msra.mxu0 %v2501
    %2956 = vmatprep.subr.mxu0 0.0
    %2957 = vmatpush1.msra.mxu0 %v2576
    %2958 = vmatprep.subr.mxu0 0.0
    %2959 = vmatpush1.msra.mxu0 %v2581
    %2960 = vmatprep.subr.mxu0 0.0
    %2961 = vmatpush1.msra.mxu0 %v2656
    %2962 = vmatprep.subr.mxu0 0.0
    %2963 = vmatpush1.msra.mxu0 %v2661
    %2964 = vmatprep.subr.mxu0 0.0
    %2965 = vmatpush1.msra.mxu0 %v2736
    %2966 = vmatprep.subr.mxu0 0.0
    %2967 = vmatpush1.msra.mxu0 %v2741
    %2968 = vmatprep.subr.mxu0 0.0
    %2969 = vmatpush1.msra.mxu0 %v2816
    %2970 = vmatprep.subr.mxu0 0.0
    %2971 = vmatpush1.msra.mxu0 %v2821
    %2972 = vmatprep.subr.mxu0 0.0
    %2973 = vmatpush1.msra.mxu0 %v2896
    %2974 = vmatprep.subr.mxu0 0.0
    %2975 = vmatpush1.msra.mxu0 %v2901
    %2976 = vmatprep.mubr.f32.mxu0 %v2905
    %2977 = vmatmul.mubr.f32.gmra.mrb[0].mxu0 %v2904
    %v2978 = vpop.f32.mrb[0].mxu0
    %v2979 = vadd.f32 0.0, %v2978
    %v2980 = vpop.f32.mrb[0].mxu0
    %2981 = vmatprep.mubr.f32.mxu0 %v2907
    %2982 = vmatmul.mubr.f32.gmra.mrb[0].mxu0 %v2906
    %v2983 = vpop.f32.mrb[0].mxu0
    %v2984 = vadd.f32 0.0, %v2983
    %v2985 = vpop.f32.mrb[0].mxu0
    %2986 = vmatprep.mubr.f32.mxu0 %v2909
    %2987 = vmatmul.mubr.f32.gmra.mrb[0].mxu0 %v2908
    %v2988 = vpop.f32.mrb[0].mxu0
    %v2989 = vadd.f32 0.0, %v2988
    %v2990 = vpop.f32.mrb[0].mxu0
    %2991 = vmatprep.mubr.f32.mxu0 %v2911
    %2992 = vmatmul.mubr.f32.gmra.mrb[0].mxu0 %v2910
    %v2993 = vpop.f32.mrb[0].mxu0
    %v2994 = vadd.f32 0.0, %v2993
    %v2995 = vpop.f32.mrb[0].mxu0
    %2996 = vdwg.mxu0
    %v2997 = vmul.f32 %v2979, %v2979
    %v2998 = vmul.f32 %v2984, %v2984
    %v2999 = vmul.f32 %v2989, %v2989
    %v3000 = vmul.f32 %v2994, %v2994
    %vm3001 = vcmask 64512
    %v3002 = vsel %vm3001, %v2979, 0.0
    %3003 = vadd.xlane.f32.xlu0 %v3002
    %v3004 = vpop.xlane.xlu0 %3003
    %v3005 = vsel %vm3001, %v2984, 0.0
    %3006 = vadd.xlane.f32.xlu0 %v3005
    %v3007 = vpop.xlane.xlu0 %3006
    %v3008 = vsel %vm3001, %v2989, 0.0
    %3009 = vadd.xlane.f32.xlu0 %v3008
    %v3010 = vpop.xlane.xlu0 %3009
    %v3011 = vsel %vm3001, %v2994, 0.0
    %3012 = vadd.xlane.f32.xlu0 %v3011
    %v3013 = vpop.xlane.xlu0 %3012
    %v3014 = vsel %vm3001, %v2997, 0.0
    %3015 = vadd.xlane.f32.xlu0 %v3014
    %v3016 = vpop.xlane.xlu0 %3015
    %v3017 = vsel %vm3001, %v2998, 0.0
    %3018 = vadd.xlane.f32.xlu0 %v3017
    %v3019 = vpop.xlane.xlu0 %3018
    %v3020 = vsel %vm3001, %v2999, 0.0
    %3021 = vadd.xlane.f32.xlu0 %v3020
    %v3022 = vpop.xlane.xlu0 %3021
    %v3023 = vsel %vm3001, %v3000, 0.0
    %3024 = vadd.xlane.f32.xlu0 %v3023
    %v3025 = vpop.xlane.xlu0 %3024
    %v3026 = vrcp.pop 8.0
    %v3027 = vmul.f32 %v3004, %v3026
    %v3028 = vmul.f32 %v3007, %v3026
    %v3029 = vmul.f32 %v3010, %v3026
    %v3030 = vmul.f32 %v3013, %v3026
    %v3031 = vmul.f32 %v3016, %v3026
    %v3032 = vmul.f32 %v3019, %v3026
    %v3033 = vmul.f32 %v3022, %v3026
    %v3034 = vmul.f32 %v3025, %v3026
    %v3035 = vmul.f32 %v3027, %v3027
    %v3036 = vmul.f32 %v3028, %v3028
    %v3037 = vmul.f32 %v3029, %v3029
    %v3038 = vmul.f32 %v3030, %v3030
    %v3039 = vsub.f32 %v3031, %v3035
    %v3040 = vsub.f32 %v3032, %v3036
    %v3041 = vsub.f32 %v3033, %v3037
    %v3042 = vsub.f32 %v3034, %v3038
    %v3043 = vmax.f32 %v3039, 0.0
    %v3044 = vmax.f32 %v3040, 0.0
    %v3045 = vmax.f32 %v3041, 0.0
    %v3046 = vmax.f32 %v3042, 0.0
    %v3047 = vsub.f32 %v2979, %v3027
    %v3048 = vsub.f32 %v2984, %v3028
    %v3049 = vsub.f32 %v2989, %v3029
    %v3050 = vsub.f32 %v2994, %v3030
    %v3051 = vadd.f32 %v3043, 1e-05
    %v3052 = vadd.f32 %v3044, 1e-05
    %v3053 = vadd.f32 %v3045, 1e-05
    %v3054 = vadd.f32 %v3046, 1e-05
    %v3055 = vrsqrt.pop %v3051
    %v3056 = vrsqrt.pop %v3052
    %v3057 = vrsqrt.pop %v3053
    %v3058 = vrsqrt.pop %v3054
    %v3059 = vmul.f32 %v3047, %v3055
    %v3060 = vmul.f32 %v3048, %v3056
    %v3061 = vmul.f32 %v3049, %v3057
    %v3062 = vmul.f32 %v3050, %v3058
    %v3063 = vmul.f32 %v3059, 0.01
    %v3064 = vmul.f32 %v3060, 0.01
    %v3065 = vmul.f32 %v3061, 0.01
    %v3066 = vmul.f32 %v3062, 0.01
    %v3067 = vmax.f32 %v3059, %v3063
    %v3068 = vmax.f32 %v3060, %v3064
    %v3069 = vmax.f32 %v3061, %v3065
    %v3070 = vmax.f32 %v3062, %v3066
    %v3071 = vld [vmem:[%s6] sm:$0xff]
    %v3072 = vld [vmem:[%s6 + $0x8] sm:$0xff]
    %v3073 = vld [vmem:[%s6 + $0x10] sm:$0xff]
    %v3074 = vld [vmem:[%s6 + $0x18] sm:$0xff]
    %v3075 = vmul.f32 %v3067, %v3071
    %v3076 = vmul.f32 %v3068, %v3072
    %v3077 = vmul.f32 %v3069, %v3073
    %v3078 = vmul.f32 %v3070, %v3074
    %v3079 = vsel %vm3001, %v3075, 0.0
    %v3080 = vsel %vm3001, %v3076, 0.0
    %v3081 = vadd.f32 %v3079, %v3080
    %v3082 = vsel %vm3001, %v3077, 0.0
    %v3083 = vadd.f32 %v3081, %v3082
    %v3084 = vsel %vm3001, %v3078, 0.0
    %v3085 = vadd.f32 %v3083, %v3084
    %v3086 = vrot.slane %v3085, 4
    %v3087 = vadd.f32 %v3085, %v3086
    %v3088 = vrot.slane %v3087, 2
    %v3089 = vadd.f32 %v3087, %v3088
    %v3090 = vrot.slane %v3089, 1
    %v3091 = vadd.f32 %v3089, %v3090
    %v3092 = vld [vmem:[%s7] sm:$0xff]
    %v3094 = vsel %vm3001, %v3091, 0
    %3096 = vmatprep.subr.mxu0 0.0
    %3097 = vmatpush1.msra.mxu0 %v3092
    %3098 = vmatprep.subr.mxu0 0.0
    %3099 = vmatpush1.msra.mxu0 0.0
    %3100 = vmatprep.subr.mxu0 0.0
    %3101 = vmatpush1.msra.mxu0 0.0
    %3102 = vmatprep.subr.mxu0 0.0
    %3103 = vmatpush1.msra.mxu0 0.0
    %3104 = vmatprep.subr.mxu0 0.0
    %3105 = vmatpush1.msra.mxu0 0.0
    %3106 = vmatprep.subr.mxu0 0.0
    %3107 = vmatpush1.msra.mxu0 0.0
    %3108 = vmatprep.subr.mxu0 0.0
    %3109 = vmatpush1.msra.mxu0 0.0
    %3110 = vmatprep.subr.mxu0 0.0
    %3111 = vmatpush1.msra.mxu0 0.0
    %3112 = vmatprep.subr.mxu0 0.0
    %3113 = vmatpush1.msra.mxu0 0.0
    %3114 = vmatprep.subr.mxu0 0.0
    %3115 = vmatpush1.msra.mxu0 0.0
    %3116 = vmatprep.subr.mxu0 0.0
    %3117 = vmatpush1.msra.mxu0 0.0
    %3118 = vmatprep.subr.mxu0 0.0
    %3119 = vmatpush1.msra.mxu0 0.0
    %3120 = vmatprep.subr.mxu0 0.0
    %3121 = vmatpush1.msra.mxu0 0.0
    %3122 = vmatprep.subr.mxu0 0.0
    %3123 = vmatpush1.msra.mxu0 0.0
    %3124 = vmatprep.subr.mxu0 0.0
    %3125 = vmatpush1.msra.mxu0 0.0
    %3126 = vmatprep.subr.mxu0 0.0
    %3127 = vmatpush1.msra.mxu0 0.0
    %3128 = vmatprep.subr.mxu0 0.0
    %3129 = vmatpush1.msra.mxu0 0.0
    %3130 = vmatprep.subr.mxu0 0.0
    %3131 = vmatpush1.msra.mxu0 0.0
    %3132 = vmatprep.subr.mxu0 0.0
    %3133 = vmatpush1.msra.mxu0 0.0
    %3134 = vmatprep.subr.mxu0 0.0
    %3135 = vmatpush1.msra.mxu0 0.0
    %3136 = vmatprep.subr.mxu0 0.0
    %3137 = vmatpush1.msra.mxu0 0.0
    %3138 = vmatprep.subr.mxu0 0.0
    %3139 = vmatpush1.msra.mxu0 0.0
    %3140 = vmatprep.subr.mxu0 0.0
    %3141 = vmatpush1.msra.mxu0 0.0
    %3142 = vmatprep.subr.mxu0 0.0
    %3143 = vmatpush1.msra.mxu0 0.0
    %3144 = vmatprep.subr.mxu0 0.0
    %3145 = vmatpush1.msra.mxu0 0.0
    %3146 = vmatprep.subr.mxu0 0.0
    %3147 = vmatpush1.msra.mxu0 0.0
    %3148 = vmatprep.subr.mxu0 0.0
    %3149 = vmatpush1.msra.mxu0 0.0
    %3150 = vmatprep.subr.mxu0 0.0
    %3151 = vmatpush1.msra.mxu0 0.0
    %3152 = vmatprep.subr.mxu0 0.0
    %3153 = vmatpush1.msra.mxu0 0.0
    %3154 = vmatprep.subr.mxu0 0.0
    %3155 = vmatpush1.msra.mxu0 0.0
    %3156 = vmatprep.subr.mxu0 0.0
    %3157 = vmatpush1.msra.mxu0 0.0
    %3158 = vmatprep.subr.mxu0 0.0
    %3159 = vmatpush1.msra.mxu0 0.0
    %3160 = vmatprep.mubr.f32.mxu0 0.0
    %3161 = vmatmul.mubr.f32.gmra.mrb[0].mxu0 %v3094
    %v3162 = vpop.f32.mrb[0].mxu0
    %v3163 = vadd.f32 0.0, %v3162
    %v3164 = vpop.f32.mrb[0].mxu0
    %3165 = vdwg.mxu0
    %vm3166 = vcmask 8192
    %3167 = vst.msk [vmem:[#allocation2] sm:$0x1] %vm3166, %v3163
    // Predicated region
    $region34: #{discriminator_forward.1} parent=1 // pred_check
      _
    $region35: #{discriminator_forward.1} parent=1 // pred_check_branch
      %3169 = sbr.rel (0) target = $region37
    $region36: #{discriminator_forward.1} parent=1 // pred_region
      %s3171 = ssub.s32 16, 16
      %3172 = vsyncadd [#allocation3], %s3171
      %s3174 = sshll.u32 [#allocation2], 4
      %s3175 = int_to_ptr.vmem [resolvable:$true] %s3174
      %3177 = dma.vmem_to_hbm [thread:$0]  %s3175, 16, %s8, [#allocation3]
    $region37: #{discriminator_forward.1} parent=1 // pred_fallthru
      _
    // Predicated region
    $region38: #{discriminator_forward.1} parent=1 // pred_check
      _
    $region39: #{discriminator_forward.1} parent=1 // pred_check_branch
      %3179 = sbr.rel (0) target = $region41
    $region40: #{discriminator_forward.1} parent=1 // pred_region
      %3180 = dma.done [#allocation3], 16
    $region41: #{discriminator_forward.1} parent=1 // pred_fallthru
      _
    %3181 = vsyncpa [#allocation3], 1

</llo_original>
